<compile_context>
chip_gen: v6e
topology: v6e:2x2x1
jax: 0.10.0
libtpu: 0.0.40
codegen_flags: <defaults>
</compile_context>

<pallas_src>
import jax
import jax.numpy as jnp
from jax.experimental import pallas as pl
from jax.experimental.pallas import tpu as pltpu

LATENT_DIM = 100
LATENT_PAD = 128   # zero-pad latent so layer-1 MXU feed is lane-aligned
OUT_DIM = 784
OUT_PAD = 896      # 7*128 -> lane-dense (unmasked) final store
EPS = 1e-5


def _leaky_relu(x, slope=0.2):
    return jnp.where(x > 0, x, slope * x)


def _batchnorm_train(x, gamma, beta):
    """BatchNorm1d training mode (biased batch stats), one-pass statistics.

    mean = sum(x)/n, var = sum(x*x)/n - mean^2 (single reduce pass each, f32),
    affine folded to scale/shift: y = x*scale + shift (2 VALU ops / element).
    """
    inv_n = 1.0 / x.shape[0]
    mean = jnp.sum(x, axis=0, keepdims=True) * inv_n
    var = jnp.sum(x * x, axis=0, keepdims=True) * inv_n - mean * mean
    scale = gamma * jax.lax.rsqrt(var + EPS)
    shift = beta - mean * scale
    return x * scale + shift


def _dot_f32acc(a, w_bf16):
    # bf16 x bf16 inputs, f32 accumulation on the native MXU path.
    return jnp.dot(a.astype(jnp.bfloat16), w_bf16, preferred_element_type=jnp.float32)


def generator_kernel(
    z_ref,
    w1_ref, b1_ref,
    w2_ref, b2_ref, g2_ref, be2_ref,
    w3_ref, b3_ref, g3_ref, be3_ref,
    b4_ref, g4_ref, be4_ref,
    b5_ref,
    w4_hbm, w5_hbm,            # big weights, left in HBM (pl.ANY)
    o_ref,
    w4_vmem, w5_vmem, dma_sem,  # scratch: VMEM weight buffers + DMA semaphores
):
    g = pl.program_id(0)
    w4_cp = pltpu.make_async_copy(w4_hbm, w4_vmem, dma_sem.at[0])
    w5_cp = pltpu.make_async_copy(w5_hbm, w5_vmem, dma_sem.at[1])

    # Issue the big-weight DMAs immediately (first group only); they land while
    # blocks 1-3 compute.  Scratch persists across grid steps, so later groups
    # reuse the VMEM-resident copies with zero extra HBM traffic.
    @pl.when(g == 0)
    def _():
        w4_cp.start()
        w5_cp.start()

    # Block 1: Linear(100->128)  (latent zero-padded to K=128) + LeakyReLU
    h = _dot_f32acc(z_ref[...], w1_ref[...]) + b1_ref[...]
    h = _leaky_relu(h)

    # Block 2: Linear(128,256) + BN(train) + LeakyReLU   (activations stay f32)
    h = _dot_f32acc(h, w2_ref[...]) + b2_ref[...]
    h = _leaky_relu(_batchnorm_train(h, g2_ref[...], be2_ref[...]))

    # Block 3: Linear(256,512) + BN + LeakyReLU
    h = _dot_f32acc(h, w3_ref[...]) + b3_ref[...]
    h = _leaky_relu(_batchnorm_train(h, g3_ref[...], be3_ref[...]))

    # Block 4: Linear(512,1024) + BN + LeakyReLU  (wait on w4 only on first group)
    @pl.when(g == 0)
    def _():
        w4_cp.wait()
    h = _dot_f32acc(h, w4_vmem[...]) + b4_ref[...]
    h = _leaky_relu(_batchnorm_train(h, g4_ref[...], be4_ref[...]))

    # Block 5: Linear(1024,784 zero-padded to 896) + Tanh (padded columns give 0)
    @pl.when(g == 0)
    def _():
        w5_cp.wait()
    h = _dot_f32acc(h, w5_vmem[...]) + b5_ref[...]
    o_ref[...] = jnp.tanh(h)


def init_params(key, latent_dim=LATENT_DIM):
    """Deterministic PyTorch-style init: U(-1/sqrt(fan_in), 1/sqrt(fan_in)); f32."""
    dims = [latent_dim, 128, 256, 512, 1024, OUT_DIM]
    params = {}
    keys = jax.random.split(key, 2 * (len(dims) - 1))
    for i in range(len(dims) - 1):
        fan_in, fan_out = dims[i], dims[i + 1]
        bound = 1.0 / jnp.sqrt(fan_in)
        # weights stored (in_features, out_features) so the kernel does x @ W
        params[f"w{i+1}"] = jax.random.uniform(
            keys[2 * i], (fan_in, fan_out), jnp.float32, -bound, bound)
        params[f"b{i+1}"] = jax.random.uniform(
            keys[2 * i + 1], (1, fan_out), jnp.float32, -bound, bound)
    # BatchNorm affine params (gamma=1, beta=0 at init) for layers 2,3,4
    for i, n in zip((2, 3, 4), (256, 512, 1024)):
        params[f"g{i}"] = jnp.ones((1, n), jnp.float32)
        params[f"be{i}"] = jnp.zeros((1, n), jnp.float32)
    return params


def prepare_params(params):
    """One-time kernel-arg prep (run OUTSIDE the per-call loop):
      - zero-pad w1 rows 100->128 and w5/b5 cols 784->896 (lane alignment),
      - cast the five weight matrices to bf16 (halves the dominant HBM weight DMA).
    Biases and BN affine params stay f32 (they feed f32 accumulators / BN math)."""
    kp = dict(params)
    kp["w1"] = jnp.pad(params["w1"], ((0, LATENT_PAD - LATENT_DIM), (0, 0)))
    kp["w5"] = jnp.pad(params["w5"], ((0, 0), (0, OUT_PAD - OUT_DIM)))
    kp["b5"] = jnp.pad(params["b5"], ((0, 0), (0, OUT_PAD - OUT_DIM)))
    for i in range(1, 6):
        kp[f"w{i}"] = kp[f"w{i}"].astype(jnp.bfloat16)
    return kp


def _generator_pallas(z_pad_bf16, kp, rows_per_group):
    """z_pad_bf16: (G*B, LATENT_PAD) bf16.  Each consecutive block of B rows is
    one BatchNorm group (== one module forward).  Returns (G*B, OUT_PAD) f32."""
    total = z_pad_bf16.shape[0]
    B = rows_per_group
    G = total // B
    assert G * B == total and B >= 2
    assert G == 1 or B % 8 == 0, "grouped path needs sublane-aligned group size"

    def const_spec(shape):
        return pl.BlockSpec(shape, lambda g: (0, 0))   # fetched once, VMEM-resident

    in_specs = [
        pl.BlockSpec((B, LATENT_PAD), lambda g: (g, 0)),           # z: per group
        const_spec(kp["w1"].shape), const_spec(kp["b1"].shape),
        const_spec(kp["w2"].shape), const_spec(kp["b2"].shape),
        const_spec(kp["g2"].shape), const_spec(kp["be2"].shape),
        const_spec(kp["w3"].shape), const_spec(kp["b3"].shape),
        const_spec(kp["g3"].shape), const_spec(kp["be3"].shape),
        const_spec(kp["b4"].shape), const_spec(kp["g4"].shape),
        const_spec(kp["be4"].shape),
        const_spec(kp["b5"].shape),
        pl.BlockSpec(memory_space=pl.ANY),                         # w4 stays in HBM
        pl.BlockSpec(memory_space=pl.ANY),                         # w5 stays in HBM
    ]

    return pl.pallas_call(
        generator_kernel,
        out_shape=jax.ShapeDtypeStruct((total, OUT_PAD), jnp.float32),
        grid=(G,),
        in_specs=in_specs,
        out_specs=pl.BlockSpec((B, OUT_PAD), lambda g: (g, 0)),
        scratch_shapes=[
            pltpu.VMEM((512, 1024), jnp.bfloat16),      # w4 buffer
            pltpu.VMEM((1024, OUT_PAD), jnp.bfloat16),  # w5 buffer
            pltpu.SemaphoreType.DMA((2,)),
        ],
        compiler_params=pltpu.CompilerParams(
            # "arbitrary": the copy-once w4/w5 gating relies on one core walking
            # the whole grid.  (On v7x, drop the manual copies and mark this
            # axis "parallel" to shard groups across the two TensorCores.)
            dimension_semantics=("arbitrary",),
            vmem_limit_bytes=12 << 20,
        ),
    )(
        z_pad_bf16,
        kp["w1"], kp["b1"],
        kp["w2"], kp["b2"], kp["g2"], kp["be2"],
        kp["w3"], kp["b3"], kp["g3"], kp["be3"],
        kp["b4"], kp["g4"], kp["be4"],
        kp["b5"],
        kp["w4"], kp["w5"],
    )


@jax.jit
def generator_forward(z, kp):
    """One PyTorch-module forward: BN statistics over the whole batch.  B >= 2."""
    B = z.shape[0]
    z_pad = jnp.pad(z, ((0, 0), (0, LATENT_PAD - z.shape[1]))).astype(jnp.bfloat16)
    flat = _generator_pallas(z_pad, kp, B)
    # img.view(B, 1, 28, 28) — drop the lane padding, NCHW reshape outside the kernel.
    return flat[:, :OUT_DIM].reshape(B, 1, 28, 28)


@jax.jit
def generator_forward_groups(z_groups, kp):
    """G independent module forwards with the SAME weights in one pallas_call:
    z_groups (G, B, latent) -> (G, B, 1, 28, 28).  BN is per group, identical to
    G separate calls; weight DMA + launch overhead are paid once.  B % 8 == 0."""
    G, B, L = z_groups.shape
    z2d = jnp.pad(z_groups.reshape(G * B, L),
                  ((0, 0), (0, LATENT_PAD - L))).astype(jnp.bfloat16)
    flat = _generator_pallas(z2d, kp, B)
    return flat[:, :OUT_DIM].reshape(G, B, 1, 28, 28)


def generator_forward_ref_bf16(z, kp):
    """Pure-JAX reference mirroring the kernel numerics (bf16 weights, f32 acc/BN)."""
    zb = jnp.pad(z, ((0, 0), (0, LATENT_PAD - z.shape[1])))
    h = _leaky_relu(_dot_f32acc(zb, kp["w1"]) + kp["b1"])
    h = _leaky_relu(_batchnorm_train(_dot_f32acc(h, kp["w2"]) + kp["b2"],
                                     kp["g2"], kp["be2"]))
    h = _leaky_relu(_batchnorm_train(_dot_f32acc(h, kp["w3"]) + kp["b3"],
                                     kp["g3"], kp["be3"]))
    h = _leaky_relu(_batchnorm_train(_dot_f32acc(h, kp["w4"]) + kp["b4"],
                                     kp["g4"], kp["be4"]))
    h = jnp.tanh(_dot_f32acc(h, kp["w5"]) + kp["b5"])
    return h[:, :OUT_DIM].reshape(z.shape[0], 1, 28, 28)


def generator_forward_ref_f32(z, params):
    """Full-f32 reference of the original PyTorch module semantics."""
    def dot(a, w):
        return jnp.dot(a, w, preferred_element_type=jnp.float32)
    h = _leaky_relu(dot(z, params["w1"]) + params["b1"])
    h = _leaky_relu(_batchnorm_train(dot(h, params["w2"]) + params["b2"],
                                     params["g2"], params["be2"]))
    h = _leaky_relu(_batchnorm_train(dot(h, params["w3"]) + params["b3"],
                                     params["g3"], params["be3"]))
    h = _leaky_relu(_batchnorm_train(dot(h, params["w4"]) + params["b4"],
                                     params["g4"], params["be4"]))
    h = jnp.tanh(dot(h, params["w5"]) + params["b5"])
    return h.reshape(z.shape[0], 1, 28, 28)


if __name__ == "__main__":
    key = jax.random.PRNGKey(0)
    k_param, k_z = jax.random.split(key)

    params = init_params(k_param)
    kparams = prepare_params(params)   # one-time pad + bf16 cast of weights

    # --- single forward, batch = 8 (>=2 required for training-mode BatchNorm) ---
    B = 8
    z = jax.random.normal(k_z, (B, LATENT_DIM), dtype=jnp.float32)
    img = generator_forward(z, kparams)
    jax.block_until_ready(img)
    assert img.shape == (B, 1, 28, 28)

    # Tight check vs a reference mirroring the kernel numerics.
    ref = generator_forward_ref_bf16(z, kparams)
    assert jnp.allclose(img, ref, atol=2e-3, rtol=2e-3), "mismatch vs bf16-matched reference"

    # Sanity check vs the full-f32 module semantics (only bf16 weight-quantization drift).
    ref32 = generator_forward_ref_f32(z, params)
    assert float(jnp.max(jnp.abs(img - ref32))) < 0.1, "excessive drift vs f32 reference"

    # --- grouped forwards: 4 groups of 8 latents, weights DMA'd once ---
    G = 4
    zg = jax.random.normal(jax.random.PRNGKey(1), (G, B, LATENT_DIM), dtype=jnp.float32)
    imgs = generator_forward_groups(zg, kparams)
    jax.block_until_ready(imgs)
    assert imgs.shape == (G, B, 1, 28, 28)
    ref_g = jnp.stack([generator_forward_ref_bf16(zg[i], kparams) for i in range(G)])
    assert jnp.allclose(imgs, ref_g, atol=2e-3, rtol=2e-3), "grouped path mismatch"

    print("KERNEL_OK")
</pallas_src>

<mosaic_0001>
module attributes {stable_mosaic.version = 11 : i64} {
  func.func @generator_kernel(%arg0: i32, %arg1: memref<8x128xbf16, #tpu.memory_space<vmem>>, %arg2: memref<128x128xbf16, #tpu.memory_space<vmem>>, %arg3: memref<1x128xf32, #tpu.memory_space<vmem>>, %arg4: memref<128x256xbf16, #tpu.memory_space<vmem>>, %arg5: memref<1x256xf32, #tpu.memory_space<vmem>>, %arg6: memref<1x256xf32, #tpu.memory_space<vmem>>, %arg7: memref<1x256xf32, #tpu.memory_space<vmem>>, %arg8: memref<256x512xbf16, #tpu.memory_space<vmem>>, %arg9: memref<1x512xf32, #tpu.memory_space<vmem>>, %arg10: memref<1x512xf32, #tpu.memory_space<vmem>>, %arg11: memref<1x512xf32, #tpu.memory_space<vmem>>, %arg12: memref<1x1024xf32, #tpu.memory_space<vmem>>, %arg13: memref<1x1024xf32, #tpu.memory_space<vmem>>, %arg14: memref<1x1024xf32, #tpu.memory_space<vmem>>, %arg15: memref<1x896xf32, #tpu.memory_space<vmem>>, %arg16: memref<512x1024xbf16, #tpu.memory_space<any>>, %arg17: memref<1024x896xbf16, #tpu.memory_space<any>>, %arg18: memref<8x896xf32, #tpu.memory_space<vmem>>, %arg19: memref<512x1024xbf16, #tpu.memory_space<vmem>>, %arg20: memref<1024x896xbf16, #tpu.memory_space<vmem>>, %arg21: memref<2x!tpu.dma_semaphore, #tpu.memory_space<semaphore_mem>>) attributes {dimension_semantics = [#tpu.dimension_semantics<arbitrary>], iteration_bounds = array<i64: 1>, scalar_prefetch = 0 : i64, scratch_operands = 3 : i64, tpu.core_type = #tpu.core_type<tc>, window_params = [{transform_indices = @transform_0, window_bounds = array<i64: 8, 128>}, {pipeline_mode = #tpu.pipeline_mode<synchronous>, transform_indices = @transform_1, window_bounds = array<i64: 128, 128>}, {pipeline_mode = #tpu.pipeline_mode<synchronous>, transform_indices = @transform_2, window_bounds = array<i64: 1, 128>}, {pipeline_mode = #tpu.pipeline_mode<synchronous>, transform_indices = @transform_3, window_bounds = array<i64: 128, 256>}, {pipeline_mode = #tpu.pipeline_mode<synchronous>, transform_indices = @transform_4, window_bounds = array<i64: 1, 256>}, {pipeline_mode = #tpu.pipeline_mode<synchronous>, transform_indices = @transform_5, window_bounds = array<i64: 1, 256>}, {pipeline_mode = #tpu.pipeline_mode<synchronous>, transform_indices = @transform_6, window_bounds = array<i64: 1, 256>}, {pipeline_mode = #tpu.pipeline_mode<synchronous>, transform_indices = @transform_7, window_bounds = array<i64: 256, 512>}, {pipeline_mode = #tpu.pipeline_mode<synchronous>, transform_indices = @transform_8, window_bounds = array<i64: 1, 512>}, {pipeline_mode = #tpu.pipeline_mode<synchronous>, transform_indices = @transform_9, window_bounds = array<i64: 1, 512>}, {pipeline_mode = #tpu.pipeline_mode<synchronous>, transform_indices = @transform_10, window_bounds = array<i64: 1, 512>}, {pipeline_mode = #tpu.pipeline_mode<synchronous>, transform_indices = @transform_11, window_bounds = array<i64: 1, 1024>}, {pipeline_mode = #tpu.pipeline_mode<synchronous>, transform_indices = @transform_12, window_bounds = array<i64: 1, 1024>}, {pipeline_mode = #tpu.pipeline_mode<synchronous>, transform_indices = @transform_13, window_bounds = array<i64: 1, 1024>}, {pipeline_mode = #tpu.pipeline_mode<synchronous>, transform_indices = @transform_14, window_bounds = array<i64: 1, 896>}, {}, {}, {transform_indices = @transform_17, window_bounds = array<i64: 8, 896>}]} {
    %c0_i32 = arith.constant 0 : i32
    %0 = arith.cmpi eq, %arg0, %c0_i32 : i32
    %1 = arith.extui %0 : i1 to i32
    %c0_i32_0 = arith.constant 0 : i32
    %c1_i32 = arith.constant 1 : i32
    %c0_i32_1 = arith.constant 0 : i32
    %2 = arith.cmpi ne, %1, %c0_i32_1 : i32
    scf.if %2 {
      %130 = tpu.memref_slice %arg21[%c0_i32_0] : memref<2x!tpu.dma_semaphore, #tpu.memory_space<semaphore_mem>> -> memref<1x!tpu.dma_semaphore, #tpu.memory_space<semaphore_mem>>
      %131 = tpu.memref_squeeze %130 : memref<1x!tpu.dma_semaphore, #tpu.memory_space<semaphore_mem>> -> memref<!tpu.dma_semaphore, #tpu.memory_space<semaphore_mem>>
      tpu.enqueue_dma source(%arg16 : memref<512x1024xbf16, #tpu.memory_space<any>>) target(%arg19 : memref<512x1024xbf16, #tpu.memory_space<vmem>>) target_semaphore(%131 : memref<!tpu.dma_semaphore, #tpu.memory_space<semaphore_mem>>)
      %132 = tpu.memref_slice %arg21[%c1_i32] : memref<2x!tpu.dma_semaphore, #tpu.memory_space<semaphore_mem>> -> memref<1x!tpu.dma_semaphore, #tpu.memory_space<semaphore_mem>>
      %133 = tpu.memref_squeeze %132 : memref<1x!tpu.dma_semaphore, #tpu.memory_space<semaphore_mem>> -> memref<!tpu.dma_semaphore, #tpu.memory_space<semaphore_mem>>
      tpu.enqueue_dma source(%arg17 : memref<1024x896xbf16, #tpu.memory_space<any>>) target(%arg20 : memref<1024x896xbf16, #tpu.memory_space<vmem>>) target_semaphore(%133 : memref<!tpu.dma_semaphore, #tpu.memory_space<semaphore_mem>>)
    } else {
    }
    %c0 = arith.constant 0 : index
    %c0_2 = arith.constant 0 : index
    %3 = vector.load %arg1[%c0, %c0_2] : memref<8x128xbf16, #tpu.memory_space<vmem>>, vector<8x128xbf16>
    %c0_3 = arith.constant 0 : index
    %c0_4 = arith.constant 0 : index
    %4 = vector.load %arg2[%c0_3, %c0_4] : memref<128x128xbf16, #tpu.memory_space<vmem>>, vector<128x128xbf16>
    %cst = arith.constant dense<0.000000e+00> : vector<8x128xf32>
    %5 = tpu.matmul %3, %4, %cst {dimension_numbers = #tpu.dot_dimension_numbers<[1], [0], [0], [1], [0, 0, 1, 1], [], []>} : vector<8x128xbf16>, vector<128x128xbf16>, vector<8x128xf32> -> vector<8x128xf32>
    %c0_5 = arith.constant 0 : index
    %c0_6 = arith.constant 0 : index
    %6 = vector.load %arg3[%c0_5, %c0_6] : memref<1x128xf32, #tpu.memory_space<vmem>>, vector<1x128xf32>
    %7 = vector.broadcast %6 : vector<1x128xf32> to vector<8x128xf32>
    %8 = arith.addf %5, %7 : vector<8x128xf32>
    %cst_7 = arith.constant 0.000000e+00 : f32
    %9 = vector.broadcast %cst_7 : f32 to vector<8x128xf32>
    %10 = arith.cmpf ogt, %8, %9 : vector<8x128xf32>
    %cst_8 = arith.constant 2.000000e-01 : f32
    %11 = vector.broadcast %cst_8 : f32 to vector<8x128xf32>
    %12 = arith.mulf %11, %8 : vector<8x128xf32>
    %13 = arith.select %10, %8, %12 : vector<8x128xi1>, vector<8x128xf32>
    %c0_9 = arith.constant 0 : index
    %c0_10 = arith.constant 0 : index
    %14 = vector.load %arg4[%c0_9, %c0_10] : memref<128x256xbf16, #tpu.memory_space<vmem>>, vector<128x256xbf16>
    %15 = arith.truncf %13 : vector<8x128xf32> to vector<8x128xbf16>
    %cst_11 = arith.constant dense<0.000000e+00> : vector<8x256xf32>
    %16 = tpu.matmul %15, %14, %cst_11 {dimension_numbers = #tpu.dot_dimension_numbers<[1], [0], [0], [1], [0, 0, 1, 1], [], []>} : vector<8x128xbf16>, vector<128x256xbf16>, vector<8x256xf32> -> vector<8x256xf32>
    %c0_12 = arith.constant 0 : index
    %c0_13 = arith.constant 0 : index
    %17 = vector.load %arg5[%c0_12, %c0_13] : memref<1x256xf32, #tpu.memory_space<vmem>>, vector<1x256xf32>
    %18 = vector.broadcast %17 : vector<1x256xf32> to vector<8x256xf32>
    %19 = arith.addf %16, %18 : vector<8x256xf32>
    %c0_14 = arith.constant 0 : index
    %c0_15 = arith.constant 0 : index
    %20 = vector.load %arg6[%c0_14, %c0_15] : memref<1x256xf32, #tpu.memory_space<vmem>>, vector<1x256xf32>
    %c0_16 = arith.constant 0 : index
    %c0_17 = arith.constant 0 : index
    %21 = vector.load %arg7[%c0_16, %c0_17] : memref<1x256xf32, #tpu.memory_space<vmem>>, vector<1x256xf32>
    %cst_18 = arith.constant dense<0.000000e+00> : vector<256xf32>
    %22 = vector.multi_reduction <add>, %19, %cst_18 [0] : vector<8x256xf32> to vector<256xf32>
    %23 = vector.shape_cast %22 : vector<256xf32> to vector<1x256xf32>
    %cst_19 = arith.constant 1.250000e-01 : f32
    %24 = vector.broadcast %cst_19 : f32 to vector<1x256xf32>
    %25 = arith.mulf %23, %24 : vector<1x256xf32>
    %26 = arith.mulf %19, %19 : vector<8x256xf32>
    %cst_20 = arith.constant dense<0.000000e+00> : vector<256xf32>
    %27 = vector.multi_reduction <add>, %26, %cst_20 [0] : vector<8x256xf32> to vector<256xf32>
    %28 = vector.shape_cast %27 : vector<256xf32> to vector<1x256xf32>
    %cst_21 = arith.constant 1.250000e-01 : f32
    %29 = vector.broadcast %cst_21 : f32 to vector<1x256xf32>
    %30 = arith.mulf %28, %29 : vector<1x256xf32>
    %31 = arith.mulf %25, %25 : vector<1x256xf32>
    %32 = arith.subf %30, %31 : vector<1x256xf32>
    %cst_22 = arith.constant 9.99999974E-6 : f32
    %33 = vector.broadcast %cst_22 : f32 to vector<1x256xf32>
    %34 = arith.addf %32, %33 : vector<1x256xf32>
    %35 = math.rsqrt %34 : vector<1x256xf32>
    %36 = arith.mulf %20, %35 : vector<1x256xf32>
    %37 = arith.mulf %25, %36 : vector<1x256xf32>
    %38 = arith.subf %21, %37 : vector<1x256xf32>
    %39 = vector.broadcast %36 : vector<1x256xf32> to vector<8x256xf32>
    %40 = arith.mulf %19, %39 : vector<8x256xf32>
    %41 = vector.broadcast %38 : vector<1x256xf32> to vector<8x256xf32>
    %42 = arith.addf %40, %41 : vector<8x256xf32>
    %cst_23 = arith.constant 0.000000e+00 : f32
    %43 = vector.broadcast %cst_23 : f32 to vector<8x256xf32>
    %44 = arith.cmpf ogt, %42, %43 : vector<8x256xf32>
    %cst_24 = arith.constant 2.000000e-01 : f32
    %45 = vector.broadcast %cst_24 : f32 to vector<8x256xf32>
    %46 = arith.mulf %45, %42 : vector<8x256xf32>
    %47 = arith.select %44, %42, %46 : vector<8x256xi1>, vector<8x256xf32>
    %c0_25 = arith.constant 0 : index
    %c0_26 = arith.constant 0 : index
    %48 = vector.load %arg8[%c0_25, %c0_26] : memref<256x512xbf16, #tpu.memory_space<vmem>>, vector<256x512xbf16>
    %49 = arith.truncf %47 : vector<8x256xf32> to vector<8x256xbf16>
    %cst_27 = arith.constant dense<0.000000e+00> : vector<8x512xf32>
    %50 = tpu.matmul %49, %48, %cst_27 {dimension_numbers = #tpu.dot_dimension_numbers<[1], [0], [0], [1], [0, 0, 1, 1], [], []>} : vector<8x256xbf16>, vector<256x512xbf16>, vector<8x512xf32> -> vector<8x512xf32>
    %c0_28 = arith.constant 0 : index
    %c0_29 = arith.constant 0 : index
    %51 = vector.load %arg9[%c0_28, %c0_29] : memref<1x512xf32, #tpu.memory_space<vmem>>, vector<1x512xf32>
    %52 = vector.broadcast %51 : vector<1x512xf32> to vector<8x512xf32>
    %53 = arith.addf %50, %52 : vector<8x512xf32>
    %c0_30 = arith.constant 0 : index
    %c0_31 = arith.constant 0 : index
    %54 = vector.load %arg10[%c0_30, %c0_31] : memref<1x512xf32, #tpu.memory_space<vmem>>, vector<1x512xf32>
    %c0_32 = arith.constant 0 : index
    %c0_33 = arith.constant 0 : index
    %55 = vector.load %arg11[%c0_32, %c0_33] : memref<1x512xf32, #tpu.memory_space<vmem>>, vector<1x512xf32>
    %cst_34 = arith.constant dense<0.000000e+00> : vector<512xf32>
    %56 = vector.multi_reduction <add>, %53, %cst_34 [0] : vector<8x512xf32> to vector<512xf32>
    %57 = vector.shape_cast %56 : vector<512xf32> to vector<1x512xf32>
    %cst_35 = arith.constant 1.250000e-01 : f32
    %58 = vector.broadcast %cst_35 : f32 to vector<1x512xf32>
    %59 = arith.mulf %57, %58 : vector<1x512xf32>
    %60 = arith.mulf %53, %53 : vector<8x512xf32>
    %cst_36 = arith.constant dense<0.000000e+00> : vector<512xf32>
    %61 = vector.multi_reduction <add>, %60, %cst_36 [0] : vector<8x512xf32> to vector<512xf32>
    %62 = vector.shape_cast %61 : vector<512xf32> to vector<1x512xf32>
    %cst_37 = arith.constant 1.250000e-01 : f32
    %63 = vector.broadcast %cst_37 : f32 to vector<1x512xf32>
    %64 = arith.mulf %62, %63 : vector<1x512xf32>
    %65 = arith.mulf %59, %59 : vector<1x512xf32>
    %66 = arith.subf %64, %65 : vector<1x512xf32>
    %cst_38 = arith.constant 9.99999974E-6 : f32
    %67 = vector.broadcast %cst_38 : f32 to vector<1x512xf32>
    %68 = arith.addf %66, %67 : vector<1x512xf32>
    %69 = math.rsqrt %68 : vector<1x512xf32>
    %70 = arith.mulf %54, %69 : vector<1x512xf32>
    %71 = arith.mulf %59, %70 : vector<1x512xf32>
    %72 = arith.subf %55, %71 : vector<1x512xf32>
    %73 = vector.broadcast %70 : vector<1x512xf32> to vector<8x512xf32>
    %74 = arith.mulf %53, %73 : vector<8x512xf32>
    %75 = vector.broadcast %72 : vector<1x512xf32> to vector<8x512xf32>
    %76 = arith.addf %74, %75 : vector<8x512xf32>
    %cst_39 = arith.constant 0.000000e+00 : f32
    %77 = vector.broadcast %cst_39 : f32 to vector<8x512xf32>
    %78 = arith.cmpf ogt, %76, %77 : vector<8x512xf32>
    %cst_40 = arith.constant 2.000000e-01 : f32
    %79 = vector.broadcast %cst_40 : f32 to vector<8x512xf32>
    %80 = arith.mulf %79, %76 : vector<8x512xf32>
    %81 = arith.select %78, %76, %80 : vector<8x512xi1>, vector<8x512xf32>
    %c0_i32_41 = arith.constant 0 : i32
    %82 = arith.cmpi eq, %arg0, %c0_i32_41 : i32
    %83 = arith.extui %82 : i1 to i32
    %c0_i32_42 = arith.constant 0 : i32
    %c0_i32_43 = arith.constant 0 : i32
    %84 = arith.cmpi ne, %83, %c0_i32_43 : i32
    scf.if %84 {
      %130 = tpu.memref_slice %arg21[%c0_i32_42] : memref<2x!tpu.dma_semaphore, #tpu.memory_space<semaphore_mem>> -> memref<1x!tpu.dma_semaphore, #tpu.memory_space<semaphore_mem>>
      %131 = tpu.memref_squeeze %130 : memref<1x!tpu.dma_semaphore, #tpu.memory_space<semaphore_mem>> -> memref<!tpu.dma_semaphore, #tpu.memory_space<semaphore_mem>>
      tpu.wait_dma2 semaphore(%131 : memref<!tpu.dma_semaphore, #tpu.memory_space<semaphore_mem>>) src(%arg16 : memref<512x1024xbf16, #tpu.memory_space<any>>) dst(%arg19 : memref<512x1024xbf16, #tpu.memory_space<vmem>>)
    } else {
    }
    %c0_44 = arith.constant 0 : index
    %c0_45 = arith.constant 0 : index
    %85 = vector.load %arg19[%c0_44, %c0_45] : memref<512x1024xbf16, #tpu.memory_space<vmem>>, vector<512x1024xbf16>
    %86 = arith.truncf %81 : vector<8x512xf32> to vector<8x512xbf16>
    %cst_46 = arith.constant dense<0.000000e+00> : vector<8x1024xf32>
    %87 = tpu.matmul %86, %85, %cst_46 {dimension_numbers = #tpu.dot_dimension_numbers<[1], [0], [0], [1], [0, 0, 1, 1], [], []>} : vector<8x512xbf16>, vector<512x1024xbf16>, vector<8x1024xf32> -> vector<8x1024xf32>
    %c0_47 = arith.constant 0 : index
    %c0_48 = arith.constant 0 : index
    %88 = vector.load %arg12[%c0_47, %c0_48] : memref<1x1024xf32, #tpu.memory_space<vmem>>, vector<1x1024xf32>
    %89 = vector.broadcast %88 : vector<1x1024xf32> to vector<8x1024xf32>
    %90 = arith.addf %87, %89 : vector<8x1024xf32>
    %c0_49 = arith.constant 0 : index
    %c0_50 = arith.constant 0 : index
    %91 = vector.load %arg13[%c0_49, %c0_50] : memref<1x1024xf32, #tpu.memory_space<vmem>>, vector<1x1024xf32>
    %c0_51 = arith.constant 0 : index
    %c0_52 = arith.constant 0 : index
    %92 = vector.load %arg14[%c0_51, %c0_52] : memref<1x1024xf32, #tpu.memory_space<vmem>>, vector<1x1024xf32>
    %cst_53 = arith.constant dense<0.000000e+00> : vector<1024xf32>
    %93 = vector.multi_reduction <add>, %90, %cst_53 [0] : vector<8x1024xf32> to vector<1024xf32>
    %94 = vector.shape_cast %93 : vector<1024xf32> to vector<1x1024xf32>
    %cst_54 = arith.constant 1.250000e-01 : f32
    %95 = vector.broadcast %cst_54 : f32 to vector<1x1024xf32>
    %96 = arith.mulf %94, %95 : vector<1x1024xf32>
    %97 = arith.mulf %90, %90 : vector<8x1024xf32>
    %cst_55 = arith.constant dense<0.000000e+00> : vector<1024xf32>
    %98 = vector.multi_reduction <add>, %97, %cst_55 [0] : vector<8x1024xf32> to vector<1024xf32>
    %99 = vector.shape_cast %98 : vector<1024xf32> to vector<1x1024xf32>
    %cst_56 = arith.constant 1.250000e-01 : f32
    %100 = vector.broadcast %cst_56 : f32 to vector<1x1024xf32>
    %101 = arith.mulf %99, %100 : vector<1x1024xf32>
    %102 = arith.mulf %96, %96 : vector<1x1024xf32>
    %103 = arith.subf %101, %102 : vector<1x1024xf32>
    %cst_57 = arith.constant 9.99999974E-6 : f32
    %104 = vector.broadcast %cst_57 : f32 to vector<1x1024xf32>
    %105 = arith.addf %103, %104 : vector<1x1024xf32>
    %106 = math.rsqrt %105 : vector<1x1024xf32>
    %107 = arith.mulf %91, %106 : vector<1x1024xf32>
    %108 = arith.mulf %96, %107 : vector<1x1024xf32>
    %109 = arith.subf %92, %108 : vector<1x1024xf32>
    %110 = vector.broadcast %107 : vector<1x1024xf32> to vector<8x1024xf32>
    %111 = arith.mulf %90, %110 : vector<8x1024xf32>
    %112 = vector.broadcast %109 : vector<1x1024xf32> to vector<8x1024xf32>
    %113 = arith.addf %111, %112 : vector<8x1024xf32>
    %cst_58 = arith.constant 0.000000e+00 : f32
    %114 = vector.broadcast %cst_58 : f32 to vector<8x1024xf32>
    %115 = arith.cmpf ogt, %113, %114 : vector<8x1024xf32>
    %cst_59 = arith.constant 2.000000e-01 : f32
    %116 = vector.broadcast %cst_59 : f32 to vector<8x1024xf32>
    %117 = arith.mulf %116, %113 : vector<8x1024xf32>
    %118 = arith.select %115, %113, %117 : vector<8x1024xi1>, vector<8x1024xf32>
    %c0_i32_60 = arith.constant 0 : i32
    %119 = arith.cmpi eq, %arg0, %c0_i32_60 : i32
    %120 = arith.extui %119 : i1 to i32
    %c1_i32_61 = arith.constant 1 : i32
    %c0_i32_62 = arith.constant 0 : i32
    %121 = arith.cmpi ne, %120, %c0_i32_62 : i32
    scf.if %121 {
      %130 = tpu.memref_slice %arg21[%c1_i32_61] : memref<2x!tpu.dma_semaphore, #tpu.memory_space<semaphore_mem>> -> memref<1x!tpu.dma_semaphore, #tpu.memory_space<semaphore_mem>>
      %131 = tpu.memref_squeeze %130 : memref<1x!tpu.dma_semaphore, #tpu.memory_space<semaphore_mem>> -> memref<!tpu.dma_semaphore, #tpu.memory_space<semaphore_mem>>
      tpu.wait_dma2 semaphore(%131 : memref<!tpu.dma_semaphore, #tpu.memory_space<semaphore_mem>>) src(%arg17 : memref<1024x896xbf16, #tpu.memory_space<any>>) dst(%arg20 : memref<1024x896xbf16, #tpu.memory_space<vmem>>)
    } else {
    }
    %c0_63 = arith.constant 0 : index
    %c0_64 = arith.constant 0 : index
    %122 = vector.load %arg20[%c0_63, %c0_64] : memref<1024x896xbf16, #tpu.memory_space<vmem>>, vector<1024x896xbf16>
    %123 = arith.truncf %118 : vector<8x1024xf32> to vector<8x1024xbf16>
    %cst_65 = arith.constant dense<0.000000e+00> : vector<8x896xf32>
    %124 = tpu.matmul %123, %122, %cst_65 {dimension_numbers = #tpu.dot_dimension_numbers<[1], [0], [0], [1], [0, 0, 1, 1], [], []>} : vector<8x1024xbf16>, vector<1024x896xbf16>, vector<8x896xf32> -> vector<8x896xf32>
    %c0_66 = arith.constant 0 : index
    %c0_67 = arith.constant 0 : index
    %125 = vector.load %arg15[%c0_66, %c0_67] : memref<1x896xf32, #tpu.memory_space<vmem>>, vector<1x896xf32>
    %126 = vector.broadcast %125 : vector<1x896xf32> to vector<8x896xf32>
    %127 = arith.addf %124, %126 : vector<8x896xf32>
    %128 = math.tanh %127 : vector<8x896xf32>
    %c0_68 = arith.constant 0 : index
    %c0_69 = arith.constant 0 : index
    %129 = vector.load %arg18[%c0_68, %c0_69] : memref<8x896xf32, #tpu.memory_space<vmem>>, vector<8x896xf32>
    tpu.vector_store %arg18[%c0_68, %c0_69], %128 {strides = array<i32>} : memref<8x896xf32, #tpu.memory_space<vmem>>, vector<8x896xf32>,
    return
  }
  func.func @transform_0(%arg0: i32) -> (i32, i32) {
    %c0_i32 = arith.constant 0 : i32
    %c0_i32_0 = arith.constant 0 : i32
    return %arg0, %c0_i32 : i32, i32
  }
  func.func @transform_1(%arg0: i32) -> (i32, i32) {
    %c0_i32 = arith.constant 0 : i32
    %c0_i32_0 = arith.constant 0 : i32
    %c0_i32_1 = arith.constant 0 : i32
    return %c0_i32, %c0_i32_0 : i32, i32
  }
  func.func @transform_2(%arg0: i32) -> (i32, i32) {
    %c0_i32 = arith.constant 0 : i32
    %c0_i32_0 = arith.constant 0 : i32
    %c0_i32_1 = arith.constant 0 : i32
    return %c0_i32, %c0_i32_0 : i32, i32
  }
  func.func @transform_3(%arg0: i32) -> (i32, i32) {
    %c0_i32 = arith.constant 0 : i32
    %c0_i32_0 = arith.constant 0 : i32
    %c0_i32_1 = arith.constant 0 : i32
    return %c0_i32, %c0_i32_0 : i32, i32
  }
  func.func @transform_4(%arg0: i32) -> (i32, i32) {
    %c0_i32 = arith.constant 0 : i32
    %c0_i32_0 = arith.constant 0 : i32
    %c0_i32_1 = arith.constant 0 : i32
    return %c0_i32, %c0_i32_0 : i32, i32
  }
  func.func @transform_5(%arg0: i32) -> (i32, i32) {
    %c0_i32 = arith.constant 0 : i32
    %c0_i32_0 = arith.constant 0 : i32
    %c0_i32_1 = arith.constant 0 : i32
    return %c0_i32, %c0_i32_0 : i32, i32
  }
  func.func @transform_6(%arg0: i32) -> (i32, i32) {
    %c0_i32 = arith.constant 0 : i32
    %c0_i32_0 = arith.constant 0 : i32
    %c0_i32_1 = arith.constant 0 : i32
    return %c0_i32, %c0_i32_0 : i32, i32
  }
  func.func @transform_7(%arg0: i32) -> (i32, i32) {
    %c0_i32 = arith.constant 0 : i32
    %c0_i32_0 = arith.constant 0 : i32
    %c0_i32_1 = arith.constant 0 : i32
    return %c0_i32, %c0_i32_0 : i32, i32
  }
  func.func @transform_8(%arg0: i32) -> (i32, i32) {
    %c0_i32 = arith.constant 0 : i32
    %c0_i32_0 = arith.constant 0 : i32
    %c0_i32_1 = arith.constant 0 : i32
    return %c0_i32, %c0_i32_0 : i32, i32
  }
  func.func @transform_9(%arg0: i32) -> (i32, i32) {
    %c0_i32 = arith.constant 0 : i32
    %c0_i32_0 = arith.constant 0 : i32
    %c0_i32_1 = arith.constant 0 : i32
    return %c0_i32, %c0_i32_0 : i32, i32
  }
  func.func @transform_10(%arg0: i32) -> (i32, i32) {
    %c0_i32 = arith.constant 0 : i32
    %c0_i32_0 = arith.constant 0 : i32
    %c0_i32_1 = arith.constant 0 : i32
    return %c0_i32, %c0_i32_0 : i32, i32
  }
  func.func @transform_11(%arg0: i32) -> (i32, i32) {
    %c0_i32 = arith.constant 0 : i32
    %c0_i32_0 = arith.constant 0 : i32
    %c0_i32_1 = arith.constant 0 : i32
    return %c0_i32, %c0_i32_0 : i32, i32
  }
  func.func @transform_12(%arg0: i32) -> (i32, i32) {
    %c0_i32 = arith.constant 0 : i32
    %c0_i32_0 = arith.constant 0 : i32
    %c0_i32_1 = arith.constant 0 : i32
    return %c0_i32, %c0_i32_0 : i32, i32
  }
  func.func @transform_13(%arg0: i32) -> (i32, i32) {
    %c0_i32 = arith.constant 0 : i32
    %c0_i32_0 = arith.constant 0 : i32
    %c0_i32_1 = arith.constant 0 : i32
    return %c0_i32, %c0_i32_0 : i32, i32
  }
  func.func @transform_14(%arg0: i32) -> (i32, i32) {
    %c0_i32 = arith.constant 0 : i32
    %c0_i32_0 = arith.constant 0 : i32
    %c0_i32_1 = arith.constant 0 : i32
    return %c0_i32, %c0_i32_0 : i32, i32
  }
  func.func @transform_17(%arg0: i32) -> (i32, i32) {
    %c0_i32 = arith.constant 0 : i32
    %c0_i32_0 = arith.constant 0 : i32
    return %arg0, %c0_i32 : i32, i32
  }
}

</mosaic_0001>

<llo_original>
// kernel: generator_forward.1
$region0: #{generator_forward.1}
  #allocation0 [shape = 'u32[]', space=smem, size = 0x4, offset = 0x4, fixed_abs, tag = 'smem constant byte address 0x4 - core index']
  #allocation1 [shape = 'u32[144,128]{1,0:T(1,128)}', space=vmem, size = 0x12000, scoped, tag = 'internal scratch']
  #allocation2 [shape = 'bf16[512,1024]{1,0:T(8,128)(2,1)}', space=vmem, size = 0x100000, scoped, tag = 'scratch operand']
  #allocation3 [shape = 'bf16[1024,896]{1,0:T(8,128)(2,1)}', space=vmem, size = 0x1c0000, scoped, tag = 'scratch operand']
  #allocation4 [shape = 's32[2]{0}', space=sflag, size = 0x8, scoped, tag = 'scratch operand']
  #allocation27 [shape = 's32[]', space=sflag, size = 0x4, offset = 0, fixed_abs, tag = 'sflag constant byte address 0x0 - dummy sync flag']
  #allocation28 [shape = 's32[]', space=sflag, size = 0x4, offset = 0, fixed_abs, tag = 'sflag constant byte address 0x0 - dummy sync flag']
  #allocation29 [shape = 'u32[]', space=smem, size = 0x4, offset = 0x44, fixed_abs, tag = 'smem constant byte address 0x44 - assertion arg 0']
  #allocation30 [shape = 'u32[]', space=smem, size = 0x4, offset = 0x48, fixed_abs, tag = 'smem constant byte address 0x48 - assertion arg 1']
  #allocation31 [shape = 's32[]', space=sflag, size = 0x4, offset = 0, fixed_abs, tag = 'sflag constant byte address 0x0 - dummy sync flag']
  #allocation32 [shape = 's32[]', space=sflag, size = 0x4, offset = 0, fixed_abs, tag = 'sflag constant byte address 0x0 - dummy sync flag']
  %s0 = inlined_call_operand.vmem [shape: bf16[8,128], index: 0, kind: input, shape index: {}]
  %s1 = inlined_call_operand.hbm [shape: bf16[128,128], index: 1, kind: input, shape index: {}]
  %s2 = inlined_call_operand.hbm [shape: f32[1,128], index: 2, kind: input, shape index: {}]
  %s3 = inlined_call_operand.hbm [shape: bf16[128,256], index: 3, kind: input, shape index: {}]
  %s4 = inlined_call_operand.hbm [shape: f32[1,256], index: 4, kind: input, shape index: {}]
  %s5 = inlined_call_operand.hbm [shape: f32[1,256], index: 5, kind: input, shape index: {}]
  %s6 = inlined_call_operand.hbm [shape: f32[1,256], index: 6, kind: input, shape index: {}]
  %s7 = inlined_call_operand.hbm [shape: bf16[256,512], index: 7, kind: input, shape index: {}]
  %s8 = inlined_call_operand.hbm [shape: f32[1,512], index: 8, kind: input, shape index: {}]
  %s9 = inlined_call_operand.hbm [shape: f32[1,512], index: 9, kind: input, shape index: {}]
  %s10 = inlined_call_operand.hbm [shape: f32[1,512], index: 10, kind: input, shape index: {}]
  %s11 = inlined_call_operand.hbm [shape: f32[1,1024], index: 11, kind: input, shape index: {}]
  %s12 = inlined_call_operand.hbm [shape: f32[1,1024], index: 12, kind: input, shape index: {}]
  %s13 = inlined_call_operand.hbm [shape: f32[1,1024], index: 13, kind: input, shape index: {}]
  %s14 = inlined_call_operand.hbm [shape: f32[1,896], index: 14, kind: input, shape index: {}]
  %s15 = inlined_call_operand.hbm [shape: bf16[512,1024], index: 15, kind: input, shape index: {}]
  %s16 = inlined_call_operand.hbm [shape: bf16[1024,896], index: 16, kind: input, shape index: {}]
  %s17 = inlined_call_operand.vmem [shape: f32[8,896], index: 17, kind: output, shape index: {}]
  %s18 = sld [smem:[#allocation0]]
  $region146: #{generator_forward.1} parent=0
    _
  %s20 = ssub.s32 1, %s18
  %s21 = scalar_select 0, %s20, %s18
  $region1: #{generator_forward.1} parent=0
    #allocation5 [shape = 'u8[32768]{0}', space=vmem, size = 0x8000, scoped, tag = 'input window, operand 1, single buffered']
    #allocation6 [shape = 's32[1]{0}', space=sflag, size = 0x4, scoped, tag = 'scoped memory for generator_forward.1']
    #allocation7 [shape = 'u8[512]{0}', space=vmem, size = 0x400, scoped, tag = 'input window, operand 2, single buffered']
    #allocation8 [shape = 's32[1]{0}', space=sflag, size = 0x4, scoped, tag = 'scoped memory for generator_forward.1']
    #allocation9 [shape = 'u8[65536]{0}', space=vmem, size = 0x10000, scoped, tag = 'input window, operand 3, single buffered']
    #allocation10 [shape = 'u8[1024]{0}', space=vmem, size = 0x400, scoped, tag = 'input window, operand 4, single buffered']
    #allocation11 [shape = 's32[1]{0}', space=sflag, size = 0x4, scoped, tag = 'scoped memory for generator_forward.1']
    #allocation12 [shape = 'u8[1024]{0}', space=vmem, size = 0x400, scoped, tag = 'input window, operand 5, single buffered']
    #allocation13 [shape = 'u8[1024]{0}', space=vmem, size = 0x400, scoped, tag = 'input window, operand 6, single buffered']
    #allocation14 [shape = 's32[1]{0}', space=sflag, size = 0x4, scoped, tag = 'scoped memory for generator_forward.1']
    #allocation15 [shape = 'u8[262144]{0}', space=vmem, size = 0x40000, scoped, tag = 'input window, operand 7, single buffered']
    #allocation16 [shape = 'u8[2048]{0}', space=vmem, size = 0x800, scoped, tag = 'input window, operand 8, single buffered']
    #allocation17 [shape = 's32[1]{0}', space=sflag, size = 0x4, scoped, tag = 'scoped memory for generator_forward.1']
    #allocation18 [shape = 'u8[2048]{0}', space=vmem, size = 0x800, scoped, tag = 'input window, operand 9, single buffered']
    #allocation19 [shape = 'u8[2048]{0}', space=vmem, size = 0x800, scoped, tag = 'input window, operand 10, single buffered']
    #allocation20 [shape = 's32[1]{0}', space=sflag, size = 0x4, scoped, tag = 'scoped memory for generator_forward.1']
    #allocation21 [shape = 'u8[4096]{0}', space=vmem, size = 0x1000, scoped, tag = 'input window, operand 11, single buffered']
    #allocation22 [shape = 'u8[4096]{0}', space=vmem, size = 0x1000, scoped, tag = 'input window, operand 12, single buffered']
    #allocation23 [shape = 's32[1]{0}', space=sflag, size = 0x4, scoped, tag = 'scoped memory for generator_forward.1']
    #allocation24 [shape = 'u8[4096]{0}', space=vmem, size = 0x1000, scoped, tag = 'input window, operand 13, single buffered']
    #allocation25 [shape = 'u8[3584]{0}', space=vmem, size = 0x1000, scoped, tag = 'input window, operand 14, single buffered']
    #allocation26 [shape = 's32[1]{0}', space=sflag, size = 0x4, scoped, tag = 'scoped memory for generator_forward.1']
    %22 = vsyncpa [#allocation6], 0
    %23 = vsyncpa [#allocation8], 0
    %24 = vsyncpa [#allocation11], 0
    %25 = vsyncpa [#allocation14], 0
    %26 = vsyncpa [#allocation17], 0
    %27 = vsyncpa [#allocation20], 0
    %28 = vsyncpa [#allocation23], 0
    %29 = vsyncpa [#allocation26], 0
    // Predicated region
    $region2: #{generator_forward.1} parent=1 // pred_check
      _
    $region3: #{generator_forward.1} parent=1 // pred_check_branch
      %31 = sbr.rel (0) target = $region5
    $region4: #{generator_forward.1} parent=1 // pred_region
      _
    $region5: #{generator_forward.1} parent=1 // pred_fallthru
      _
    // Predicated region
    $region6: #{generator_forward.1} parent=1 // pred_check
      _
    $region7: #{generator_forward.1} parent=1 // pred_check_branch
      %33 = sbr.rel (0) target = $region9
    $region8: #{generator_forward.1} parent=1 // pred_region
      %s35 = ssub.s32 1024, 1024
      %36 = vsyncadd [#allocation6], %s35
      %s37 = sshll.u32 [#allocation5], 4
      %s38 = int_to_ptr.vmem [resolvable:$true] %s37
      %43 = dma.hbm_to_vmem [thread:$0]  %s1, 1024, %s38, [#allocation6], 64, 64, 4
    $region9: #{generator_forward.1} parent=1 // pred_fallthru
      _
    // Predicated region
    $region10: #{generator_forward.1} parent=1 // pred_check
      _
    $region11: #{generator_forward.1} parent=1 // pred_check_branch
      %45 = sbr.rel (0) target = $region13
    $region12: #{generator_forward.1} parent=1 // pred_region
      %s47 = ssub.s32 16, 16
      %48 = vsyncadd [#allocation8], %s47
      %s50 = sshll.u32 [#allocation7], 4
      %s51 = int_to_ptr.vmem [resolvable:$true] %s50
      %53 = dma.hbm_to_vmem [thread:$0]  %s2, 16, %s51, [#allocation8]
    $region13: #{generator_forward.1} parent=1 // pred_fallthru
      _
    // Predicated region
    $region14: #{generator_forward.1} parent=1 // pred_check
      _
    $region15: #{generator_forward.1} parent=1 // pred_check_branch
      %55 = sbr.rel (0) target = $region17
    $region16: #{generator_forward.1} parent=1 // pred_region
      %s57 = ssub.s32 2048, 2048
      %58 = vsyncadd [#allocation8], %s57
      %s59 = sshll.u32 [#allocation9], 4
      %s60 = int_to_ptr.vmem [resolvable:$true] %s59
      %65 = dma.hbm_to_vmem [thread:$0]  %s3, 2048, %s60, [#allocation8], 128, 128, 8
    $region17: #{generator_forward.1} parent=1 // pred_fallthru
      _
    // Predicated region
    $region18: #{generator_forward.1} parent=1 // pred_check
      _
    $region19: #{generator_forward.1} parent=1 // pred_check_branch
      %67 = sbr.rel (0) target = $region21
    $region20: #{generator_forward.1} parent=1 // pred_region
      %s69 = ssub.s32 32, 32
      %70 = vsyncadd [#allocation11], %s69
      %s72 = sshll.u32 [#allocation10], 4
      %s73 = int_to_ptr.vmem [resolvable:$true] %s72
      %75 = dma.hbm_to_vmem [thread:$0]  %s4, 32, %s73, [#allocation11]
    $region21: #{generator_forward.1} parent=1 // pred_fallthru
      _
    // Predicated region
    $region22: #{generator_forward.1} parent=1 // pred_check
      _
    $region23: #{generator_forward.1} parent=1 // pred_check_branch
      %77 = sbr.rel (0) target = $region25
    $region24: #{generator_forward.1} parent=1 // pred_region
      %s79 = ssub.s32 32, 32
      %80 = vsyncadd [#allocation11], %s79
      %s82 = sshll.u32 [#allocation12], 4
      %s83 = int_to_ptr.vmem [resolvable:$true] %s82
      %85 = dma.hbm_to_vmem [thread:$0]  %s5, 32, %s83, [#allocation11]
    $region25: #{generator_forward.1} parent=1 // pred_fallthru
      _
    // Predicated region
    $region26: #{generator_forward.1} parent=1 // pred_check
      _
    $region27: #{generator_forward.1} parent=1 // pred_check_branch
      %87 = sbr.rel (0) target = $region29
    $region28: #{generator_forward.1} parent=1 // pred_region
      %s89 = ssub.s32 32, 32
      %90 = vsyncadd [#allocation14], %s89
      %s92 = sshll.u32 [#allocation13], 4
      %s93 = int_to_ptr.vmem [resolvable:$true] %s92
      %95 = dma.hbm_to_vmem [thread:$0]  %s6, 32, %s93, [#allocation14]
    $region29: #{generator_forward.1} parent=1 // pred_fallthru
      _
    // Predicated region
    $region30: #{generator_forward.1} parent=1 // pred_check
      _
    $region31: #{generator_forward.1} parent=1 // pred_check_branch
      %97 = sbr.rel (0) target = $region33
    $region32: #{generator_forward.1} parent=1 // pred_region
      %s99 = ssub.s32 8192, 8192
      %100 = vsyncadd [#allocation14], %s99
      %s101 = sshll.u32 [#allocation15], 4
      %s102 = int_to_ptr.vmem [resolvable:$true] %s101
      %107 = dma.hbm_to_vmem [thread:$0]  %s7, 8192, %s102, [#allocation14], 256, 256, 16
    $region33: #{generator_forward.1} parent=1 // pred_fallthru
      _
    // Predicated region
    $region34: #{generator_forward.1} parent=1 // pred_check
      _
    $region35: #{generator_forward.1} parent=1 // pred_check_branch
      %109 = sbr.rel (0) target = $region37
    $region36: #{generator_forward.1} parent=1 // pred_region
      %s111 = ssub.s32 64, 64
      %112 = vsyncadd [#allocation17], %s111
      %s114 = sshll.u32 [#allocation16], 4
      %s115 = int_to_ptr.vmem [resolvable:$true] %s114
      %117 = dma.hbm_to_vmem [thread:$0]  %s8, 64, %s115, [#allocation17]
    $region37: #{generator_forward.1} parent=1 // pred_fallthru
      _
    // Predicated region
    $region38: #{generator_forward.1} parent=1 // pred_check
      _
    $region39: #{generator_forward.1} parent=1 // pred_check_branch
      %119 = sbr.rel (0) target = $region41
    $region40: #{generator_forward.1} parent=1 // pred_region
      %s121 = ssub.s32 64, 64
      %122 = vsyncadd [#allocation17], %s121
      %s124 = sshll.u32 [#allocation18], 4
      %s125 = int_to_ptr.vmem [resolvable:$true] %s124
      %127 = dma.hbm_to_vmem [thread:$0]  %s9, 64, %s125, [#allocation17]
    $region41: #{generator_forward.1} parent=1 // pred_fallthru
      _
    // Predicated region
    $region42: #{generator_forward.1} parent=1 // pred_check
      _
    $region43: #{generator_forward.1} parent=1 // pred_check_branch
      %129 = sbr.rel (0) target = $region45
    $region44: #{generator_forward.1} parent=1 // pred_region
      %s131 = ssub.s32 64, 64
      %132 = vsyncadd [#allocation20], %s131
      %s134 = sshll.u32 [#allocation19], 4
      %s135 = int_to_ptr.vmem [resolvable:$true] %s134
      %137 = dma.hbm_to_vmem [thread:$0]  %s10, 64, %s135, [#allocation20]
    $region45: #{generator_forward.1} parent=1 // pred_fallthru
      _
    // Predicated region
    $region46: #{generator_forward.1} parent=1 // pred_check
      _
    $region47: #{generator_forward.1} parent=1 // pred_check_branch
      %139 = sbr.rel (0) target = $region49
    $region48: #{generator_forward.1} parent=1 // pred_region
      %s141 = ssub.s32 128, 128
      %142 = vsyncadd [#allocation20], %s141
      %s144 = sshll.u32 [#allocation21], 4
      %s145 = int_to_ptr.vmem [resolvable:$true] %s144
      %147 = dma.hbm_to_vmem [thread:$0]  %s11, 128, %s145, [#allocation20]
    $region49: #{generator_forward.1} parent=1 // pred_fallthru
      _
    // Predicated region
    $region50: #{generator_forward.1} parent=1 // pred_check
      _
    $region51: #{generator_forward.1} parent=1 // pred_check_branch
      %149 = sbr.rel (0) target = $region53
    $region52: #{generator_forward.1} parent=1 // pred_region
      %s151 = ssub.s32 128, 128
      %152 = vsyncadd [#allocation23], %s151
      %s154 = sshll.u32 [#allocation22], 4
      %s155 = int_to_ptr.vmem [resolvable:$true] %s154
      %157 = dma.hbm_to_vmem [thread:$0]  %s12, 128, %s155, [#allocation23]
    $region53: #{generator_forward.1} parent=1 // pred_fallthru
      _
    // Predicated region
    $region54: #{generator_forward.1} parent=1 // pred_check
      _
    $region55: #{generator_forward.1} parent=1 // pred_check_branch
      %159 = sbr.rel (0) target = $region57
    $region56: #{generator_forward.1} parent=1 // pred_region
      %s161 = ssub.s32 128, 128
      %162 = vsyncadd [#allocation23], %s161
      %s164 = sshll.u32 [#allocation24], 4
      %s165 = int_to_ptr.vmem [resolvable:$true] %s164
      %167 = dma.hbm_to_vmem [thread:$0]  %s13, 128, %s165, [#allocation23]
    $region57: #{generator_forward.1} parent=1 // pred_fallthru
      _
    // Predicated region
    $region58: #{generator_forward.1} parent=1 // pred_check
      _
    $region59: #{generator_forward.1} parent=1 // pred_check_branch
      %169 = sbr.rel (0) target = $region61
    $region60: #{generator_forward.1} parent=1 // pred_region
      %s171 = ssub.s32 112, 112
      %172 = vsyncadd [#allocation26], %s171
      %s174 = sshll.u32 [#allocation25], 4
      %s175 = int_to_ptr.vmem [resolvable:$true] %s174
      %177 = dma.hbm_to_vmem [thread:$0]  %s14, 112, %s175, [#allocation26]
    $region61: #{generator_forward.1} parent=1 // pred_fallthru
      _
    // Predicated region
    $region62: #{generator_forward.1} parent=1 // pred_check
      _
    $region63: #{generator_forward.1} parent=1 // pred_check_branch
      %179 = sbr.rel (0) target = $region65
    $region64: #{generator_forward.1} parent=1 // pred_region
      %180 = dma.done [#allocation6], 1024
    $region65: #{generator_forward.1} parent=1 // pred_fallthru
      _
    // Predicated region
    $region66: #{generator_forward.1} parent=1 // pred_check
      _
    $region67: #{generator_forward.1} parent=1 // pred_check_branch
      %182 = sbr.rel (0) target = $region69
    $region68: #{generator_forward.1} parent=1 // pred_region
      %183 = dma.done [#allocation8], 16
    $region69: #{generator_forward.1} parent=1 // pred_fallthru
      _
    // Predicated region
    $region70: #{generator_forward.1} parent=1 // pred_check
      _
    $region71: #{generator_forward.1} parent=1 // pred_check_branch
      %185 = sbr.rel (0) target = $region73
    $region72: #{generator_forward.1} parent=1 // pred_region
      %186 = dma.done [#allocation8], 2048
    $region73: #{generator_forward.1} parent=1 // pred_fallthru
      _
    // Predicated region
    $region74: #{generator_forward.1} parent=1 // pred_check
      _
    $region75: #{generator_forward.1} parent=1 // pred_check_branch
      %188 = sbr.rel (0) target = $region77
    $region76: #{generator_forward.1} parent=1 // pred_region
      %189 = dma.done [#allocation11], 32
    $region77: #{generator_forward.1} parent=1 // pred_fallthru
      _
    // Predicated region
    $region78: #{generator_forward.1} parent=1 // pred_check
      _
    $region79: #{generator_forward.1} parent=1 // pred_check_branch
      %191 = sbr.rel (0) target = $region81
    $region80: #{generator_forward.1} parent=1 // pred_region
      %192 = dma.done [#allocation11], 32
    $region81: #{generator_forward.1} parent=1 // pred_fallthru
      _
    // Predicated region
    $region82: #{generator_forward.1} parent=1 // pred_check
      _
    $region83: #{generator_forward.1} parent=1 // pred_check_branch
      %194 = sbr.rel (0) target = $region85
    $region84: #{generator_forward.1} parent=1 // pred_region
      %195 = dma.done [#allocation14], 32
    $region85: #{generator_forward.1} parent=1 // pred_fallthru
      _
    // Predicated region
    $region86: #{generator_forward.1} parent=1 // pred_check
      _
    $region87: #{generator_forward.1} parent=1 // pred_check_branch
      %197 = sbr.rel (0) target = $region89
    $region88: #{generator_forward.1} parent=1 // pred_region
      %198 = dma.done [#allocation14], 8192
    $region89: #{generator_forward.1} parent=1 // pred_fallthru
      _
    // Predicated region
    $region90: #{generator_forward.1} parent=1 // pred_check
      _
    $region91: #{generator_forward.1} parent=1 // pred_check_branch
      %200 = sbr.rel (0) target = $region93
    $region92: #{generator_forward.1} parent=1 // pred_region
      %201 = dma.done [#allocation17], 64
    $region93: #{generator_forward.1} parent=1 // pred_fallthru
      _
    // Predicated region
    $region94: #{generator_forward.1} parent=1 // pred_check
      _
    $region95: #{generator_forward.1} parent=1 // pred_check_branch
      %203 = sbr.rel (0) target = $region97
    $region96: #{generator_forward.1} parent=1 // pred_region
      %204 = dma.done [#allocation17], 64
    $region97: #{generator_forward.1} parent=1 // pred_fallthru
      _
    // Predicated region
    $region98: #{generator_forward.1} parent=1 // pred_check
      _
    $region99: #{generator_forward.1} parent=1 // pred_check_branch
      %206 = sbr.rel (0) target = $region101
    $region100: #{generator_forward.1} parent=1 // pred_region
      %207 = dma.done [#allocation20], 64
    $region101: #{generator_forward.1} parent=1 // pred_fallthru
      _
    // Predicated region
    $region102: #{generator_forward.1} parent=1 // pred_check
      _
    $region103: #{generator_forward.1} parent=1 // pred_check_branch
      %209 = sbr.rel (0) target = $region105
    $region104: #{generator_forward.1} parent=1 // pred_region
      %210 = dma.done [#allocation20], 128
    $region105: #{generator_forward.1} parent=1 // pred_fallthru
      _
    // Predicated region
    $region106: #{generator_forward.1} parent=1 // pred_check
      _
    $region107: #{generator_forward.1} parent=1 // pred_check_branch
      %212 = sbr.rel (0) target = $region109
    $region108: #{generator_forward.1} parent=1 // pred_region
      %213 = dma.done [#allocation23], 128
    $region109: #{generator_forward.1} parent=1 // pred_fallthru
      _
    // Predicated region
    $region110: #{generator_forward.1} parent=1 // pred_check
      _
    $region111: #{generator_forward.1} parent=1 // pred_check_branch
      %215 = sbr.rel (0) target = $region113
    $region112: #{generator_forward.1} parent=1 // pred_region
      %216 = dma.done [#allocation23], 128
    $region113: #{generator_forward.1} parent=1 // pred_fallthru
      _
    // Predicated region
    $region114: #{generator_forward.1} parent=1 // pred_check
      _
    $region115: #{generator_forward.1} parent=1 // pred_check_branch
      %218 = sbr.rel (0) target = $region117
    $region116: #{generator_forward.1} parent=1 // pred_region
      %219 = dma.done [#allocation26], 112
    $region117: #{generator_forward.1} parent=1 // pred_fallthru
      _
    %p221 = scmp.eq.s32.totalorder 0, 0
    // Predicated region
    $region118: #{generator_forward.1} parent=1 // pred_check
      %p222 = pneg %p221
    $region119: #{generator_forward.1} parent=1 // pred_check_branch
      %224 = sbr.rel (%p222) target = $region121
    $region120: #{generator_forward.1} parent=1 // pred_region
      // Predicated region
      $region122: #{generator_forward.1} parent=120 // pred_check
        _
      $region123: #{generator_forward.1} parent=120 // pred_check_branch
        %226 = sbr.rel target = $region125
      $region124: #{generator_forward.1} parent=120 // pred_region
        %227 = sst [smem:[#allocation29]] [#allocation28]
        %228 = sst [smem:[#allocation30]] [#allocation27]
      $region125: #{generator_forward.1} parent=120 // pred_fallthru
        _
      %230 = shalt.err (0)
      %s232 = sshll.u32 [#allocation2], 4
      %s233 = int_to_ptr.vmem [resolvable:$true] %s232
      %235 = dma.hbm_to_vmem [thread:$0]  %s15, 32768, %s233, [#allocation4]
      %s236 = scalar_lea.sflag [#allocation4], 1
      // Predicated region
      $region126: #{generator_forward.1} parent=120 // pred_check
        _
      $region127: #{generator_forward.1} parent=120 // pred_check_branch
        %238 = sbr.rel target = $region129
      $region128: #{generator_forward.1} parent=120 // pred_region
        %239 = sst [smem:[#allocation29]] [#allocation32]
        %240 = sst [smem:[#allocation30]] [#allocation31]
      $region129: #{generator_forward.1} parent=120 // pred_fallthru
        _
      %242 = shalt.err (0)
      %s244 = sshll.u32 [#allocation3], 4
      %s245 = int_to_ptr.vmem [resolvable:$true] %s244
      %247 = dma.hbm_to_vmem [thread:$0]  %s16, 57344, %s245, %s236
    $region121: #{generator_forward.1} parent=1 // pred_fallthru
      _
    %v248 = vld [vmem:[%s0] sm:$0xf]
    %v249 = vld [vmem:[#allocation5] sm:$0xf]
    %v250 = vld [vmem:[#allocation5 + $0x4] sm:$0xf]
    %v251 = vld [vmem:[#allocation5 + $0x8] sm:$0xf]
    %v252 = vld [vmem:[#allocation5 + $0xc] sm:$0xf]
    %v253 = vld [vmem:[#allocation5 + $0x10] sm:$0xf]
    %v254 = vld [vmem:[#allocation5 + $0x14] sm:$0xf]
    %v255 = vld [vmem:[#allocation5 + $0x18] sm:$0xf]
    %v256 = vld [vmem:[#allocation5 + $0x1c] sm:$0xf]
    %v257 = vld [vmem:[#allocation5 + $0x20] sm:$0xf]
    %v258 = vld [vmem:[#allocation5 + $0x24] sm:$0xf]
    %v259 = vld [vmem:[#allocation5 + $0x28] sm:$0xf]
    %v260 = vld [vmem:[#allocation5 + $0x2c] sm:$0xf]
    %v261 = vld [vmem:[#allocation5 + $0x30] sm:$0xf]
    %v262 = vld [vmem:[#allocation5 + $0x34] sm:$0xf]
    %v263 = vld [vmem:[#allocation5 + $0x38] sm:$0xf]
    %v264 = vld [vmem:[#allocation5 + $0x3c] sm:$0xf]
    %v265 = vld [vmem:[#allocation7] sm:$0x1]
    %v267 = vlaneseq
    %v268 = vshrl.u32 %v267, 7
    %v269 = vsub.s32 0, %v268
    %v270 = vrot.slane %v265, %v269
    %v288 = vunpack.c.l.b16 %v249
    %v289 = vunpack.c.l.b16 %v250
    %v290 = vunpack.c.l.b16 %v251
    %v291 = vunpack.c.l.b16 %v252
    %v292 = vunpack.c.l.b16 %v253
    %v293 = vunpack.c.l.b16 %v254
    %v294 = vunpack.c.l.b16 %v255
    %v295 = vunpack.c.l.b16 %v256
    %v296 = vunpack.c.l.b16 %v257
    %v297 = vunpack.c.l.b16 %v258
    %v298 = vunpack.c.l.b16 %v259
    %v299 = vunpack.c.l.b16 %v260
    %v300 = vunpack.c.l.b16 %v261
    %v301 = vunpack.c.l.b16 %v262
    %v302 = vunpack.c.l.b16 %v263
    %v303 = vunpack.c.l.b16 %v264
    %v304 = vpack.c.b16 %v289, %v288
    %v305 = vpack.c.b16 %v291, %v290
    %v306 = vpack.c.b16 %v293, %v292
    %v307 = vpack.c.b16 %v295, %v294
    %v308 = vpack.c.b16 %v297, %v296
    %v309 = vpack.c.b16 %v299, %v298
    %v310 = vpack.c.b16 %v301, %v300
    %v311 = vpack.c.b16 %v303, %v302
    %320 = vmatprep.subr.bf16.mxu0 0
    %321 = vmatpush1.bf16.msra.mxu0 %v311
    %322 = vmatprep.subr.bf16.mxu0 0
    %323 = vmatpush1.bf16.msra.mxu0 %v310
    %324 = vmatprep.subr.bf16.mxu0 0
    %325 = vmatpush1.bf16.msra.mxu0 %v309
    %326 = vmatprep.subr.bf16.mxu0 0
    %327 = vmatpush1.bf16.msra.mxu0 %v308
    %328 = vmatprep.subr.bf16.mxu0 0
    %329 = vmatpush1.bf16.msra.mxu0 %v307
    %330 = vmatprep.subr.bf16.mxu0 0
    %331 = vmatpush1.bf16.msra.mxu0 %v306
    %332 = vmatprep.subr.bf16.mxu0 0
    %333 = vmatpush1.bf16.msra.mxu0 %v305
    %334 = vmatprep.subr.bf16.mxu0 0
    %335 = vmatpush1.bf16.msra.mxu0 %v304
    %336 = vmatprep.subr.bf16.mxu0 0
    %337 = vmatpush2.bf16.msra.mxu0 0
    %338 = vmatprep.subr.bf16.mxu0 0
    %339 = vmatpush2.bf16.msra.mxu0 0
    %340 = vmatprep.subr.bf16.mxu0 0
    %341 = vmatpush2.bf16.msra.mxu0 0
    %342 = vmatprep.subr.bf16.mxu0 0
    %343 = vmatpush2.bf16.msra.mxu0 0
    %344 = vmatprep.subr.bf16.mxu0 0
    %345 = vmatpush2.bf16.msra.mxu0 0
    %346 = vmatprep.subr.bf16.mxu0 0
    %347 = vmatpush2.bf16.msra.mxu0 0
    %348 = vmatprep.subr.bf16.mxu0 0
    %349 = vmatpush2.bf16.msra.mxu0 0
    %350 = vmatprep.subr.bf16.mxu0 0
    %351 = vmatpush2.bf16.msra.mxu0 0
    %352 = vmatprep.mubr.bf16.mxu0 0
    %353 = vmatmul.mubr.bf16.gmra.mxu0 %v248
    %v354 = vpop.f32.mrf.mxu0
    %v355 = vadd.f32 %v270, %v354
    %v356 = vpop.f32.mrf.mxu0
    %v357 = vpop.f32.mrf.mxu0
    %v358 = vpop.f32.mrf.mxu0
    %359 = vdwg.mxu0
    %vm360 = vcmp.gt.f32.partialorder %v355, 0.0
    %v361 = vmul.f32 %v355, 0.2
    %v362 = vsel %vm360, %v355, %v361
    %v363 = vld [vmem:[#allocation9] sm:$0xff]
    %v364 = vld [vmem:[#allocation9 + $0x8] sm:$0xff]
    %v365 = vld [vmem:[#allocation9 + $0x10] sm:$0xff]
    %v366 = vld [vmem:[#allocation9 + $0x18] sm:$0xff]
    %v367 = vld [vmem:[#allocation9 + $0x20] sm:$0xff]
    %v368 = vld [vmem:[#allocation9 + $0x28] sm:$0xff]
    %v369 = vld [vmem:[#allocation9 + $0x30] sm:$0xff]
    %v370 = vld [vmem:[#allocation9 + $0x38] sm:$0xff]
    %v371 = vld [vmem:[#allocation9 + $0x40] sm:$0xff]
    %v372 = vld [vmem:[#allocation9 + $0x48] sm:$0xff]
    %v373 = vld [vmem:[#allocation9 + $0x50] sm:$0xff]
    %v374 = vld [vmem:[#allocation9 + $0x58] sm:$0xff]
    %v375 = vld [vmem:[#allocation9 + $0x60] sm:$0xff]
    %v376 = vld [vmem:[#allocation9 + $0x68] sm:$0xff]
    %v377 = vld [vmem:[#allocation9 + $0x70] sm:$0xff]
    %v378 = vld [vmem:[#allocation9 + $0x78] sm:$0xff]
    %v379 = vpack.c.bf16 %v362, %v362
    %v380 = vld [vmem:[#allocation10] sm:$0x3]
    %v382 = vlaneseq
    %v383 = vshrl.u32 %v382, 7
    %v384 = vsub.s32 0, %v383
    %v385 = vrot.slane %v380, %v384
    %v386 = vlaneseq
    %v387 = vshrl.u32 %v386, 7
    %v388 = vsub.s32 1, %v387
    %v389 = vrot.slane %v380, %v388
    %v408 = vunpack.c.l.b16 %v363
    %v409 = vunpack.c.h.b16 %v363
    %v410 = vunpack.c.l.b16 %v364
    %v411 = vunpack.c.h.b16 %v364
    %v412 = vunpack.c.l.b16 %v365
    %v413 = vunpack.c.h.b16 %v365
    %v414 = vunpack.c.l.b16 %v366
    %v415 = vunpack.c.h.b16 %v366
    %v416 = vunpack.c.l.b16 %v367
    %v417 = vunpack.c.h.b16 %v367
    %v418 = vunpack.c.l.b16 %v368
    %v419 = vunpack.c.h.b16 %v368
    %v420 = vunpack.c.l.b16 %v369
    %v421 = vunpack.c.h.b16 %v369
    %v422 = vunpack.c.l.b16 %v370
    %v423 = vunpack.c.h.b16 %v370
    %v424 = vunpack.c.l.b16 %v371
    %v425 = vunpack.c.h.b16 %v371
    %v426 = vunpack.c.l.b16 %v372
    %v427 = vunpack.c.h.b16 %v372
    %v428 = vunpack.c.l.b16 %v373
    %v429 = vunpack.c.h.b16 %v373
    %v430 = vunpack.c.l.b16 %v374
    %v431 = vunpack.c.h.b16 %v374
    %v432 = vunpack.c.l.b16 %v375
    %v433 = vunpack.c.h.b16 %v375
    %v434 = vunpack.c.l.b16 %v376
    %v435 = vunpack.c.h.b16 %v376
    %v436 = vunpack.c.l.b16 %v377
    %v437 = vunpack.c.h.b16 %v377
    %v438 = vunpack.c.l.b16 %v378
    %v439 = vunpack.c.h.b16 %v378
    %v440 = vpack.c.b16 %v410, %v408
    %v441 = vpack.c.b16 %v411, %v409
    %v442 = vpack.c.b16 %v414, %v412
    %v443 = vpack.c.b16 %v415, %v413
    %v444 = vpack.c.b16 %v418, %v416
    %v445 = vpack.c.b16 %v419, %v417
    %v446 = vpack.c.b16 %v422, %v420
    %v447 = vpack.c.b16 %v423, %v421
    %v448 = vpack.c.b16 %v426, %v424
    %v449 = vpack.c.b16 %v427, %v425
    %v450 = vpack.c.b16 %v430, %v428
    %v451 = vpack.c.b16 %v431, %v429
    %v452 = vpack.c.b16 %v434, %v432
    %v453 = vpack.c.b16 %v435, %v433
    %v454 = vpack.c.b16 %v438, %v436
    %v455 = vpack.c.b16 %v439, %v437
    %472 = vmatprep.subr.bf16.mxu0 %v455
    %473 = vmatpush1.bf16.msra.mxu0 %v454
    %474 = vmatprep.subr.bf16.mxu0 %v453
    %475 = vmatpush1.bf16.msra.mxu0 %v452
    %476 = vmatprep.subr.bf16.mxu0 %v451
    %477 = vmatpush1.bf16.msra.mxu0 %v450
    %478 = vmatprep.subr.bf16.mxu0 %v449
    %479 = vmatpush1.bf16.msra.mxu0 %v448
    %480 = vmatprep.subr.bf16.mxu0 %v447
    %481 = vmatpush1.bf16.msra.mxu0 %v446
    %482 = vmatprep.subr.bf16.mxu0 %v445
    %483 = vmatpush1.bf16.msra.mxu0 %v444
    %484 = vmatprep.subr.bf16.mxu0 %v443
    %485 = vmatpush1.bf16.msra.mxu0 %v442
    %486 = vmatprep.subr.bf16.mxu0 %v441
    %487 = vmatpush1.bf16.msra.mxu0 %v440
    %488 = vmatprep.subr.bf16.mxu0 0
    %489 = vmatpush2.bf16.msra.mxu0 0
    %490 = vmatprep.subr.bf16.mxu0 0
    %491 = vmatpush2.bf16.msra.mxu0 0
    %492 = vmatprep.subr.bf16.mxu0 0
    %493 = vmatpush2.bf16.msra.mxu0 0
    %494 = vmatprep.subr.bf16.mxu0 0
    %495 = vmatpush2.bf16.msra.mxu0 0
    %496 = vmatprep.subr.bf16.mxu0 0
    %497 = vmatpush2.bf16.msra.mxu0 0
    %498 = vmatprep.subr.bf16.mxu0 0
    %499 = vmatpush2.bf16.msra.mxu0 0
    %500 = vmatprep.subr.bf16.mxu0 0
    %501 = vmatpush2.bf16.msra.mxu0 0
    %502 = vmatprep.subr.bf16.mxu0 0
    %503 = vmatpush2.bf16.msra.mxu0 0
    %504 = vmatprep.mubr.bf16.mxu0 0
    %505 = vmatmul.mubr.bf16.gmra.mxu0 %v379
    %v506 = vpop.f32.mrf.mxu0
    %v507 = vadd.f32 %v385, %v506
    %v508 = vpop.f32.mrf.mxu0
    %v509 = vadd.f32 %v389, %v508
    %v510 = vpop.f32.mrf.mxu0
    %v511 = vpop.f32.mrf.mxu0
    %512 = vdwg.mxu0
    %v513 = vld [vmem:[#allocation12] sm:$0x3]
    %v514 = vld [vmem:[#allocation13] sm:$0x3]
    %v515 = vrot.slane %v507, 4
    %v516 = vadd.f32 %v507, %v515
    %v517 = vrot.slane %v516, 2
    %v518 = vadd.f32 %v516, %v517
    %v519 = vrot.slane %v518, 1
    %v520 = vadd.f32 %v518, %v519
    %v521 = vrot.slane %v509, 4
    %v522 = vadd.f32 %v509, %v521
    %v523 = vrot.slane %v522, 2
    %v524 = vadd.f32 %v522, %v523
    %v525 = vrot.slane %v524, 1
    %v526 = vadd.f32 %v524, %v525
    %v527 = vmul.f32 %v520, 0.125
    %v528 = vmul.f32 %v526, 0.125
    %v529 = vmul.f32 %v507, %v507
    %v530 = vmul.f32 %v509, %v509
    %v531 = vrot.slane %v529, 4
    %v532 = vadd.f32 %v529, %v531
    %v533 = vrot.slane %v532, 2
    %v534 = vadd.f32 %v532, %v533
    %v535 = vrot.slane %v534, 1
    %v536 = vadd.f32 %v534, %v535
    %v537 = vrot.slane %v530, 4
    %v538 = vadd.f32 %v530, %v537
    %v539 = vrot.slane %v538, 2
    %v540 = vadd.f32 %v538, %v539
    %v541 = vrot.slane %v540, 1
    %v542 = vadd.f32 %v540, %v541
    %v543 = vmul.f32 %v536, 0.125
    %v544 = vmul.f32 %v542, 0.125
    %v545 = vmul.f32 %v527, %v527
    %v546 = vmul.f32 %v528, %v528
    %v547 = vsub.f32 %v543, %v545
    %v548 = vsub.f32 %v544, %v546
    %v549 = vadd.f32 %v547, 1e-05
    %v550 = vadd.f32 %v548, 1e-05
    %v551 = vrsqrt.pop %v549
    %v552 = vrsqrt.pop %v550
    %v555 = vcombine.low %v551, %v552
    %v557 = vunpack.c.l.s4 1966171168
    %v558 = vunpack.c.0.s8 %v557
    %v559 = vlaneseq
    %v560 = vshrl.u32 %v559, 7
    %v561 = vsub.s32 %v558, %v560
    %v562 = vrot.slane %v555, %v561
    %v564 = vunpack.c.l.s4 1966171168
    %v565 = vunpack.c.0.s8 %v564
    %v566 = vlaneseq
    %v567 = vshrl.u32 %v566, 7
    %v568 = vsub.s32 %v565, %v567
    %v569 = vrot.slane %v562, %v568
    %v571 = vmul.f32 %v513, %v569
    %v573 = vlaneseq
    %v574 = vshrl.u32 %v573, 7
    %v575 = vsub.s32 0, %v574
    %v576 = vrot.slane %v571, %v575
    %v577 = vlaneseq
    %v578 = vshrl.u32 %v577, 7
    %v579 = vsub.s32 1, %v578
    %v580 = vrot.slane %v571, %v579
    %v583 = vmul.f32 %v527, %v576
    %v584 = vmul.f32 %v528, %v580
    %v587 = vcombine.low %v583, %v584
    %v589 = vunpack.c.l.s4 1966171168
    %v590 = vunpack.c.0.s8 %v589
    %v591 = vlaneseq
    %v592 = vshrl.u32 %v591, 7
    %v593 = vsub.s32 %v590, %v592
    %v594 = vrot.slane %v587, %v593
    %v596 = vunpack.c.l.s4 1966171168
    %v597 = vunpack.c.0.s8 %v596
    %v598 = vlaneseq
    %v599 = vshrl.u32 %v598, 7
    %v600 = vsub.s32 %v597, %v599
    %v601 = vrot.slane %v594, %v600
    %v603 = vsub.f32 %v514, %v601
    %v604 = vmul.f32 %v507, %v576
    %v605 = vmul.f32 %v509, %v580
    %v607 = vlaneseq
    %v608 = vshrl.u32 %v607, 7
    %v609 = vsub.s32 0, %v608
    %v610 = vrot.slane %v603, %v609
    %v611 = vlaneseq
    %v612 = vshrl.u32 %v611, 7
    %v613 = vsub.s32 1, %v612
    %v614 = vrot.slane %v603, %v613
    %v617 = vadd.f32 %v604, %v610
    %v618 = vadd.f32 %v605, %v614
    %vm619 = vcmp.gt.f32.partialorder %v617, 0.0
    %vm620 = vcmp.gt.f32.partialorder %v618, 0.0
    %v621 = vmul.f32 %v617, 0.2
    %v622 = vmul.f32 %v618, 0.2
    %v623 = vsel %vm619, %v617, %v621
    %v624 = vsel %vm620, %v618, %v622
    %v625 = vld [vmem:[#allocation15] sm:$0xff]
    %v626 = vld [vmem:[#allocation15 + $0x8] sm:$0xff]
    %v627 = vld [vmem:[#allocation15 + $0x10] sm:$0xff]
    %v628 = vld [vmem:[#allocation15 + $0x18] sm:$0xff]
    %v629 = vld [vmem:[#allocation15 + $0x20] sm:$0xff]
    %v630 = vld [vmem:[#allocation15 + $0x28] sm:$0xff]
    %v631 = vld [vmem:[#allocation15 + $0x30] sm:$0xff]
    %v632 = vld [vmem:[#allocation15 + $0x38] sm:$0xff]
    %v633 = vld [vmem:[#allocation15 + $0x40] sm:$0xff]
    %v634 = vld [vmem:[#allocation15 + $0x48] sm:$0xff]
    %v635 = vld [vmem:[#allocation15 + $0x50] sm:$0xff]
    %v636 = vld [vmem:[#allocation15 + $0x58] sm:$0xff]
    %v637 = vld [vmem:[#allocation15 + $0x60] sm:$0xff]
    %v638 = vld [vmem:[#allocation15 + $0x68] sm:$0xff]
    %v639 = vld [vmem:[#allocation15 + $0x70] sm:$0xff]
    %v640 = vld [vmem:[#allocation15 + $0x78] sm:$0xff]
    %v641 = vld [vmem:[#allocation15 + $0x80] sm:$0xff]
    %v642 = vld [vmem:[#allocation15 + $0x88] sm:$0xff]
    %v643 = vld [vmem:[#allocation15 + $0x90] sm:$0xff]
    %v644 = vld [vmem:[#allocation15 + $0x98] sm:$0xff]
    %v645 = vld [vmem:[#allocation15 + $0xa0] sm:$0xff]
    %v646 = vld [vmem:[#allocation15 + $0xa8] sm:$0xff]
    %v647 = vld [vmem:[#allocation15 + $0xb0] sm:$0xff]
    %v648 = vld [vmem:[#allocation15 + $0xb8] sm:$0xff]
    %v649 = vld [vmem:[#allocation15 + $0xc0] sm:$0xff]
    %v650 = vld [vmem:[#allocation15 + $0xc8] sm:$0xff]
    %v651 = vld [vmem:[#allocation15 + $0xd0] sm:$0xff]
    %v652 = vld [vmem:[#allocation15 + $0xd8] sm:$0xff]
    %v653 = vld [vmem:[#allocation15 + $0xe0] sm:$0xff]
    %v654 = vld [vmem:[#allocation15 + $0xe8] sm:$0xff]
    %v655 = vld [vmem:[#allocation15 + $0xf0] sm:$0xff]
    %v656 = vld [vmem:[#allocation15 + $0xf8] sm:$0xff]
    %v657 = vld [vmem:[#allocation15 + $0x100] sm:$0xff]
    %v658 = vld [vmem:[#allocation15 + $0x108] sm:$0xff]
    %v659 = vld [vmem:[#allocation15 + $0x110] sm:$0xff]
    %v660 = vld [vmem:[#allocation15 + $0x118] sm:$0xff]
    %v661 = vld [vmem:[#allocation15 + $0x120] sm:$0xff]
    %v662 = vld [vmem:[#allocation15 + $0x128] sm:$0xff]
    %v663 = vld [vmem:[#allocation15 + $0x130] sm:$0xff]
    %v664 = vld [vmem:[#allocation15 + $0x138] sm:$0xff]
    %v665 = vld [vmem:[#allocation15 + $0x140] sm:$0xff]
    %v666 = vld [vmem:[#allocation15 + $0x148] sm:$0xff]
    %v667 = vld [vmem:[#allocation15 + $0x150] sm:$0xff]
    %v668 = vld [vmem:[#allocation15 + $0x158] sm:$0xff]
    %v669 = vld [vmem:[#allocation15 + $0x160] sm:$0xff]
    %v670 = vld [vmem:[#allocation15 + $0x168] sm:$0xff]
    %v671 = vld [vmem:[#allocation15 + $0x170] sm:$0xff]
    %v672 = vld [vmem:[#allocation15 + $0x178] sm:$0xff]
    %v673 = vld [vmem:[#allocation15 + $0x180] sm:$0xff]
    %v674 = vld [vmem:[#allocation15 + $0x188] sm:$0xff]
    %v675 = vld [vmem:[#allocation15 + $0x190] sm:$0xff]
    %v676 = vld [vmem:[#allocation15 + $0x198] sm:$0xff]
    %v677 = vld [vmem:[#allocation15 + $0x1a0] sm:$0xff]
    %v678 = vld [vmem:[#allocation15 + $0x1a8] sm:$0xff]
    %v679 = vld [vmem:[#allocation15 + $0x1b0] sm:$0xff]
    %v680 = vld [vmem:[#allocation15 + $0x1b8] sm:$0xff]
    %v681 = vld [vmem:[#allocation15 + $0x1c0] sm:$0xff]
    %v682 = vld [vmem:[#allocation15 + $0x1c8] sm:$0xff]
    %v683 = vld [vmem:[#allocation15 + $0x1d0] sm:$0xff]
    %v684 = vld [vmem:[#allocation15 + $0x1d8] sm:$0xff]
    %v685 = vld [vmem:[#allocation15 + $0x1e0] sm:$0xff]
    %v686 = vld [vmem:[#allocation15 + $0x1e8] sm:$0xff]
    %v687 = vld [vmem:[#allocation15 + $0x1f0] sm:$0xff]
    %v688 = vld [vmem:[#allocation15 + $0x1f8] sm:$0xff]
    %v689 = vpack.c.bf16 %v623, %v623
    %v690 = vpack.c.bf16 %v624, %v624
    %v691 = vld [vmem:[#allocation16] sm:$0xf]
    %v693 = vlaneseq
    %v694 = vshrl.u32 %v693, 7
    %v695 = vsub.s32 0, %v694
    %v696 = vrot.slane %v691, %v695
    %v697 = vlaneseq
    %v698 = vshrl.u32 %v697, 7
    %v699 = vsub.s32 1, %v698
    %v700 = vrot.slane %v691, %v699
    %v701 = vlaneseq
    %v702 = vshrl.u32 %v701, 7
    %v703 = vsub.s32 2, %v702
    %v704 = vrot.slane %v691, %v703
    %v705 = vlaneseq
    %v706 = vshrl.u32 %v705, 7
    %v707 = vsub.s32 3, %v706
    %v708 = vrot.slane %v691, %v707
    %v777 = vunpack.c.l.b16 %v625
    %v778 = vunpack.c.h.b16 %v625
    %v779 = vunpack.c.l.b16 %v626
    %v780 = vunpack.c.h.b16 %v626
    %v781 = vunpack.c.l.b16 %v627
    %v782 = vunpack.c.h.b16 %v627
    %v783 = vunpack.c.l.b16 %v628
    %v784 = vunpack.c.h.b16 %v628
    %v785 = vunpack.c.l.b16 %v629
    %v786 = vunpack.c.h.b16 %v629
    %v787 = vunpack.c.l.b16 %v630
    %v788 = vunpack.c.h.b16 %v630
    %v789 = vunpack.c.l.b16 %v631
    %v790 = vunpack.c.h.b16 %v631
    %v791 = vunpack.c.l.b16 %v632
    %v792 = vunpack.c.h.b16 %v632
    %v793 = vunpack.c.l.b16 %v633
    %v794 = vunpack.c.h.b16 %v633
    %v795 = vunpack.c.l.b16 %v634
    %v796 = vunpack.c.h.b16 %v634
    %v797 = vunpack.c.l.b16 %v635
    %v798 = vunpack.c.h.b16 %v635
    %v799 = vunpack.c.l.b16 %v636
    %v800 = vunpack.c.h.b16 %v636
    %v801 = vunpack.c.l.b16 %v637
    %v802 = vunpack.c.h.b16 %v637
    %v803 = vunpack.c.l.b16 %v638
    %v804 = vunpack.c.h.b16 %v638
    %v805 = vunpack.c.l.b16 %v639
    %v806 = vunpack.c.h.b16 %v639
    %v807 = vunpack.c.l.b16 %v640
    %v808 = vunpack.c.h.b16 %v640
    %v809 = vunpack.c.l.b16 %v641
    %v810 = vunpack.c.h.b16 %v641
    %v811 = vunpack.c.l.b16 %v642
    %v812 = vunpack.c.h.b16 %v642
    %v813 = vunpack.c.l.b16 %v643
    %v814 = vunpack.c.h.b16 %v643
    %v815 = vunpack.c.l.b16 %v644
    %v816 = vunpack.c.h.b16 %v644
    %v817 = vunpack.c.l.b16 %v645
    %v818 = vunpack.c.h.b16 %v645
    %v819 = vunpack.c.l.b16 %v646
    %v820 = vunpack.c.h.b16 %v646
    %v821 = vunpack.c.l.b16 %v647
    %v822 = vunpack.c.h.b16 %v647
    %v823 = vunpack.c.l.b16 %v648
    %v824 = vunpack.c.h.b16 %v648
    %v825 = vunpack.c.l.b16 %v649
    %v826 = vunpack.c.h.b16 %v649
    %v827 = vunpack.c.l.b16 %v650
    %v828 = vunpack.c.h.b16 %v650
    %v829 = vunpack.c.l.b16 %v651
    %v830 = vunpack.c.h.b16 %v651
    %v831 = vunpack.c.l.b16 %v652
    %v832 = vunpack.c.h.b16 %v652
    %v833 = vunpack.c.l.b16 %v653
    %v834 = vunpack.c.h.b16 %v653
    %v835 = vunpack.c.l.b16 %v654
    %v836 = vunpack.c.h.b16 %v654
    %v837 = vunpack.c.l.b16 %v655
    %v838 = vunpack.c.h.b16 %v655
    %v839 = vunpack.c.l.b16 %v656
    %v840 = vunpack.c.h.b16 %v656
    %v841 = vunpack.c.l.b16 %v657
    %v842 = vunpack.c.h.b16 %v657
    %v843 = vunpack.c.l.b16 %v658
    %v844 = vunpack.c.h.b16 %v658
    %v845 = vunpack.c.l.b16 %v659
    %v846 = vunpack.c.h.b16 %v659
    %v847 = vunpack.c.l.b16 %v660
    %v848 = vunpack.c.h.b16 %v660
    %v849 = vunpack.c.l.b16 %v661
    %v850 = vunpack.c.h.b16 %v661
    %v851 = vunpack.c.l.b16 %v662
    %v852 = vunpack.c.h.b16 %v662
    %v853 = vunpack.c.l.b16 %v663
    %v854 = vunpack.c.h.b16 %v663
    %v855 = vunpack.c.l.b16 %v664
    %v856 = vunpack.c.h.b16 %v664
    %v857 = vunpack.c.l.b16 %v665
    %v858 = vunpack.c.h.b16 %v665
    %v859 = vunpack.c.l.b16 %v666
    %v860 = vunpack.c.h.b16 %v666
    %v861 = vunpack.c.l.b16 %v667
    %v862 = vunpack.c.h.b16 %v667
    %v863 = vunpack.c.l.b16 %v668
    %v864 = vunpack.c.h.b16 %v668
    %v865 = vunpack.c.l.b16 %v669
    %v866 = vunpack.c.h.b16 %v669
    %v867 = vunpack.c.l.b16 %v670
    %v868 = vunpack.c.h.b16 %v670
    %v869 = vunpack.c.l.b16 %v671
    %v870 = vunpack.c.h.b16 %v671
    %v871 = vunpack.c.l.b16 %v672
    %v872 = vunpack.c.h.b16 %v672
    %v873 = vunpack.c.l.b16 %v673
    %v874 = vunpack.c.h.b16 %v673
    %v875 = vunpack.c.l.b16 %v674
    %v876 = vunpack.c.h.b16 %v674
    %v877 = vunpack.c.l.b16 %v675
    %v878 = vunpack.c.h.b16 %v675
    %v879 = vunpack.c.l.b16 %v676
    %v880 = vunpack.c.h.b16 %v676
    %v881 = vunpack.c.l.b16 %v677
    %v882 = vunpack.c.h.b16 %v677
    %v883 = vunpack.c.l.b16 %v678
    %v884 = vunpack.c.h.b16 %v678
    %v885 = vunpack.c.l.b16 %v679
    %v886 = vunpack.c.h.b16 %v679
    %v887 = vunpack.c.l.b16 %v680
    %v888 = vunpack.c.h.b16 %v680
    %v889 = vunpack.c.l.b16 %v681
    %v890 = vunpack.c.h.b16 %v681
    %v891 = vunpack.c.l.b16 %v682
    %v892 = vunpack.c.h.b16 %v682
    %v893 = vunpack.c.l.b16 %v683
    %v894 = vunpack.c.h.b16 %v683
    %v895 = vunpack.c.l.b16 %v684
    %v896 = vunpack.c.h.b16 %v684
    %v897 = vunpack.c.l.b16 %v685
    %v898 = vunpack.c.h.b16 %v685
    %v899 = vunpack.c.l.b16 %v686
    %v900 = vunpack.c.h.b16 %v686
    %v901 = vunpack.c.l.b16 %v687
    %v902 = vunpack.c.h.b16 %v687
    %v903 = vunpack.c.l.b16 %v688
    %v904 = vunpack.c.h.b16 %v688
    %v905 = vpack.c.b16 %v781, %v777
    %v906 = vpack.c.b16 %v782, %v778
    %v907 = vpack.c.b16 %v783, %v779
    %v908 = vpack.c.b16 %v784, %v780
    %v909 = vpack.c.b16 %v789, %v785
    %v910 = vpack.c.b16 %v790, %v786
    %v911 = vpack.c.b16 %v791, %v787
    %v912 = vpack.c.b16 %v792, %v788
    %v913 = vpack.c.b16 %v797, %v793
    %v914 = vpack.c.b16 %v798, %v794
    %v915 = vpack.c.b16 %v799, %v795
    %v916 = vpack.c.b16 %v800, %v796
    %v917 = vpack.c.b16 %v805, %v801
    %v918 = vpack.c.b16 %v806, %v802
    %v919 = vpack.c.b16 %v807, %v803
    %v920 = vpack.c.b16 %v808, %v804
    %v921 = vpack.c.b16 %v813, %v809
    %v922 = vpack.c.b16 %v814, %v810
    %v923 = vpack.c.b16 %v815, %v811
    %v924 = vpack.c.b16 %v816, %v812
    %v925 = vpack.c.b16 %v821, %v817
    %v926 = vpack.c.b16 %v822, %v818
    %v927 = vpack.c.b16 %v823, %v819
    %v928 = vpack.c.b16 %v824, %v820
    %v929 = vpack.c.b16 %v829, %v825
    %v930 = vpack.c.b16 %v830, %v826
    %v931 = vpack.c.b16 %v831, %v827
    %v932 = vpack.c.b16 %v832, %v828
    %v933 = vpack.c.b16 %v837, %v833
    %v934 = vpack.c.b16 %v838, %v834
    %v935 = vpack.c.b16 %v839, %v835
    %v936 = vpack.c.b16 %v840, %v836
    %v937 = vpack.c.b16 %v845, %v841
    %v938 = vpack.c.b16 %v846, %v842
    %v939 = vpack.c.b16 %v847, %v843
    %v940 = vpack.c.b16 %v848, %v844
    %v941 = vpack.c.b16 %v853, %v849
    %v942 = vpack.c.b16 %v854, %v850
    %v943 = vpack.c.b16 %v855, %v851
    %v944 = vpack.c.b16 %v856, %v852
    %v945 = vpack.c.b16 %v861, %v857
    %v946 = vpack.c.b16 %v862, %v858
    %v947 = vpack.c.b16 %v863, %v859
    %v948 = vpack.c.b16 %v864, %v860
    %v949 = vpack.c.b16 %v869, %v865
    %v950 = vpack.c.b16 %v870, %v866
    %v951 = vpack.c.b16 %v871, %v867
    %v952 = vpack.c.b16 %v872, %v868
    %v953 = vpack.c.b16 %v877, %v873
    %v954 = vpack.c.b16 %v878, %v874
    %v955 = vpack.c.b16 %v879, %v875
    %v956 = vpack.c.b16 %v880, %v876
    %v957 = vpack.c.b16 %v885, %v881
    %v958 = vpack.c.b16 %v886, %v882
    %v959 = vpack.c.b16 %v887, %v883
    %v960 = vpack.c.b16 %v888, %v884
    %v961 = vpack.c.b16 %v893, %v889
    %v962 = vpack.c.b16 %v894, %v890
    %v963 = vpack.c.b16 %v895, %v891
    %v964 = vpack.c.b16 %v896, %v892
    %v965 = vpack.c.b16 %v901, %v897
    %v966 = vpack.c.b16 %v902, %v898
    %v967 = vpack.c.b16 %v903, %v899
    %v968 = vpack.c.b16 %v904, %v900
    %1033 = vmatprep.subr.bf16.mxu0 %v934
    %1034 = vmatpush1.bf16.msra.mxu0 %v933
    %1035 = vmatprep.subr.bf16.mxu0 %v930
    %1036 = vmatpush1.bf16.msra.mxu0 %v929
    %1037 = vmatprep.subr.bf16.mxu0 %v926
    %1038 = vmatpush1.bf16.msra.mxu0 %v925
    %1039 = vmatprep.subr.bf16.mxu0 %v922
    %1040 = vmatpush1.bf16.msra.mxu0 %v921
    %1041 = vmatprep.subr.bf16.mxu0 %v918
    %1042 = vmatpush1.bf16.msra.mxu0 %v917
    %1043 = vmatprep.subr.bf16.mxu0 %v914
    %1044 = vmatpush1.bf16.msra.mxu0 %v913
    %1045 = vmatprep.subr.bf16.mxu0 %v910
    %1046 = vmatpush1.bf16.msra.mxu0 %v909
    %1047 = vmatprep.subr.bf16.mxu0 %v906
    %1048 = vmatpush1.bf16.msra.mxu0 %v905
    %1049 = vmatprep.subr.bf16.mxu0 %v966
    %1050 = vmatpush2.bf16.msra.mxu0 %v965
    %1051 = vmatprep.subr.bf16.mxu0 %v962
    %1052 = vmatpush2.bf16.msra.mxu0 %v961
    %1053 = vmatprep.subr.bf16.mxu0 %v958
    %1054 = vmatpush2.bf16.msra.mxu0 %v957
    %1055 = vmatprep.subr.bf16.mxu0 %v954
    %1056 = vmatpush2.bf16.msra.mxu0 %v953
    %1057 = vmatprep.subr.bf16.mxu0 %v950
    %1058 = vmatpush2.bf16.msra.mxu0 %v949
    %1059 = vmatprep.subr.bf16.mxu0 %v946
    %1060 = vmatpush2.bf16.msra.mxu0 %v945
    %1061 = vmatprep.subr.bf16.mxu0 %v942
    %1062 = vmatpush2.bf16.msra.mxu0 %v941
    %1063 = vmatprep.subr.bf16.mxu0 %v938
    %1064 = vmatpush2.bf16.msra.mxu0 %v937
    %1065 = vmatprep.mubr.bf16.mxu0 %v690
    %1066 = vmatmul.mubr.bf16.gmra.mxu0 %v689
    %v1067 = vpop.f32.mrf.mxu0
    %v1068 = vadd.f32 %v696, %v1067
    %v1069 = vpop.f32.mrf.mxu0
    %v1070 = vadd.f32 %v700, %v1069
    %v1071 = vpop.f32.mrf.mxu0
    %v1072 = vpop.f32.mrf.mxu0
    %1073 = vdwg.mxu0
    %1074 = vmatprep.subr.bf16.mxu0 %v936
    %1075 = vmatpush1.bf16.msra.mxu0 %v935
    %1076 = vmatprep.subr.bf16.mxu0 %v932
    %1077 = vmatpush1.bf16.msra.mxu0 %v931
    %1078 = vmatprep.subr.bf16.mxu0 %v928
    %1079 = vmatpush1.bf16.msra.mxu0 %v927
    %1080 = vmatprep.subr.bf16.mxu0 %v924
    %1081 = vmatpush1.bf16.msra.mxu0 %v923
    %1082 = vmatprep.subr.bf16.mxu0 %v920
    %1083 = vmatpush1.bf16.msra.mxu0 %v919
    %1084 = vmatprep.subr.bf16.mxu0 %v916
    %1085 = vmatpush1.bf16.msra.mxu0 %v915
    %1086 = vmatprep.subr.bf16.mxu0 %v912
    %1087 = vmatpush1.bf16.msra.mxu0 %v911
    %1088 = vmatprep.subr.bf16.mxu0 %v908
    %1089 = vmatpush1.bf16.msra.mxu0 %v907
    %1090 = vmatprep.subr.bf16.mxu0 %v968
    %1091 = vmatpush2.bf16.msra.mxu0 %v967
    %1092 = vmatprep.subr.bf16.mxu0 %v964
    %1093 = vmatpush2.bf16.msra.mxu0 %v963
    %1094 = vmatprep.subr.bf16.mxu0 %v960
    %1095 = vmatpush2.bf16.msra.mxu0 %v959
    %1096 = vmatprep.subr.bf16.mxu0 %v956
    %1097 = vmatpush2.bf16.msra.mxu0 %v955
    %1098 = vmatprep.subr.bf16.mxu0 %v952
    %1099 = vmatpush2.bf16.msra.mxu0 %v951
    %1100 = vmatprep.subr.bf16.mxu0 %v948
    %1101 = vmatpush2.bf16.msra.mxu0 %v947
    %1102 = vmatprep.subr.bf16.mxu0 %v944
    %1103 = vmatpush2.bf16.msra.mxu0 %v943
    %1104 = vmatprep.subr.bf16.mxu0 %v940
    %1105 = vmatpush2.bf16.msra.mxu0 %v939
    %1106 = vmatprep.mubr.bf16.mxu0 %v690
    %1107 = vmatmul.mubr.bf16.gmra.mxu0 %v689
    %v1108 = vpop.f32.mrf.mxu0
    %v1109 = vadd.f32 %v704, %v1108
    %v1110 = vpop.f32.mrf.mxu0
    %v1111 = vadd.f32 %v708, %v1110
    %v1112 = vpop.f32.mrf.mxu0
    %v1113 = vpop.f32.mrf.mxu0
    %1114 = vdwg.mxu0
    %v1115 = vld [vmem:[#allocation18] sm:$0xf]
    %v1116 = vld [vmem:[#allocation19] sm:$0xf]
    %v1117 = vrot.slane %v1068, 4
    %v1118 = vadd.f32 %v1068, %v1117
    %v1119 = vrot.slane %v1118, 2
    %v1120 = vadd.f32 %v1118, %v1119
    %v1121 = vrot.slane %v1120, 1
    %v1122 = vadd.f32 %v1120, %v1121
    %v1123 = vrot.slane %v1070, 4
    %v1124 = vadd.f32 %v1070, %v1123
    %v1125 = vrot.slane %v1124, 2
    %v1126 = vadd.f32 %v1124, %v1125
    %v1127 = vrot.slane %v1126, 1
    %v1128 = vadd.f32 %v1126, %v1127
    %v1129 = vrot.slane %v1109, 4
    %v1130 = vadd.f32 %v1109, %v1129
    %v1131 = vrot.slane %v1130, 2
    %v1132 = vadd.f32 %v1130, %v1131
    %v1133 = vrot.slane %v1132, 1
    %v1134 = vadd.f32 %v1132, %v1133
    %v1135 = vrot.slane %v1111, 4
    %v1136 = vadd.f32 %v1111, %v1135
    %v1137 = vrot.slane %v1136, 2
    %v1138 = vadd.f32 %v1136, %v1137
    %v1139 = vrot.slane %v1138, 1
    %v1140 = vadd.f32 %v1138, %v1139
    %v1141 = vmul.f32 %v1122, 0.125
    %v1142 = vmul.f32 %v1128, 0.125
    %v1143 = vmul.f32 %v1134, 0.125
    %v1144 = vmul.f32 %v1140, 0.125
    %v1145 = vmul.f32 %v1068, %v1068
    %v1146 = vmul.f32 %v1070, %v1070
    %v1147 = vmul.f32 %v1109, %v1109
    %v1148 = vmul.f32 %v1111, %v1111
    %v1149 = vrot.slane %v1145, 4
    %v1150 = vadd.f32 %v1145, %v1149
    %v1151 = vrot.slane %v1150, 2
    %v1152 = vadd.f32 %v1150, %v1151
    %v1153 = vrot.slane %v1152, 1
    %v1154 = vadd.f32 %v1152, %v1153
    %v1155 = vrot.slane %v1146, 4
    %v1156 = vadd.f32 %v1146, %v1155
    %v1157 = vrot.slane %v1156, 2
    %v1158 = vadd.f32 %v1156, %v1157
    %v1159 = vrot.slane %v1158, 1
    %v1160 = vadd.f32 %v1158, %v1159
    %v1161 = vrot.slane %v1147, 4
    %v1162 = vadd.f32 %v1147, %v1161
    %v1163 = vrot.slane %v1162, 2
    %v1164 = vadd.f32 %v1162, %v1163
    %v1165 = vrot.slane %v1164, 1
    %v1166 = vadd.f32 %v1164, %v1165
    %v1167 = vrot.slane %v1148, 4
    %v1168 = vadd.f32 %v1148, %v1167
    %v1169 = vrot.slane %v1168, 2
    %v1170 = vadd.f32 %v1168, %v1169
    %v1171 = vrot.slane %v1170, 1
    %v1172 = vadd.f32 %v1170, %v1171
    %v1173 = vmul.f32 %v1154, 0.125
    %v1174 = vmul.f32 %v1160, 0.125
    %v1175 = vmul.f32 %v1166, 0.125
    %v1176 = vmul.f32 %v1172, 0.125
    %v1177 = vmul.f32 %v1141, %v1141
    %v1178 = vmul.f32 %v1142, %v1142
    %v1179 = vmul.f32 %v1143, %v1143
    %v1180 = vmul.f32 %v1144, %v1144
    %v1181 = vsub.f32 %v1173, %v1177
    %v1182 = vsub.f32 %v1174, %v1178
    %v1183 = vsub.f32 %v1175, %v1179
    %v1184 = vsub.f32 %v1176, %v1180
    %v1185 = vadd.f32 %v1181, 1e-05
    %v1186 = vadd.f32 %v1182, 1e-05
    %v1187 = vadd.f32 %v1183, 1e-05
    %v1188 = vadd.f32 %v1184, 1e-05
    %v1189 = vrsqrt.pop %v1185
    %v1190 = vrsqrt.pop %v1186
    %v1191 = vrsqrt.pop %v1187
    %v1192 = vrsqrt.pop %v1188
    %v1197 = vcombine.low %v1189, %v1190
    %v1198 = vcombine.low %v1191, %v1192
    %v1200 = vunpack.c.l.s4 1966171168
    %v1201 = vunpack.c.0.s8 %v1200
    %v1202 = vlaneseq
    %v1203 = vshrl.u32 %v1202, 7
    %v1204 = vsub.s32 %v1201, %v1203
    %v1205 = vrot.slane %v1197, %v1204
    %v1207 = vunpack.c.l.s4 1966171168
    %v1208 = vunpack.c.0.s8 %v1207
    %v1209 = vlaneseq
    %v1210 = vshrl.u32 %v1209, 7
    %v1211 = vsub.s32 %v1208, %v1210
    %v1212 = vrot.slane %v1198, %v1211
    %v1213 = vcombine.low %v1205, %v1212
    %v1215 = vunpack.c.l.s4 1966171168
    %v1216 = vunpack.c.0.s8 %v1215
    %v1217 = vlaneseq
    %v1218 = vshrl.u32 %v1217, 7
    %v1219 = vsub.s32 %v1216, %v1218
    %v1220 = vrot.slane %v1213, %v1219
    %v1222 = vmul.f32 %v1115, %v1220
    %v1224 = vlaneseq
    %v1225 = vshrl.u32 %v1224, 7
    %v1226 = vsub.s32 0, %v1225
    %v1227 = vrot.slane %v1222, %v1226
    %v1228 = vlaneseq
    %v1229 = vshrl.u32 %v1228, 7
    %v1230 = vsub.s32 1, %v1229
    %v1231 = vrot.slane %v1222, %v1230
    %v1232 = vlaneseq
    %v1233 = vshrl.u32 %v1232, 7
    %v1234 = vsub.s32 2, %v1233
    %v1235 = vrot.slane %v1222, %v1234
    %v1236 = vlaneseq
    %v1237 = vshrl.u32 %v1236, 7
    %v1238 = vsub.s32 3, %v1237
    %v1239 = vrot.slane %v1222, %v1238
    %v1244 = vmul.f32 %v1141, %v1227
    %v1245 = vmul.f32 %v1142, %v1231
    %v1246 = vmul.f32 %v1143, %v1235
    %v1247 = vmul.f32 %v1144, %v1239
    %v1252 = vcombine.low %v1244, %v1245
    %v1253 = vcombine.low %v1246, %v1247
    %v1255 = vunpack.c.l.s4 1966171168
    %v1256 = vunpack.c.0.s8 %v1255
    %v1257 = vlaneseq
    %v1258 = vshrl.u32 %v1257, 7
    %v1259 = vsub.s32 %v1256, %v1258
    %v1260 = vrot.slane %v1252, %v1259
    %v1262 = vunpack.c.l.s4 1966171168
    %v1263 = vunpack.c.0.s8 %v1262
    %v1264 = vlaneseq
    %v1265 = vshrl.u32 %v1264, 7
    %v1266 = vsub.s32 %v1263, %v1265
    %v1267 = vrot.slane %v1253, %v1266
    %v1268 = vcombine.low %v1260, %v1267
    %v1270 = vunpack.c.l.s4 1966171168
    %v1271 = vunpack.c.0.s8 %v1270
    %v1272 = vlaneseq
    %v1273 = vshrl.u32 %v1272, 7
    %v1274 = vsub.s32 %v1271, %v1273
    %v1275 = vrot.slane %v1268, %v1274
    %v1277 = vsub.f32 %v1116, %v1275
    %v1278 = vmul.f32 %v1068, %v1227
    %v1279 = vmul.f32 %v1070, %v1231
    %v1280 = vmul.f32 %v1109, %v1235
    %v1281 = vmul.f32 %v1111, %v1239
    %v1283 = vlaneseq
    %v1284 = vshrl.u32 %v1283, 7
    %v1285 = vsub.s32 0, %v1284
    %v1286 = vrot.slane %v1277, %v1285
    %v1287 = vlaneseq
    %v1288 = vshrl.u32 %v1287, 7
    %v1289 = vsub.s32 1, %v1288
    %v1290 = vrot.slane %v1277, %v1289
    %v1291 = vlaneseq
    %v1292 = vshrl.u32 %v1291, 7
    %v1293 = vsub.s32 2, %v1292
    %v1294 = vrot.slane %v1277, %v1293
    %v1295 = vlaneseq
    %v1296 = vshrl.u32 %v1295, 7
    %v1297 = vsub.s32 3, %v1296
    %v1298 = vrot.slane %v1277, %v1297
    %v1303 = vadd.f32 %v1278, %v1286
    %v1304 = vadd.f32 %v1279, %v1290
    %v1305 = vadd.f32 %v1280, %v1294
    %v1306 = vadd.f32 %v1281, %v1298
    %vm1307 = vcmp.gt.f32.partialorder %v1303, 0.0
    %vm1308 = vcmp.gt.f32.partialorder %v1304, 0.0
    %vm1309 = vcmp.gt.f32.partialorder %v1305, 0.0
    %vm1310 = vcmp.gt.f32.partialorder %v1306, 0.0
    %v1311 = vmul.f32 %v1303, 0.2
    %v1312 = vmul.f32 %v1304, 0.2
    %v1313 = vmul.f32 %v1305, 0.2
    %v1314 = vmul.f32 %v1306, 0.2
    %v1315 = vsel %vm1307, %v1303, %v1311
    %v1316 = vsel %vm1308, %v1304, %v1312
    %v1317 = vsel %vm1309, %v1305, %v1313
    %v1318 = vsel %vm1310, %v1306, %v1314
    // Predicated region
    $region130: #{generator_forward.1} parent=1 // pred_check
      %p1319 = pneg %p221
    $region131: #{generator_forward.1} parent=1 // pred_check_branch
      %1321 = sbr.rel (%p1319) target = $region133
    $region132: #{generator_forward.1} parent=1 // pred_region
      %s1322 = smul.u32 4, 64
      %s1323 = smul.u32 %s1322, 8
      %s1324 = sshll.u32 %s1323, 4
      %1325 = dma.done [#allocation4], %s1324
    $region133: #{generator_forward.1} parent=1 // pred_fallthru
      _
    %v1326 = vld [vmem:[#allocation2] sm:$0xff]
    %v1327 = vld [vmem:[#allocation2 + $0x8] sm:$0xff]
    %v1328 = vld [vmem:[#allocation2 + $0x10] sm:$0xff]
    %v1329 = vld [vmem:[#allocation2 + $0x18] sm:$0xff]
    %v1330 = vld [vmem:[#allocation2 + $0x20] sm:$0xff]
    %v1331 = vld [vmem:[#allocation2 + $0x28] sm:$0xff]
    %v1332 = vld [vmem:[#allocation2 + $0x30] sm:$0xff]
    %v1333 = vld [vmem:[#allocation2 + $0x38] sm:$0xff]
    %v1334 = vld [vmem:[#allocation2 + $0x40] sm:$0xff]
    %v1335 = vld [vmem:[#allocation2 + $0x48] sm:$0xff]
    %v1336 = vld [vmem:[#allocation2 + $0x50] sm:$0xff]
    %v1337 = vld [vmem:[#allocation2 + $0x58] sm:$0xff]
    %v1338 = vld [vmem:[#allocation2 + $0x60] sm:$0xff]
    %v1339 = vld [vmem:[#allocation2 + $0x68] sm:$0xff]
    %v1340 = vld [vmem:[#allocation2 + $0x70] sm:$0xff]
    %v1341 = vld [vmem:[#allocation2 + $0x78] sm:$0xff]
    %v1342 = vld [vmem:[#allocation2 + $0x80] sm:$0xff]
    %v1343 = vld [vmem:[#allocation2 + $0x88] sm:$0xff]
    %v1344 = vld [vmem:[#allocation2 + $0x90] sm:$0xff]
    %v1345 = vld [vmem:[#allocation2 + $0x98] sm:$0xff]
    %v1346 = vld [vmem:[#allocation2 + $0xa0] sm:$0xff]
    %v1347 = vld [vmem:[#allocation2 + $0xa8] sm:$0xff]
    %v1348 = vld [vmem:[#allocation2 + $0xb0] sm:$0xff]
    %v1349 = vld [vmem:[#allocation2 + $0xb8] sm:$0xff]
    %v1350 = vld [vmem:[#allocation2 + $0xc0] sm:$0xff]
    %v1351 = vld [vmem:[#allocation2 + $0xc8] sm:$0xff]
    %v1352 = vld [vmem:[#allocation2 + $0xd0] sm:$0xff]
    %v1353 = vld [vmem:[#allocation2 + $0xd8] sm:$0xff]
    %v1354 = vld [vmem:[#allocation2 + $0xe0] sm:$0xff]
    %v1355 = vld [vmem:[#allocation2 + $0xe8] sm:$0xff]
    %v1356 = vld [vmem:[#allocation2 + $0xf0] sm:$0xff]
    %v1357 = vld [vmem:[#allocation2 + $0xf8] sm:$0xff]
    %v1358 = vld [vmem:[#allocation2 + $0x100] sm:$0xff]
    %v1359 = vld [vmem:[#allocation2 + $0x108] sm:$0xff]
    %v1360 = vld [vmem:[#allocation2 + $0x110] sm:$0xff]
    %v1361 = vld [vmem:[#allocation2 + $0x118] sm:$0xff]
    %v1362 = vld [vmem:[#allocation2 + $0x120] sm:$0xff]
    %v1363 = vld [vmem:[#allocation2 + $0x128] sm:$0xff]
    %v1364 = vld [vmem:[#allocation2 + $0x130] sm:$0xff]
    %v1365 = vld [vmem:[#allocation2 + $0x138] sm:$0xff]
    %v1366 = vld [vmem:[#allocation2 + $0x140] sm:$0xff]
    %v1367 = vld [vmem:[#allocation2 + $0x148] sm:$0xff]
    %v1368 = vld [vmem:[#allocation2 + $0x150] sm:$0xff]
    %v1369 = vld [vmem:[#allocation2 + $0x158] sm:$0xff]
    %v1370 = vld [vmem:[#allocation2 + $0x160] sm:$0xff]
    %v1371 = vld [vmem:[#allocation2 + $0x168] sm:$0xff]
    %v1372 = vld [vmem:[#allocation2 + $0x170] sm:$0xff]
    %v1373 = vld [vmem:[#allocation2 + $0x178] sm:$0xff]
    %v1374 = vld [vmem:[#allocation2 + $0x180] sm:$0xff]
    %v1375 = vld [vmem:[#allocation2 + $0x188] sm:$0xff]
    %v1376 = vld [vmem:[#allocation2 + $0x190] sm:$0xff]
    %v1377 = vld [vmem:[#allocation2 + $0x198] sm:$0xff]
    %v1378 = vld [vmem:[#allocation2 + $0x1a0] sm:$0xff]
    %v1379 = vld [vmem:[#allocation2 + $0x1a8] sm:$0xff]
    %v1380 = vld [vmem:[#allocation2 + $0x1b0] sm:$0xff]
    %v1381 = vld [vmem:[#allocation2 + $0x1b8] sm:$0xff]
    %v1382 = vld [vmem:[#allocation2 + $0x1c0] sm:$0xff]
    %v1383 = vld [vmem:[#allocation2 + $0x1c8] sm:$0xff]
    %v1384 = vld [vmem:[#allocation2 + $0x1d0] sm:$0xff]
    %v1385 = vld [vmem:[#allocation2 + $0x1d8] sm:$0xff]
    %v1386 = vld [vmem:[#allocation2 + $0x1e0] sm:$0xff]
    %v1387 = vld [vmem:[#allocation2 + $0x1e8] sm:$0xff]
    %v1388 = vld [vmem:[#allocation2 + $0x1f0] sm:$0xff]
    %v1389 = vld [vmem:[#allocation2 + $0x1f8] sm:$0xff]
    %v1390 = vld [vmem:[#allocation2 + $0x200] sm:$0xff]
    %v1391 = vld [vmem:[#allocation2 + $0x208] sm:$0xff]
    %v1392 = vld [vmem:[#allocation2 + $0x210] sm:$0xff]
    %v1393 = vld [vmem:[#allocation2 + $0x218] sm:$0xff]
    %v1394 = vld [vmem:[#allocation2 + $0x220] sm:$0xff]
    %v1395 = vld [vmem:[#allocation2 + $0x228] sm:$0xff]
    %v1396 = vld [vmem:[#allocation2 + $0x230] sm:$0xff]
    %v1397 = vld [vmem:[#allocation2 + $0x238] sm:$0xff]
    %v1398 = vld [vmem:[#allocation2 + $0x240] sm:$0xff]
    %v1399 = vld [vmem:[#allocation2 + $0x248] sm:$0xff]
    %v1400 = vld [vmem:[#allocation2 + $0x250] sm:$0xff]
    %v1401 = vld [vmem:[#allocation2 + $0x258] sm:$0xff]
    %v1402 = vld [vmem:[#allocation2 + $0x260] sm:$0xff]
    %v1403 = vld [vmem:[#allocation2 + $0x268] sm:$0xff]
    %v1404 = vld [vmem:[#allocation2 + $0x270] sm:$0xff]
    %v1405 = vld [vmem:[#allocation2 + $0x278] sm:$0xff]
    %v1406 = vld [vmem:[#allocation2 + $0x280] sm:$0xff]
    %v1407 = vld [vmem:[#allocation2 + $0x288] sm:$0xff]
    %v1408 = vld [vmem:[#allocation2 + $0x290] sm:$0xff]
    %v1409 = vld [vmem:[#allocation2 + $0x298] sm:$0xff]
    %v1410 = vld [vmem:[#allocation2 + $0x2a0] sm:$0xff]
    %v1411 = vld [vmem:[#allocation2 + $0x2a8] sm:$0xff]
    %v1412 = vld [vmem:[#allocation2 + $0x2b0] sm:$0xff]
    %v1413 = vld [vmem:[#allocation2 + $0x2b8] sm:$0xff]
    %v1414 = vld [vmem:[#allocation2 + $0x2c0] sm:$0xff]
    %v1415 = vld [vmem:[#allocation2 + $0x2c8] sm:$0xff]
    %v1416 = vld [vmem:[#allocation2 + $0x2d0] sm:$0xff]
    %v1417 = vld [vmem:[#allocation2 + $0x2d8] sm:$0xff]
    %v1418 = vld [vmem:[#allocation2 + $0x2e0] sm:$0xff]
    %v1419 = vld [vmem:[#allocation2 + $0x2e8] sm:$0xff]
    %v1420 = vld [vmem:[#allocation2 + $0x2f0] sm:$0xff]
    %v1421 = vld [vmem:[#allocation2 + $0x2f8] sm:$0xff]
    %v1422 = vld [vmem:[#allocation2 + $0x300] sm:$0xff]
    %v1423 = vld [vmem:[#allocation2 + $0x308] sm:$0xff]
    %v1424 = vld [vmem:[#allocation2 + $0x310] sm:$0xff]
    %v1425 = vld [vmem:[#allocation2 + $0x318] sm:$0xff]
    %v1426 = vld [vmem:[#allocation2 + $0x320] sm:$0xff]
    %v1427 = vld [vmem:[#allocation2 + $0x328] sm:$0xff]
    %v1428 = vld [vmem:[#allocation2 + $0x330] sm:$0xff]
    %v1429 = vld [vmem:[#allocation2 + $0x338] sm:$0xff]
    %v1430 = vld [vmem:[#allocation2 + $0x340] sm:$0xff]
    %v1431 = vld [vmem:[#allocation2 + $0x348] sm:$0xff]
    %v1432 = vld [vmem:[#allocation2 + $0x350] sm:$0xff]
    %v1433 = vld [vmem:[#allocation2 + $0x358] sm:$0xff]
    %v1434 = vld [vmem:[#allocation2 + $0x360] sm:$0xff]
    %v1435 = vld [vmem:[#allocation2 + $0x368] sm:$0xff]
    %v1436 = vld [vmem:[#allocation2 + $0x370] sm:$0xff]
    %v1437 = vld [vmem:[#allocation2 + $0x378] sm:$0xff]
    %v1438 = vld [vmem:[#allocation2 + $0x380] sm:$0xff]
    %v1439 = vld [vmem:[#allocation2 + $0x388] sm:$0xff]
    %v1440 = vld [vmem:[#allocation2 + $0x390] sm:$0xff]
    %v1441 = vld [vmem:[#allocation2 + $0x398] sm:$0xff]
    %v1442 = vld [vmem:[#allocation2 + $0x3a0] sm:$0xff]
    %v1443 = vld [vmem:[#allocation2 + $0x3a8] sm:$0xff]
    %v1444 = vld [vmem:[#allocation2 + $0x3b0] sm:$0xff]
    %v1445 = vld [vmem:[#allocation2 + $0x3b8] sm:$0xff]
    %v1446 = vld [vmem:[#allocation2 + $0x3c0] sm:$0xff]
    %v1447 = vld [vmem:[#allocation2 + $0x3c8] sm:$0xff]
    %v1448 = vld [vmem:[#allocation2 + $0x3d0] sm:$0xff]
    %v1449 = vld [vmem:[#allocation2 + $0x3d8] sm:$0xff]
    %v1450 = vld [vmem:[#allocation2 + $0x3e0] sm:$0xff]
    %v1451 = vld [vmem:[#allocation2 + $0x3e8] sm:$0xff]
    %v1452 = vld [vmem:[#allocation2 + $0x3f0] sm:$0xff]
    %v1453 = vld [vmem:[#allocation2 + $0x3f8] sm:$0xff]
    %v1454 = vld [vmem:[#allocation2 + $0x400] sm:$0xff]
    %v1455 = vld [vmem:[#allocation2 + $0x408] sm:$0xff]
    %v1456 = vld [vmem:[#allocation2 + $0x410] sm:$0xff]
    %v1457 = vld [vmem:[#allocation2 + $0x418] sm:$0xff]
    %v1458 = vld [vmem:[#allocation2 + $0x420] sm:$0xff]
    %v1459 = vld [vmem:[#allocation2 + $0x428] sm:$0xff]
    %v1460 = vld [vmem:[#allocation2 + $0x430] sm:$0xff]
    %v1461 = vld [vmem:[#allocation2 + $0x438] sm:$0xff]
    %v1462 = vld [vmem:[#allocation2 + $0x440] sm:$0xff]
    %v1463 = vld [vmem:[#allocation2 + $0x448] sm:$0xff]
    %v1464 = vld [vmem:[#allocation2 + $0x450] sm:$0xff]
    %v1465 = vld [vmem:[#allocation2 + $0x458] sm:$0xff]
    %v1466 = vld [vmem:[#allocation2 + $0x460] sm:$0xff]
    %v1467 = vld [vmem:[#allocation2 + $0x468] sm:$0xff]
    %v1468 = vld [vmem:[#allocation2 + $0x470] sm:$0xff]
    %v1469 = vld [vmem:[#allocation2 + $0x478] sm:$0xff]
    %v1470 = vld [vmem:[#allocation2 + $0x480] sm:$0xff]
    %v1471 = vld [vmem:[#allocation2 + $0x488] sm:$0xff]
    %v1472 = vld [vmem:[#allocation2 + $0x490] sm:$0xff]
    %v1473 = vld [vmem:[#allocation2 + $0x498] sm:$0xff]
    %v1474 = vld [vmem:[#allocation2 + $0x4a0] sm:$0xff]
    %v1475 = vld [vmem:[#allocation2 + $0x4a8] sm:$0xff]
    %v1476 = vld [vmem:[#allocation2 + $0x4b0] sm:$0xff]
    %v1477 = vld [vmem:[#allocation2 + $0x4b8] sm:$0xff]
    %v1478 = vld [vmem:[#allocation2 + $0x4c0] sm:$0xff]
    %v1479 = vld [vmem:[#allocation2 + $0x4c8] sm:$0xff]
    %v1480 = vld [vmem:[#allocation2 + $0x4d0] sm:$0xff]
    %v1481 = vld [vmem:[#allocation2 + $0x4d8] sm:$0xff]
    %v1482 = vld [vmem:[#allocation2 + $0x4e0] sm:$0xff]
    %v1483 = vld [vmem:[#allocation2 + $0x4e8] sm:$0xff]
    %v1484 = vld [vmem:[#allocation2 + $0x4f0] sm:$0xff]
    %v1485 = vld [vmem:[#allocation2 + $0x4f8] sm:$0xff]
    %v1486 = vld [vmem:[#allocation2 + $0x500] sm:$0xff]
    %v1487 = vld [vmem:[#allocation2 + $0x508] sm:$0xff]
    %v1488 = vld [vmem:[#allocation2 + $0x510] sm:$0xff]
    %v1489 = vld [vmem:[#allocation2 + $0x518] sm:$0xff]
    %v1490 = vld [vmem:[#allocation2 + $0x520] sm:$0xff]
    %v1491 = vld [vmem:[#allocation2 + $0x528] sm:$0xff]
    %v1492 = vld [vmem:[#allocation2 + $0x530] sm:$0xff]
    %v1493 = vld [vmem:[#allocation2 + $0x538] sm:$0xff]
    %v1494 = vld [vmem:[#allocation2 + $0x540] sm:$0xff]
    %v1495 = vld [vmem:[#allocation2 + $0x548] sm:$0xff]
    %v1496 = vld [vmem:[#allocation2 + $0x550] sm:$0xff]
    %v1497 = vld [vmem:[#allocation2 + $0x558] sm:$0xff]
    %v1498 = vld [vmem:[#allocation2 + $0x560] sm:$0xff]
    %v1499 = vld [vmem:[#allocation2 + $0x568] sm:$0xff]
    %v1500 = vld [vmem:[#allocation2 + $0x570] sm:$0xff]
    %v1501 = vld [vmem:[#allocation2 + $0x578] sm:$0xff]
    %v1502 = vld [vmem:[#allocation2 + $0x580] sm:$0xff]
    %v1503 = vld [vmem:[#allocation2 + $0x588] sm:$0xff]
    %v1504 = vld [vmem:[#allocation2 + $0x590] sm:$0xff]
    %v1505 = vld [vmem:[#allocation2 + $0x598] sm:$0xff]
    %v1506 = vld [vmem:[#allocation2 + $0x5a0] sm:$0xff]
    %v1507 = vld [vmem:[#allocation2 + $0x5a8] sm:$0xff]
    %v1508 = vld [vmem:[#allocation2 + $0x5b0] sm:$0xff]
    %v1509 = vld [vmem:[#allocation2 + $0x5b8] sm:$0xff]
    %v1510 = vld [vmem:[#allocation2 + $0x5c0] sm:$0xff]
    %v1511 = vld [vmem:[#allocation2 + $0x5c8] sm:$0xff]
    %v1512 = vld [vmem:[#allocation2 + $0x5d0] sm:$0xff]
    %v1513 = vld [vmem:[#allocation2 + $0x5d8] sm:$0xff]
    %v1514 = vld [vmem:[#allocation2 + $0x5e0] sm:$0xff]
    %v1515 = vld [vmem:[#allocation2 + $0x5e8] sm:$0xff]
    %v1516 = vld [vmem:[#allocation2 + $0x5f0] sm:$0xff]
    %v1517 = vld [vmem:[#allocation2 + $0x5f8] sm:$0xff]
    %v1518 = vld [vmem:[#allocation2 + $0x600] sm:$0xff]
    %v1519 = vld [vmem:[#allocation2 + $0x608] sm:$0xff]
    %v1520 = vld [vmem:[#allocation2 + $0x610] sm:$0xff]
    %v1521 = vld [vmem:[#allocation2 + $0x618] sm:$0xff]
    %v1522 = vld [vmem:[#allocation2 + $0x620] sm:$0xff]
    %v1523 = vld [vmem:[#allocation2 + $0x628] sm:$0xff]
    %v1524 = vld [vmem:[#allocation2 + $0x630] sm:$0xff]
    %v1525 = vld [vmem:[#allocation2 + $0x638] sm:$0xff]
    %v1526 = vld [vmem:[#allocation2 + $0x640] sm:$0xff]
    %v1527 = vld [vmem:[#allocation2 + $0x648] sm:$0xff]
    %v1528 = vld [vmem:[#allocation2 + $0x650] sm:$0xff]
    %v1529 = vld [vmem:[#allocation2 + $0x658] sm:$0xff]
    %v1530 = vld [vmem:[#allocation2 + $0x660] sm:$0xff]
    %v1531 = vld [vmem:[#allocation2 + $0x668] sm:$0xff]
    %v1532 = vld [vmem:[#allocation2 + $0x670] sm:$0xff]
    %v1533 = vld [vmem:[#allocation2 + $0x678] sm:$0xff]
    %v1534 = vld [vmem:[#allocation2 + $0x680] sm:$0xff]
    %v1535 = vld [vmem:[#allocation2 + $0x688] sm:$0xff]
    %v1536 = vld [vmem:[#allocation2 + $0x690] sm:$0xff]
    %v1537 = vld [vmem:[#allocation2 + $0x698] sm:$0xff]
    %v1538 = vld [vmem:[#allocation2 + $0x6a0] sm:$0xff]
    %v1539 = vld [vmem:[#allocation2 + $0x6a8] sm:$0xff]
    %v1540 = vld [vmem:[#allocation2 + $0x6b0] sm:$0xff]
    %v1541 = vld [vmem:[#allocation2 + $0x6b8] sm:$0xff]
    %v1542 = vld [vmem:[#allocation2 + $0x6c0] sm:$0xff]
    %v1543 = vld [vmem:[#allocation2 + $0x6c8] sm:$0xff]
    %v1544 = vld [vmem:[#allocation2 + $0x6d0] sm:$0xff]
    %v1545 = vld [vmem:[#allocation2 + $0x6d8] sm:$0xff]
    %v1546 = vld [vmem:[#allocation2 + $0x6e0] sm:$0xff]
    %v1547 = vld [vmem:[#allocation2 + $0x6e8] sm:$0xff]
    %v1548 = vld [vmem:[#allocation2 + $0x6f0] sm:$0xff]
    %v1549 = vld [vmem:[#allocation2 + $0x6f8] sm:$0xff]
    %v1550 = vld [vmem:[#allocation2 + $0x700] sm:$0xff]
    %v1551 = vld [vmem:[#allocation2 + $0x708] sm:$0xff]
    %v1552 = vld [vmem:[#allocation2 + $0x710] sm:$0xff]
    %v1553 = vld [vmem:[#allocation2 + $0x718] sm:$0xff]
    %v1554 = vld [vmem:[#allocation2 + $0x720] sm:$0xff]
    %v1555 = vld [vmem:[#allocation2 + $0x728] sm:$0xff]
    %v1556 = vld [vmem:[#allocation2 + $0x730] sm:$0xff]
    %v1557 = vld [vmem:[#allocation2 + $0x738] sm:$0xff]
    %v1558 = vld [vmem:[#allocation2 + $0x740] sm:$0xff]
    %v1559 = vld [vmem:[#allocation2 + $0x748] sm:$0xff]
    %v1560 = vld [vmem:[#allocation2 + $0x750] sm:$0xff]
    %v1561 = vld [vmem:[#allocation2 + $0x758] sm:$0xff]
    %v1562 = vld [vmem:[#allocation2 + $0x760] sm:$0xff]
    %v1563 = vld [vmem:[#allocation2 + $0x768] sm:$0xff]
    %v1564 = vld [vmem:[#allocation2 + $0x770] sm:$0xff]
    %v1565 = vld [vmem:[#allocation2 + $0x778] sm:$0xff]
    %v1566 = vld [vmem:[#allocation2 + $0x780] sm:$0xff]
    %v1567 = vld [vmem:[#allocation2 + $0x788] sm:$0xff]
    %v1568 = vld [vmem:[#allocation2 + $0x790] sm:$0xff]
    %v1569 = vld [vmem:[#allocation2 + $0x798] sm:$0xff]
    %v1570 = vld [vmem:[#allocation2 + $0x7a0] sm:$0xff]
    %v1571 = vld [vmem:[#allocation2 + $0x7a8] sm:$0xff]
    %v1572 = vld [vmem:[#allocation2 + $0x7b0] sm:$0xff]
    %v1573 = vld [vmem:[#allocation2 + $0x7b8] sm:$0xff]
    %v1574 = vld [vmem:[#allocation2 + $0x7c0] sm:$0xff]
    %v1575 = vld [vmem:[#allocation2 + $0x7c8] sm:$0xff]
    %v1576 = vld [vmem:[#allocation2 + $0x7d0] sm:$0xff]
    %v1577 = vld [vmem:[#allocation2 + $0x7d8] sm:$0xff]
    %v1578 = vld [vmem:[#allocation2 + $0x7e0] sm:$0xff]
    %v1579 = vld [vmem:[#allocation2 + $0x7e8] sm:$0xff]
    %v1580 = vld [vmem:[#allocation2 + $0x7f0] sm:$0xff]
    %v1581 = vld [vmem:[#allocation2 + $0x7f8] sm:$0xff]
    %v1582 = vpack.c.bf16 %v1315, %v1315
    %v1583 = vpack.c.bf16 %v1316, %v1316
    %v1584 = vpack.c.bf16 %v1317, %v1317
    %v1585 = vpack.c.bf16 %v1318, %v1318
    %v1586 = vld [vmem:[#allocation21] sm:$0xff]
    %v1588 = vlaneseq
    %v1589 = vshrl.u32 %v1588, 7
    %v1590 = vsub.s32 0, %v1589
    %v1591 = vrot.slane %v1586, %v1590
    %v1592 = vlaneseq
    %v1593 = vshrl.u32 %v1592, 7
    %v1594 = vsub.s32 1, %v1593
    %v1595 = vrot.slane %v1586, %v1594
    %v1596 = vlaneseq
    %v1597 = vshrl.u32 %v1596, 7
    %v1598 = vsub.s32 2, %v1597
    %v1599 = vrot.slane %v1586, %v1598
    %v1600 = vlaneseq
    %v1601 = vshrl.u32 %v1600, 7
    %v1602 = vsub.s32 3, %v1601
    %v1603 = vrot.slane %v1586, %v1602
    %v1604 = vlaneseq
    %v1605 = vshrl.u32 %v1604, 7
    %v1606 = vsub.s32 4, %v1605
    %v1607 = vrot.slane %v1586, %v1606
    %v1608 = vlaneseq
    %v1609 = vshrl.u32 %v1608, 7
    %v1610 = vsub.s32 5, %v1609
    %v1611 = vrot.slane %v1586, %v1610
    %v1612 = vlaneseq
    %v1613 = vshrl.u32 %v1612, 7
    %v1614 = vsub.s32 6, %v1613
    %v1615 = vrot.slane %v1586, %v1614
    %v1616 = vlaneseq
    %v1617 = vshrl.u32 %v1616, 7
    %v1618 = vsub.s32 7, %v1617
    %v1619 = vrot.slane %v1586, %v1618
    %v1884 = vunpack.c.l.b16 %v1326
    %v1885 = vunpack.c.h.b16 %v1326
    %v1886 = vunpack.c.l.b16 %v1327
    %v1887 = vunpack.c.h.b16 %v1327
    %v1888 = vunpack.c.l.b16 %v1328
    %v1889 = vunpack.c.h.b16 %v1328
    %v1890 = vunpack.c.l.b16 %v1329
    %v1891 = vunpack.c.h.b16 %v1329
    %v1892 = vunpack.c.l.b16 %v1330
    %v1893 = vunpack.c.h.b16 %v1330
    %v1894 = vunpack.c.l.b16 %v1331
    %v1895 = vunpack.c.h.b16 %v1331
    %v1896 = vunpack.c.l.b16 %v1332
    %v1897 = vunpack.c.h.b16 %v1332
    %v1898 = vunpack.c.l.b16 %v1333
    %v1899 = vunpack.c.h.b16 %v1333
    %v1900 = vunpack.c.l.b16 %v1334
    %v1901 = vunpack.c.h.b16 %v1334
    %v1902 = vunpack.c.l.b16 %v1335
    %v1903 = vunpack.c.h.b16 %v1335
    %v1904 = vunpack.c.l.b16 %v1336
    %v1905 = vunpack.c.h.b16 %v1336
    %v1906 = vunpack.c.l.b16 %v1337
    %v1907 = vunpack.c.h.b16 %v1337
    %v1908 = vunpack.c.l.b16 %v1338
    %v1909 = vunpack.c.h.b16 %v1338
    %v1910 = vunpack.c.l.b16 %v1339
    %v1911 = vunpack.c.h.b16 %v1339
    %v1912 = vunpack.c.l.b16 %v1340
    %v1913 = vunpack.c.h.b16 %v1340
    %v1914 = vunpack.c.l.b16 %v1341
    %v1915 = vunpack.c.h.b16 %v1341
    %v1916 = vunpack.c.l.b16 %v1342
    %v1917 = vunpack.c.h.b16 %v1342
    %v1918 = vunpack.c.l.b16 %v1343
    %v1919 = vunpack.c.h.b16 %v1343
    %v1920 = vunpack.c.l.b16 %v1344
    %v1921 = vunpack.c.h.b16 %v1344
    %v1922 = vunpack.c.l.b16 %v1345
    %v1923 = vunpack.c.h.b16 %v1345
    %v1924 = vunpack.c.l.b16 %v1346
    %v1925 = vunpack.c.h.b16 %v1346
    %v1926 = vunpack.c.l.b16 %v1347
    %v1927 = vunpack.c.h.b16 %v1347
    %v1928 = vunpack.c.l.b16 %v1348
    %v1929 = vunpack.c.h.b16 %v1348
    %v1930 = vunpack.c.l.b16 %v1349
    %v1931 = vunpack.c.h.b16 %v1349
    %v1932 = vunpack.c.l.b16 %v1350
    %v1933 = vunpack.c.h.b16 %v1350
    %v1934 = vunpack.c.l.b16 %v1351
    %v1935 = vunpack.c.h.b16 %v1351
    %v1936 = vunpack.c.l.b16 %v1352
    %v1937 = vunpack.c.h.b16 %v1352
    %v1938 = vunpack.c.l.b16 %v1353
    %v1939 = vunpack.c.h.b16 %v1353
    %v1940 = vunpack.c.l.b16 %v1354
    %v1941 = vunpack.c.h.b16 %v1354
    %v1942 = vunpack.c.l.b16 %v1355
    %v1943 = vunpack.c.h.b16 %v1355
    %v1944 = vunpack.c.l.b16 %v1356
    %v1945 = vunpack.c.h.b16 %v1356
    %v1946 = vunpack.c.l.b16 %v1357
    %v1947 = vunpack.c.h.b16 %v1357
    %v1948 = vunpack.c.l.b16 %v1358
    %v1949 = vunpack.c.h.b16 %v1358
    %v1950 = vunpack.c.l.b16 %v1359
    %v1951 = vunpack.c.h.b16 %v1359
    %v1952 = vunpack.c.l.b16 %v1360
    %v1953 = vunpack.c.h.b16 %v1360
    %v1954 = vunpack.c.l.b16 %v1361
    %v1955 = vunpack.c.h.b16 %v1361
    %v1956 = vunpack.c.l.b16 %v1362
    %v1957 = vunpack.c.h.b16 %v1362
    %v1958 = vunpack.c.l.b16 %v1363
    %v1959 = vunpack.c.h.b16 %v1363
    %v1960 = vunpack.c.l.b16 %v1364
    %v1961 = vunpack.c.h.b16 %v1364
    %v1962 = vunpack.c.l.b16 %v1365
    %v1963 = vunpack.c.h.b16 %v1365
    %v1964 = vunpack.c.l.b16 %v1366
    %v1965 = vunpack.c.h.b16 %v1366
    %v1966 = vunpack.c.l.b16 %v1367
    %v1967 = vunpack.c.h.b16 %v1367
    %v1968 = vunpack.c.l.b16 %v1368
    %v1969 = vunpack.c.h.b16 %v1368
    %v1970 = vunpack.c.l.b16 %v1369
    %v1971 = vunpack.c.h.b16 %v1369
    %v1972 = vunpack.c.l.b16 %v1370
    %v1973 = vunpack.c.h.b16 %v1370
    %v1974 = vunpack.c.l.b16 %v1371
    %v1975 = vunpack.c.h.b16 %v1371
    %v1976 = vunpack.c.l.b16 %v1372
    %v1977 = vunpack.c.h.b16 %v1372
    %v1978 = vunpack.c.l.b16 %v1373
    %v1979 = vunpack.c.h.b16 %v1373
    %v1980 = vunpack.c.l.b16 %v1374
    %v1981 = vunpack.c.h.b16 %v1374
    %v1982 = vunpack.c.l.b16 %v1375
    %v1983 = vunpack.c.h.b16 %v1375
    %v1984 = vunpack.c.l.b16 %v1376
    %v1985 = vunpack.c.h.b16 %v1376
    %v1986 = vunpack.c.l.b16 %v1377
    %v1987 = vunpack.c.h.b16 %v1377
    %v1988 = vunpack.c.l.b16 %v1378
    %v1989 = vunpack.c.h.b16 %v1378
    %v1990 = vunpack.c.l.b16 %v1379
    %v1991 = vunpack.c.h.b16 %v1379
    %v1992 = vunpack.c.l.b16 %v1380
    %v1993 = vunpack.c.h.b16 %v1380
    %v1994 = vunpack.c.l.b16 %v1381
    %v1995 = vunpack.c.h.b16 %v1381
    %v1996 = vunpack.c.l.b16 %v1382
    %v1997 = vunpack.c.h.b16 %v1382
    %v1998 = vunpack.c.l.b16 %v1383
    %v1999 = vunpack.c.h.b16 %v1383
    %v2000 = vunpack.c.l.b16 %v1384
    %v2001 = vunpack.c.h.b16 %v1384
    %v2002 = vunpack.c.l.b16 %v1385
    %v2003 = vunpack.c.h.b16 %v1385
    %v2004 = vunpack.c.l.b16 %v1386
    %v2005 = vunpack.c.h.b16 %v1386
    %v2006 = vunpack.c.l.b16 %v1387
    %v2007 = vunpack.c.h.b16 %v1387
    %v2008 = vunpack.c.l.b16 %v1388
    %v2009 = vunpack.c.h.b16 %v1388
    %v2010 = vunpack.c.l.b16 %v1389
    %v2011 = vunpack.c.h.b16 %v1389
    %v2012 = vunpack.c.l.b16 %v1390
    %v2013 = vunpack.c.h.b16 %v1390
    %v2014 = vunpack.c.l.b16 %v1391
    %v2015 = vunpack.c.h.b16 %v1391
    %v2016 = vunpack.c.l.b16 %v1392
    %v2017 = vunpack.c.h.b16 %v1392
    %v2018 = vunpack.c.l.b16 %v1393
    %v2019 = vunpack.c.h.b16 %v1393
    %v2020 = vunpack.c.l.b16 %v1394
    %v2021 = vunpack.c.h.b16 %v1394
    %v2022 = vunpack.c.l.b16 %v1395
    %v2023 = vunpack.c.h.b16 %v1395
    %v2024 = vunpack.c.l.b16 %v1396
    %v2025 = vunpack.c.h.b16 %v1396
    %v2026 = vunpack.c.l.b16 %v1397
    %v2027 = vunpack.c.h.b16 %v1397
    %v2028 = vunpack.c.l.b16 %v1398
    %v2029 = vunpack.c.h.b16 %v1398
    %v2030 = vunpack.c.l.b16 %v1399
    %v2031 = vunpack.c.h.b16 %v1399
    %v2032 = vunpack.c.l.b16 %v1400
    %v2033 = vunpack.c.h.b16 %v1400
    %v2034 = vunpack.c.l.b16 %v1401
    %v2035 = vunpack.c.h.b16 %v1401
    %v2036 = vunpack.c.l.b16 %v1402
    %v2037 = vunpack.c.h.b16 %v1402
    %v2038 = vunpack.c.l.b16 %v1403
    %v2039 = vunpack.c.h.b16 %v1403
    %v2040 = vunpack.c.l.b16 %v1404
    %v2041 = vunpack.c.h.b16 %v1404
    %v2042 = vunpack.c.l.b16 %v1405
    %v2043 = vunpack.c.h.b16 %v1405
    %v2044 = vunpack.c.l.b16 %v1406
    %v2045 = vunpack.c.h.b16 %v1406
    %v2046 = vunpack.c.l.b16 %v1407
    %v2047 = vunpack.c.h.b16 %v1407
    %v2048 = vunpack.c.l.b16 %v1408
    %v2049 = vunpack.c.h.b16 %v1408
    %v2050 = vunpack.c.l.b16 %v1409
    %v2051 = vunpack.c.h.b16 %v1409
    %v2052 = vunpack.c.l.b16 %v1410
    %v2053 = vunpack.c.h.b16 %v1410
    %v2054 = vunpack.c.l.b16 %v1411
    %v2055 = vunpack.c.h.b16 %v1411
    %v2056 = vunpack.c.l.b16 %v1412
    %v2057 = vunpack.c.h.b16 %v1412
    %v2058 = vunpack.c.l.b16 %v1413
    %v2059 = vunpack.c.h.b16 %v1413
    %v2060 = vunpack.c.l.b16 %v1414
    %v2061 = vunpack.c.h.b16 %v1414
    %v2062 = vunpack.c.l.b16 %v1415
    %v2063 = vunpack.c.h.b16 %v1415
    %v2064 = vunpack.c.l.b16 %v1416
    %v2065 = vunpack.c.h.b16 %v1416
    %v2066 = vunpack.c.l.b16 %v1417
    %v2067 = vunpack.c.h.b16 %v1417
    %v2068 = vunpack.c.l.b16 %v1418
    %v2069 = vunpack.c.h.b16 %v1418
    %v2070 = vunpack.c.l.b16 %v1419
    %v2071 = vunpack.c.h.b16 %v1419
    %v2072 = vunpack.c.l.b16 %v1420
    %v2073 = vunpack.c.h.b16 %v1420
    %v2074 = vunpack.c.l.b16 %v1421
    %v2075 = vunpack.c.h.b16 %v1421
    %v2076 = vunpack.c.l.b16 %v1422
    %v2077 = vunpack.c.h.b16 %v1422
    %v2078 = vunpack.c.l.b16 %v1423
    %v2079 = vunpack.c.h.b16 %v1423
    %v2080 = vunpack.c.l.b16 %v1424
    %v2081 = vunpack.c.h.b16 %v1424
    %v2082 = vunpack.c.l.b16 %v1425
    %v2083 = vunpack.c.h.b16 %v1425
    %v2084 = vunpack.c.l.b16 %v1426
    %v2085 = vunpack.c.h.b16 %v1426
    %v2086 = vunpack.c.l.b16 %v1427
    %v2087 = vunpack.c.h.b16 %v1427
    %v2088 = vunpack.c.l.b16 %v1428
    %v2089 = vunpack.c.h.b16 %v1428
    %v2090 = vunpack.c.l.b16 %v1429
    %v2091 = vunpack.c.h.b16 %v1429
    %v2092 = vunpack.c.l.b16 %v1430
    %v2093 = vunpack.c.h.b16 %v1430
    %v2094 = vunpack.c.l.b16 %v1431
    %v2095 = vunpack.c.h.b16 %v1431
    %v2096 = vunpack.c.l.b16 %v1432
    %v2097 = vunpack.c.h.b16 %v1432
    %v2098 = vunpack.c.l.b16 %v1433
    %v2099 = vunpack.c.h.b16 %v1433
    %v2100 = vunpack.c.l.b16 %v1434
    %v2101 = vunpack.c.h.b16 %v1434
    %v2102 = vunpack.c.l.b16 %v1435
    %v2103 = vunpack.c.h.b16 %v1435
    %v2104 = vunpack.c.l.b16 %v1436
    %v2105 = vunpack.c.h.b16 %v1436
    %v2106 = vunpack.c.l.b16 %v1437
    %v2107 = vunpack.c.h.b16 %v1437
    %v2108 = vunpack.c.l.b16 %v1438
    %v2109 = vunpack.c.h.b16 %v1438
    %v2110 = vunpack.c.l.b16 %v1439
    %v2111 = vunpack.c.h.b16 %v1439
    %v2112 = vunpack.c.l.b16 %v1440
    %v2113 = vunpack.c.h.b16 %v1440
    %v2114 = vunpack.c.l.b16 %v1441
    %v2115 = vunpack.c.h.b16 %v1441
    %v2116 = vunpack.c.l.b16 %v1442
    %v2117 = vunpack.c.h.b16 %v1442
    %v2118 = vunpack.c.l.b16 %v1443
    %v2119 = vunpack.c.h.b16 %v1443
    %v2120 = vunpack.c.l.b16 %v1444
    %v2121 = vunpack.c.h.b16 %v1444
    %v2122 = vunpack.c.l.b16 %v1445
    %v2123 = vunpack.c.h.b16 %v1445
    %v2124 = vunpack.c.l.b16 %v1446
    %v2125 = vunpack.c.h.b16 %v1446
    %v2126 = vunpack.c.l.b16 %v1447
    %v2127 = vunpack.c.h.b16 %v1447
    %v2128 = vunpack.c.l.b16 %v1448
    %v2129 = vunpack.c.h.b16 %v1448
    %v2130 = vunpack.c.l.b16 %v1449
    %v2131 = vunpack.c.h.b16 %v1449
    %v2132 = vunpack.c.l.b16 %v1450
    %v2133 = vunpack.c.h.b16 %v1450
    %v2134 = vunpack.c.l.b16 %v1451
    %v2135 = vunpack.c.h.b16 %v1451
    %v2136 = vunpack.c.l.b16 %v1452
    %v2137 = vunpack.c.h.b16 %v1452
    %v2138 = vunpack.c.l.b16 %v1453
    %v2139 = vunpack.c.h.b16 %v1453
    %v2140 = vunpack.c.l.b16 %v1454
    %v2141 = vunpack.c.h.b16 %v1454
    %v2142 = vunpack.c.l.b16 %v1455
    %v2143 = vunpack.c.h.b16 %v1455
    %v2144 = vunpack.c.l.b16 %v1456
    %v2145 = vunpack.c.h.b16 %v1456
    %v2146 = vunpack.c.l.b16 %v1457
    %v2147 = vunpack.c.h.b16 %v1457
    %v2148 = vunpack.c.l.b16 %v1458
    %v2149 = vunpack.c.h.b16 %v1458
    %v2150 = vunpack.c.l.b16 %v1459
    %v2151 = vunpack.c.h.b16 %v1459
    %v2152 = vunpack.c.l.b16 %v1460
    %v2153 = vunpack.c.h.b16 %v1460
    %v2154 = vunpack.c.l.b16 %v1461
    %v2155 = vunpack.c.h.b16 %v1461
    %v2156 = vunpack.c.l.b16 %v1462
    %v2157 = vunpack.c.h.b16 %v1462
    %v2158 = vunpack.c.l.b16 %v1463
    %v2159 = vunpack.c.h.b16 %v1463
    %v2160 = vunpack.c.l.b16 %v1464
    %v2161 = vunpack.c.h.b16 %v1464
    %v2162 = vunpack.c.l.b16 %v1465
    %v2163 = vunpack.c.h.b16 %v1465
    %v2164 = vunpack.c.l.b16 %v1466
    %v2165 = vunpack.c.h.b16 %v1466
    %v2166 = vunpack.c.l.b16 %v1467
    %v2167 = vunpack.c.h.b16 %v1467
    %v2168 = vunpack.c.l.b16 %v1468
    %v2169 = vunpack.c.h.b16 %v1468
    %v2170 = vunpack.c.l.b16 %v1469
    %v2171 = vunpack.c.h.b16 %v1469
    %v2172 = vunpack.c.l.b16 %v1470
    %v2173 = vunpack.c.h.b16 %v1470
    %v2174 = vunpack.c.l.b16 %v1471
    %v2175 = vunpack.c.h.b16 %v1471
    %v2176 = vunpack.c.l.b16 %v1472
    %v2177 = vunpack.c.h.b16 %v1472
    %v2178 = vunpack.c.l.b16 %v1473
    %v2179 = vunpack.c.h.b16 %v1473
    %v2180 = vunpack.c.l.b16 %v1474
    %v2181 = vunpack.c.h.b16 %v1474
    %v2182 = vunpack.c.l.b16 %v1475
    %v2183 = vunpack.c.h.b16 %v1475
    %v2184 = vunpack.c.l.b16 %v1476
    %v2185 = vunpack.c.h.b16 %v1476
    %v2186 = vunpack.c.l.b16 %v1477
    %v2187 = vunpack.c.h.b16 %v1477
    %v2188 = vunpack.c.l.b16 %v1478
    %v2189 = vunpack.c.h.b16 %v1478
    %v2190 = vunpack.c.l.b16 %v1479
    %v2191 = vunpack.c.h.b16 %v1479
    %v2192 = vunpack.c.l.b16 %v1480
    %v2193 = vunpack.c.h.b16 %v1480
    %v2194 = vunpack.c.l.b16 %v1481
    %v2195 = vunpack.c.h.b16 %v1481
    %v2196 = vunpack.c.l.b16 %v1482
    %v2197 = vunpack.c.h.b16 %v1482
    %v2198 = vunpack.c.l.b16 %v1483
    %v2199 = vunpack.c.h.b16 %v1483
    %v2200 = vunpack.c.l.b16 %v1484
    %v2201 = vunpack.c.h.b16 %v1484
    %v2202 = vunpack.c.l.b16 %v1485
    %v2203 = vunpack.c.h.b16 %v1485
    %v2204 = vunpack.c.l.b16 %v1486
    %v2205 = vunpack.c.h.b16 %v1486
    %v2206 = vunpack.c.l.b16 %v1487
    %v2207 = vunpack.c.h.b16 %v1487
    %v2208 = vunpack.c.l.b16 %v1488
    %v2209 = vunpack.c.h.b16 %v1488
    %v2210 = vunpack.c.l.b16 %v1489
    %v2211 = vunpack.c.h.b16 %v1489
    %v2212 = vunpack.c.l.b16 %v1490
    %v2213 = vunpack.c.h.b16 %v1490
    %v2214 = vunpack.c.l.b16 %v1491
    %v2215 = vunpack.c.h.b16 %v1491
    %v2216 = vunpack.c.l.b16 %v1492
    %v2217 = vunpack.c.h.b16 %v1492
    %v2218 = vunpack.c.l.b16 %v1493
    %v2219 = vunpack.c.h.b16 %v1493
    %v2220 = vunpack.c.l.b16 %v1494
    %v2221 = vunpack.c.h.b16 %v1494
    %v2222 = vunpack.c.l.b16 %v1495
    %v2223 = vunpack.c.h.b16 %v1495
    %v2224 = vunpack.c.l.b16 %v1496
    %v2225 = vunpack.c.h.b16 %v1496
    %v2226 = vunpack.c.l.b16 %v1497
    %v2227 = vunpack.c.h.b16 %v1497
    %v2228 = vunpack.c.l.b16 %v1498
    %v2229 = vunpack.c.h.b16 %v1498
    %v2230 = vunpack.c.l.b16 %v1499
    %v2231 = vunpack.c.h.b16 %v1499
    %v2232 = vunpack.c.l.b16 %v1500
    %v2233 = vunpack.c.h.b16 %v1500
    %v2234 = vunpack.c.l.b16 %v1501
    %v2235 = vunpack.c.h.b16 %v1501
    %v2236 = vunpack.c.l.b16 %v1502
    %v2237 = vunpack.c.h.b16 %v1502
    %v2238 = vunpack.c.l.b16 %v1503
    %v2239 = vunpack.c.h.b16 %v1503
    %v2240 = vunpack.c.l.b16 %v1504
    %v2241 = vunpack.c.h.b16 %v1504
    %v2242 = vunpack.c.l.b16 %v1505
    %v2243 = vunpack.c.h.b16 %v1505
    %v2244 = vunpack.c.l.b16 %v1506
    %v2245 = vunpack.c.h.b16 %v1506
    %v2246 = vunpack.c.l.b16 %v1507
    %v2247 = vunpack.c.h.b16 %v1507
    %v2248 = vunpack.c.l.b16 %v1508
    %v2249 = vunpack.c.h.b16 %v1508
    %v2250 = vunpack.c.l.b16 %v1509
    %v2251 = vunpack.c.h.b16 %v1509
    %v2252 = vunpack.c.l.b16 %v1510
    %v2253 = vunpack.c.h.b16 %v1510
    %v2254 = vunpack.c.l.b16 %v1511
    %v2255 = vunpack.c.h.b16 %v1511
    %v2256 = vunpack.c.l.b16 %v1512
    %v2257 = vunpack.c.h.b16 %v1512
    %v2258 = vunpack.c.l.b16 %v1513
    %v2259 = vunpack.c.h.b16 %v1513
    %v2260 = vunpack.c.l.b16 %v1514
    %v2261 = vunpack.c.h.b16 %v1514
    %v2262 = vunpack.c.l.b16 %v1515
    %v2263 = vunpack.c.h.b16 %v1515
    %v2264 = vunpack.c.l.b16 %v1516
    %v2265 = vunpack.c.h.b16 %v1516
    %v2266 = vunpack.c.l.b16 %v1517
    %v2267 = vunpack.c.h.b16 %v1517
    %v2268 = vunpack.c.l.b16 %v1518
    %v2269 = vunpack.c.h.b16 %v1518
    %v2270 = vunpack.c.l.b16 %v1519
    %v2271 = vunpack.c.h.b16 %v1519
    %v2272 = vunpack.c.l.b16 %v1520
    %v2273 = vunpack.c.h.b16 %v1520
    %v2274 = vunpack.c.l.b16 %v1521
    %v2275 = vunpack.c.h.b16 %v1521
    %v2276 = vunpack.c.l.b16 %v1522
    %v2277 = vunpack.c.h.b16 %v1522
    %v2278 = vunpack.c.l.b16 %v1523
    %v2279 = vunpack.c.h.b16 %v1523
    %v2280 = vunpack.c.l.b16 %v1524
    %v2281 = vunpack.c.h.b16 %v1524
    %v2282 = vunpack.c.l.b16 %v1525
    %v2283 = vunpack.c.h.b16 %v1525
    %v2284 = vunpack.c.l.b16 %v1526
    %v2285 = vunpack.c.h.b16 %v1526
    %v2286 = vunpack.c.l.b16 %v1527
    %v2287 = vunpack.c.h.b16 %v1527
    %v2288 = vunpack.c.l.b16 %v1528
    %v2289 = vunpack.c.h.b16 %v1528
    %v2290 = vunpack.c.l.b16 %v1529
    %v2291 = vunpack.c.h.b16 %v1529
    %v2292 = vunpack.c.l.b16 %v1530
    %v2293 = vunpack.c.h.b16 %v1530
    %v2294 = vunpack.c.l.b16 %v1531
    %v2295 = vunpack.c.h.b16 %v1531
    %v2296 = vunpack.c.l.b16 %v1532
    %v2297 = vunpack.c.h.b16 %v1532
    %v2298 = vunpack.c.l.b16 %v1533
    %v2299 = vunpack.c.h.b16 %v1533
    %v2300 = vunpack.c.l.b16 %v1534
    %v2301 = vunpack.c.h.b16 %v1534
    %v2302 = vunpack.c.l.b16 %v1535
    %v2303 = vunpack.c.h.b16 %v1535
    %v2304 = vunpack.c.l.b16 %v1536
    %v2305 = vunpack.c.h.b16 %v1536
    %v2306 = vunpack.c.l.b16 %v1537
    %v2307 = vunpack.c.h.b16 %v1537
    %v2308 = vunpack.c.l.b16 %v1538
    %v2309 = vunpack.c.h.b16 %v1538
    %v2310 = vunpack.c.l.b16 %v1539
    %v2311 = vunpack.c.h.b16 %v1539
    %v2312 = vunpack.c.l.b16 %v1540
    %v2313 = vunpack.c.h.b16 %v1540
    %v2314 = vunpack.c.l.b16 %v1541
    %v2315 = vunpack.c.h.b16 %v1541
    %v2316 = vunpack.c.l.b16 %v1542
    %v2317 = vunpack.c.h.b16 %v1542
    %v2318 = vunpack.c.l.b16 %v1543
    %v2319 = vunpack.c.h.b16 %v1543
    %v2320 = vunpack.c.l.b16 %v1544
    %v2321 = vunpack.c.h.b16 %v1544
    %v2322 = vunpack.c.l.b16 %v1545
    %v2323 = vunpack.c.h.b16 %v1545
    %v2324 = vunpack.c.l.b16 %v1546
    %v2325 = vunpack.c.h.b16 %v1546
    %v2326 = vunpack.c.l.b16 %v1547
    %v2327 = vunpack.c.h.b16 %v1547
    %v2328 = vunpack.c.l.b16 %v1548
    %v2329 = vunpack.c.h.b16 %v1548
    %v2330 = vunpack.c.l.b16 %v1549
    %v2331 = vunpack.c.h.b16 %v1549
    %v2332 = vunpack.c.l.b16 %v1550
    %v2333 = vunpack.c.h.b16 %v1550
    %v2334 = vunpack.c.l.b16 %v1551
    %v2335 = vunpack.c.h.b16 %v1551
    %v2336 = vunpack.c.l.b16 %v1552
    %v2337 = vunpack.c.h.b16 %v1552
    %v2338 = vunpack.c.l.b16 %v1553
    %v2339 = vunpack.c.h.b16 %v1553
    %v2340 = vunpack.c.l.b16 %v1554
    %v2341 = vunpack.c.h.b16 %v1554
    %v2342 = vunpack.c.l.b16 %v1555
    %v2343 = vunpack.c.h.b16 %v1555
    %v2344 = vunpack.c.l.b16 %v1556
    %v2345 = vunpack.c.h.b16 %v1556
    %v2346 = vunpack.c.l.b16 %v1557
    %v2347 = vunpack.c.h.b16 %v1557
    %v2348 = vunpack.c.l.b16 %v1558
    %v2349 = vunpack.c.h.b16 %v1558
    %v2350 = vunpack.c.l.b16 %v1559
    %v2351 = vunpack.c.h.b16 %v1559
    %v2352 = vunpack.c.l.b16 %v1560
    %v2353 = vunpack.c.h.b16 %v1560
    %v2354 = vunpack.c.l.b16 %v1561
    %v2355 = vunpack.c.h.b16 %v1561
    %v2356 = vunpack.c.l.b16 %v1562
    %v2357 = vunpack.c.h.b16 %v1562
    %v2358 = vunpack.c.l.b16 %v1563
    %v2359 = vunpack.c.h.b16 %v1563
    %v2360 = vunpack.c.l.b16 %v1564
    %v2361 = vunpack.c.h.b16 %v1564
    %v2362 = vunpack.c.l.b16 %v1565
    %v2363 = vunpack.c.h.b16 %v1565
    %v2364 = vunpack.c.l.b16 %v1566
    %v2365 = vunpack.c.h.b16 %v1566
    %v2366 = vunpack.c.l.b16 %v1567
    %v2367 = vunpack.c.h.b16 %v1567
    %v2368 = vunpack.c.l.b16 %v1568
    %v2369 = vunpack.c.h.b16 %v1568
    %v2370 = vunpack.c.l.b16 %v1569
    %v2371 = vunpack.c.h.b16 %v1569
    %v2372 = vunpack.c.l.b16 %v1570
    %v2373 = vunpack.c.h.b16 %v1570
    %v2374 = vunpack.c.l.b16 %v1571
    %v2375 = vunpack.c.h.b16 %v1571
    %v2376 = vunpack.c.l.b16 %v1572
    %v2377 = vunpack.c.h.b16 %v1572
    %v2378 = vunpack.c.l.b16 %v1573
    %v2379 = vunpack.c.h.b16 %v1573
    %v2380 = vunpack.c.l.b16 %v1574
    %v2381 = vunpack.c.h.b16 %v1574
    %v2382 = vunpack.c.l.b16 %v1575
    %v2383 = vunpack.c.h.b16 %v1575
    %v2384 = vunpack.c.l.b16 %v1576
    %v2385 = vunpack.c.h.b16 %v1576
    %v2386 = vunpack.c.l.b16 %v1577
    %v2387 = vunpack.c.h.b16 %v1577
    %v2388 = vunpack.c.l.b16 %v1578
    %v2389 = vunpack.c.h.b16 %v1578
    %v2390 = vunpack.c.l.b16 %v1579
    %v2391 = vunpack.c.h.b16 %v1579
    %v2392 = vunpack.c.l.b16 %v1580
    %v2393 = vunpack.c.h.b16 %v1580
    %v2394 = vunpack.c.l.b16 %v1581
    %v2395 = vunpack.c.h.b16 %v1581
    %v2396 = vpack.c.b16 %v1892, %v1884
    %v2397 = vpack.c.b16 %v1893, %v1885
    %v2398 = vpack.c.b16 %v1894, %v1886
    %v2399 = vpack.c.b16 %v1895, %v1887
    %v2400 = vpack.c.b16 %v1896, %v1888
    %v2401 = vpack.c.b16 %v1897, %v1889
    %v2402 = vpack.c.b16 %v1898, %v1890
    %v2403 = vpack.c.b16 %v1899, %v1891
    %v2404 = vpack.c.b16 %v1908, %v1900
    %v2405 = vpack.c.b16 %v1909, %v1901
    %v2406 = vpack.c.b16 %v1910, %v1902
    %v2407 = vpack.c.b16 %v1911, %v1903
    %v2408 = vpack.c.b16 %v1912, %v1904
    %v2409 = vpack.c.b16 %v1913, %v1905
    %v2410 = vpack.c.b16 %v1914, %v1906
    %v2411 = vpack.c.b16 %v1915, %v1907
    %v2412 = vpack.c.b16 %v1924, %v1916
    %v2413 = vpack.c.b16 %v1925, %v1917
    %v2414 = vpack.c.b16 %v1926, %v1918
    %v2415 = vpack.c.b16 %v1927, %v1919
    %v2416 = vpack.c.b16 %v1928, %v1920
    %v2417 = vpack.c.b16 %v1929, %v1921
    %v2418 = vpack.c.b16 %v1930, %v1922
    %v2419 = vpack.c.b16 %v1931, %v1923
    %v2420 = vpack.c.b16 %v1940, %v1932
    %v2421 = vpack.c.b16 %v1941, %v1933
    %v2422 = vpack.c.b16 %v1942, %v1934
    %v2423 = vpack.c.b16 %v1943, %v1935
    %v2424 = vpack.c.b16 %v1944, %v1936
    %v2425 = vpack.c.b16 %v1945, %v1937
    %v2426 = vpack.c.b16 %v1946, %v1938
    %v2427 = vpack.c.b16 %v1947, %v1939
    %v2428 = vpack.c.b16 %v1956, %v1948
    %v2429 = vpack.c.b16 %v1957, %v1949
    %v2430 = vpack.c.b16 %v1958, %v1950
    %v2431 = vpack.c.b16 %v1959, %v1951
    %v2432 = vpack.c.b16 %v1960, %v1952
    %v2433 = vpack.c.b16 %v1961, %v1953
    %v2434 = vpack.c.b16 %v1962, %v1954
    %v2435 = vpack.c.b16 %v1963, %v1955
    %v2436 = vpack.c.b16 %v1972, %v1964
    %v2437 = vpack.c.b16 %v1973, %v1965
    %v2438 = vpack.c.b16 %v1974, %v1966
    %v2439 = vpack.c.b16 %v1975, %v1967
    %v2440 = vpack.c.b16 %v1976, %v1968
    %v2441 = vpack.c.b16 %v1977, %v1969
    %v2442 = vpack.c.b16 %v1978, %v1970
    %v2443 = vpack.c.b16 %v1979, %v1971
    %v2444 = vpack.c.b16 %v1988, %v1980
    %v2445 = vpack.c.b16 %v1989, %v1981
    %v2446 = vpack.c.b16 %v1990, %v1982
    %v2447 = vpack.c.b16 %v1991, %v1983
    %v2448 = vpack.c.b16 %v1992, %v1984
    %v2449 = vpack.c.b16 %v1993, %v1985
    %v2450 = vpack.c.b16 %v1994, %v1986
    %v2451 = vpack.c.b16 %v1995, %v1987
    %v2452 = vpack.c.b16 %v2004, %v1996
    %v2453 = vpack.c.b16 %v2005, %v1997
    %v2454 = vpack.c.b16 %v2006, %v1998
    %v2455 = vpack.c.b16 %v2007, %v1999
    %v2456 = vpack.c.b16 %v2008, %v2000
    %v2457 = vpack.c.b16 %v2009, %v2001
    %v2458 = vpack.c.b16 %v2010, %v2002
    %v2459 = vpack.c.b16 %v2011, %v2003
    %v2460 = vpack.c.b16 %v2020, %v2012
    %v2461 = vpack.c.b16 %v2021, %v2013
    %v2462 = vpack.c.b16 %v2022, %v2014
    %v2463 = vpack.c.b16 %v2023, %v2015
    %v2464 = vpack.c.b16 %v2024, %v2016
    %v2465 = vpack.c.b16 %v2025, %v2017
    %v2466 = vpack.c.b16 %v2026, %v2018
    %v2467 = vpack.c.b16 %v2027, %v2019
    %v2468 = vpack.c.b16 %v2036, %v2028
    %v2469 = vpack.c.b16 %v2037, %v2029
    %v2470 = vpack.c.b16 %v2038, %v2030
    %v2471 = vpack.c.b16 %v2039, %v2031
    %v2472 = vpack.c.b16 %v2040, %v2032
    %v2473 = vpack.c.b16 %v2041, %v2033
    %v2474 = vpack.c.b16 %v2042, %v2034
    %v2475 = vpack.c.b16 %v2043, %v2035
    %v2476 = vpack.c.b16 %v2052, %v2044
    %v2477 = vpack.c.b16 %v2053, %v2045
    %v2478 = vpack.c.b16 %v2054, %v2046
    %v2479 = vpack.c.b16 %v2055, %v2047
    %v2480 = vpack.c.b16 %v2056, %v2048
    %v2481 = vpack.c.b16 %v2057, %v2049
    %v2482 = vpack.c.b16 %v2058, %v2050
    %v2483 = vpack.c.b16 %v2059, %v2051
    %v2484 = vpack.c.b16 %v2068, %v2060
    %v2485 = vpack.c.b16 %v2069, %v2061
    %v2486 = vpack.c.b16 %v2070, %v2062
    %v2487 = vpack.c.b16 %v2071, %v2063
    %v2488 = vpack.c.b16 %v2072, %v2064
    %v2489 = vpack.c.b16 %v2073, %v2065
    %v2490 = vpack.c.b16 %v2074, %v2066
    %v2491 = vpack.c.b16 %v2075, %v2067
    %v2492 = vpack.c.b16 %v2084, %v2076
    %v2493 = vpack.c.b16 %v2085, %v2077
    %v2494 = vpack.c.b16 %v2086, %v2078
    %v2495 = vpack.c.b16 %v2087, %v2079
    %v2496 = vpack.c.b16 %v2088, %v2080
    %v2497 = vpack.c.b16 %v2089, %v2081
    %v2498 = vpack.c.b16 %v2090, %v2082
    %v2499 = vpack.c.b16 %v2091, %v2083
    %v2500 = vpack.c.b16 %v2100, %v2092
    %v2501 = vpack.c.b16 %v2101, %v2093
    %v2502 = vpack.c.b16 %v2102, %v2094
    %v2503 = vpack.c.b16 %v2103, %v2095
    %v2504 = vpack.c.b16 %v2104, %v2096
    %v2505 = vpack.c.b16 %v2105, %v2097
    %v2506 = vpack.c.b16 %v2106, %v2098
    %v2507 = vpack.c.b16 %v2107, %v2099
    %v2508 = vpack.c.b16 %v2116, %v2108
    %v2509 = vpack.c.b16 %v2117, %v2109
    %v2510 = vpack.c.b16 %v2118, %v2110
    %v2511 = vpack.c.b16 %v2119, %v2111
    %v2512 = vpack.c.b16 %v2120, %v2112
    %v2513 = vpack.c.b16 %v2121, %v2113
    %v2514 = vpack.c.b16 %v2122, %v2114
    %v2515 = vpack.c.b16 %v2123, %v2115
    %v2516 = vpack.c.b16 %v2132, %v2124
    %v2517 = vpack.c.b16 %v2133, %v2125
    %v2518 = vpack.c.b16 %v2134, %v2126
    %v2519 = vpack.c.b16 %v2135, %v2127
    %v2520 = vpack.c.b16 %v2136, %v2128
    %v2521 = vpack.c.b16 %v2137, %v2129
    %v2522 = vpack.c.b16 %v2138, %v2130
    %v2523 = vpack.c.b16 %v2139, %v2131
    %v2524 = vpack.c.b16 %v2148, %v2140
    %v2525 = vpack.c.b16 %v2149, %v2141
    %v2526 = vpack.c.b16 %v2150, %v2142
    %v2527 = vpack.c.b16 %v2151, %v2143
    %v2528 = vpack.c.b16 %v2152, %v2144
    %v2529 = vpack.c.b16 %v2153, %v2145
    %v2530 = vpack.c.b16 %v2154, %v2146
    %v2531 = vpack.c.b16 %v2155, %v2147
    %v2532 = vpack.c.b16 %v2164, %v2156
    %v2533 = vpack.c.b16 %v2165, %v2157
    %v2534 = vpack.c.b16 %v2166, %v2158
    %v2535 = vpack.c.b16 %v2167, %v2159
    %v2536 = vpack.c.b16 %v2168, %v2160
    %v2537 = vpack.c.b16 %v2169, %v2161
    %v2538 = vpack.c.b16 %v2170, %v2162
    %v2539 = vpack.c.b16 %v2171, %v2163
    %v2540 = vpack.c.b16 %v2180, %v2172
    %v2541 = vpack.c.b16 %v2181, %v2173
    %v2542 = vpack.c.b16 %v2182, %v2174
    %v2543 = vpack.c.b16 %v2183, %v2175
    %v2544 = vpack.c.b16 %v2184, %v2176
    %v2545 = vpack.c.b16 %v2185, %v2177
    %v2546 = vpack.c.b16 %v2186, %v2178
    %v2547 = vpack.c.b16 %v2187, %v2179
    %v2548 = vpack.c.b16 %v2196, %v2188
    %v2549 = vpack.c.b16 %v2197, %v2189
    %v2550 = vpack.c.b16 %v2198, %v2190
    %v2551 = vpack.c.b16 %v2199, %v2191
    %v2552 = vpack.c.b16 %v2200, %v2192
    %v2553 = vpack.c.b16 %v2201, %v2193
    %v2554 = vpack.c.b16 %v2202, %v2194
    %v2555 = vpack.c.b16 %v2203, %v2195
    %v2556 = vpack.c.b16 %v2212, %v2204
    %v2557 = vpack.c.b16 %v2213, %v2205
    %v2558 = vpack.c.b16 %v2214, %v2206
    %v2559 = vpack.c.b16 %v2215, %v2207
    %v2560 = vpack.c.b16 %v2216, %v2208
    %v2561 = vpack.c.b16 %v2217, %v2209
    %v2562 = vpack.c.b16 %v2218, %v2210
    %v2563 = vpack.c.b16 %v2219, %v2211
    %v2564 = vpack.c.b16 %v2228, %v2220
    %v2565 = vpack.c.b16 %v2229, %v2221
    %v2566 = vpack.c.b16 %v2230, %v2222
    %v2567 = vpack.c.b16 %v2231, %v2223
    %v2568 = vpack.c.b16 %v2232, %v2224
    %v2569 = vpack.c.b16 %v2233, %v2225
    %v2570 = vpack.c.b16 %v2234, %v2226
    %v2571 = vpack.c.b16 %v2235, %v2227
    %v2572 = vpack.c.b16 %v2244, %v2236
    %v2573 = vpack.c.b16 %v2245, %v2237
    %v2574 = vpack.c.b16 %v2246, %v2238
    %v2575 = vpack.c.b16 %v2247, %v2239
    %v2576 = vpack.c.b16 %v2248, %v2240
    %v2577 = vpack.c.b16 %v2249, %v2241
    %v2578 = vpack.c.b16 %v2250, %v2242
    %v2579 = vpack.c.b16 %v2251, %v2243
    %v2580 = vpack.c.b16 %v2260, %v2252
    %v2581 = vpack.c.b16 %v2261, %v2253
    %v2582 = vpack.c.b16 %v2262, %v2254
    %v2583 = vpack.c.b16 %v2263, %v2255
    %v2584 = vpack.c.b16 %v2264, %v2256
    %v2585 = vpack.c.b16 %v2265, %v2257
    %v2586 = vpack.c.b16 %v2266, %v2258
    %v2587 = vpack.c.b16 %v2267, %v2259
    %v2588 = vpack.c.b16 %v2276, %v2268
    %v2589 = vpack.c.b16 %v2277, %v2269
    %v2590 = vpack.c.b16 %v2278, %v2270
    %v2591 = vpack.c.b16 %v2279, %v2271
    %v2592 = vpack.c.b16 %v2280, %v2272
    %v2593 = vpack.c.b16 %v2281, %v2273
    %v2594 = vpack.c.b16 %v2282, %v2274
    %v2595 = vpack.c.b16 %v2283, %v2275
    %v2596 = vpack.c.b16 %v2292, %v2284
    %v2597 = vpack.c.b16 %v2293, %v2285
    %v2598 = vpack.c.b16 %v2294, %v2286
    %v2599 = vpack.c.b16 %v2295, %v2287
    %v2600 = vpack.c.b16 %v2296, %v2288
    %v2601 = vpack.c.b16 %v2297, %v2289
    %v2602 = vpack.c.b16 %v2298, %v2290
    %v2603 = vpack.c.b16 %v2299, %v2291
    %v2604 = vpack.c.b16 %v2308, %v2300
    %v2605 = vpack.c.b16 %v2309, %v2301
    %v2606 = vpack.c.b16 %v2310, %v2302
    %v2607 = vpack.c.b16 %v2311, %v2303
    %v2608 = vpack.c.b16 %v2312, %v2304
    %v2609 = vpack.c.b16 %v2313, %v2305
    %v2610 = vpack.c.b16 %v2314, %v2306
    %v2611 = vpack.c.b16 %v2315, %v2307
    %v2612 = vpack.c.b16 %v2324, %v2316
    %v2613 = vpack.c.b16 %v2325, %v2317
    %v2614 = vpack.c.b16 %v2326, %v2318
    %v2615 = vpack.c.b16 %v2327, %v2319
    %v2616 = vpack.c.b16 %v2328, %v2320
    %v2617 = vpack.c.b16 %v2329, %v2321
    %v2618 = vpack.c.b16 %v2330, %v2322
    %v2619 = vpack.c.b16 %v2331, %v2323
    %v2620 = vpack.c.b16 %v2340, %v2332
    %v2621 = vpack.c.b16 %v2341, %v2333
    %v2622 = vpack.c.b16 %v2342, %v2334
    %v2623 = vpack.c.b16 %v2343, %v2335
    %v2624 = vpack.c.b16 %v2344, %v2336
    %v2625 = vpack.c.b16 %v2345, %v2337
    %v2626 = vpack.c.b16 %v2346, %v2338
    %v2627 = vpack.c.b16 %v2347, %v2339
    %v2628 = vpack.c.b16 %v2356, %v2348
    %v2629 = vpack.c.b16 %v2357, %v2349
    %v2630 = vpack.c.b16 %v2358, %v2350
    %v2631 = vpack.c.b16 %v2359, %v2351
    %v2632 = vpack.c.b16 %v2360, %v2352
    %v2633 = vpack.c.b16 %v2361, %v2353
    %v2634 = vpack.c.b16 %v2362, %v2354
    %v2635 = vpack.c.b16 %v2363, %v2355
    %v2636 = vpack.c.b16 %v2372, %v2364
    %v2637 = vpack.c.b16 %v2373, %v2365
    %v2638 = vpack.c.b16 %v2374, %v2366
    %v2639 = vpack.c.b16 %v2375, %v2367
    %v2640 = vpack.c.b16 %v2376, %v2368
    %v2641 = vpack.c.b16 %v2377, %v2369
    %v2642 = vpack.c.b16 %v2378, %v2370
    %v2643 = vpack.c.b16 %v2379, %v2371
    %v2644 = vpack.c.b16 %v2388, %v2380
    %v2645 = vpack.c.b16 %v2389, %v2381
    %v2646 = vpack.c.b16 %v2390, %v2382
    %v2647 = vpack.c.b16 %v2391, %v2383
    %v2648 = vpack.c.b16 %v2392, %v2384
    %v2649 = vpack.c.b16 %v2393, %v2385
    %v2650 = vpack.c.b16 %v2394, %v2386
    %v2651 = vpack.c.b16 %v2395, %v2387
    %2908 = vmatprep.subr.bf16.mxu0 %v2453
    %2909 = vmatpush1.bf16.msra.mxu0 %v2452
    %2910 = vmatprep.subr.bf16.mxu0 %v2445
    %2911 = vmatpush1.bf16.msra.mxu0 %v2444
    %2912 = vmatprep.subr.bf16.mxu0 %v2437
    %2913 = vmatpush1.bf16.msra.mxu0 %v2436
    %2914 = vmatprep.subr.bf16.mxu0 %v2429
    %2915 = vmatpush1.bf16.msra.mxu0 %v2428
    %2916 = vmatprep.subr.bf16.mxu0 %v2421
    %2917 = vmatpush1.bf16.msra.mxu0 %v2420
    %2918 = vmatprep.subr.bf16.mxu0 %v2413
    %2919 = vmatpush1.bf16.msra.mxu0 %v2412
    %2920 = vmatprep.subr.bf16.mxu0 %v2405
    %2921 = vmatpush1.bf16.msra.mxu0 %v2404
    %2922 = vmatprep.subr.bf16.mxu0 %v2397
    %2923 = vmatpush1.bf16.msra.mxu0 %v2396
    %2924 = vmatprep.subr.bf16.mxu0 %v2517
    %2925 = vmatpush2.bf16.msra.mxu0 %v2516
    %2926 = vmatprep.subr.bf16.mxu0 %v2509
    %2927 = vmatpush2.bf16.msra.mxu0 %v2508
    %2928 = vmatprep.subr.bf16.mxu0 %v2501
    %2929 = vmatpush2.bf16.msra.mxu0 %v2500
    %2930 = vmatprep.subr.bf16.mxu0 %v2493
    %2931 = vmatpush2.bf16.msra.mxu0 %v2492
    %2932 = vmatprep.subr.bf16.mxu0 %v2485
    %2933 = vmatpush2.bf16.msra.mxu0 %v2484
    %2934 = vmatprep.subr.bf16.mxu0 %v2477
    %2935 = vmatpush2.bf16.msra.mxu0 %v2476
    %2936 = vmatprep.subr.bf16.mxu0 %v2469
    %2937 = vmatpush2.bf16.msra.mxu0 %v2468
    %2938 = vmatprep.subr.bf16.mxu0 %v2461
    %2939 = vmatpush2.bf16.msra.mxu0 %v2460
    %2940 = vmatprep.mubr.bf16.mxu0 %v1583
    %2941 = vmatmul.mubr.bf16.gmra.mxu0 %v1582
    %v2942 = vpop.f32.mrf.mxu0
    %v2943 = vadd.f32 %v1591, %v2942
    %v2944 = vpop.f32.mrf.mxu0
    %v2945 = vadd.f32 %v1595, %v2944
    %v2946 = vpop.f32.mrf.mxu0
    %v2947 = vpop.f32.mrf.mxu0
    %2948 = vdwg.mxu0
    %2949 = vmatprep.subr.bf16.mxu0 %v2581
    %2950 = vmatpush1.bf16.msra.mxu0 %v2580
    %2951 = vmatprep.subr.bf16.mxu0 %v2573
    %2952 = vmatpush1.bf16.msra.mxu0 %v2572
    %2953 = vmatprep.subr.bf16.mxu0 %v2565
    %2954 = vmatpush1.bf16.msra.mxu0 %v2564
    %2955 = vmatprep.subr.bf16.mxu0 %v2557
    %2956 = vmatpush1.bf16.msra.mxu0 %v2556
    %2957 = vmatprep.subr.bf16.mxu0 %v2549
    %2958 = vmatpush1.bf16.msra.mxu0 %v2548
    %2959 = vmatprep.subr.bf16.mxu0 %v2541
    %2960 = vmatpush1.bf16.msra.mxu0 %v2540
    %2961 = vmatprep.subr.bf16.mxu0 %v2533
    %2962 = vmatpush1.bf16.msra.mxu0 %v2532
    %2963 = vmatprep.subr.bf16.mxu0 %v2525
    %2964 = vmatpush1.bf16.msra.mxu0 %v2524
    %2965 = vmatprep.subr.bf16.mxu0 %v2645
    %2966 = vmatpush2.bf16.msra.mxu0 %v2644
    %2967 = vmatprep.subr.bf16.mxu0 %v2637
    %2968 = vmatpush2.bf16.msra.mxu0 %v2636
    %2969 = vmatprep.subr.bf16.mxu0 %v2629
    %2970 = vmatpush2.bf16.msra.mxu0 %v2628
    %2971 = vmatprep.subr.bf16.mxu0 %v2621
    %2972 = vmatpush2.bf16.msra.mxu0 %v2620
    %2973 = vmatprep.subr.bf16.mxu0 %v2613
    %2974 = vmatpush2.bf16.msra.mxu0 %v2612
    %2975 = vmatprep.subr.bf16.mxu0 %v2605
    %2976 = vmatpush2.bf16.msra.mxu0 %v2604
    %2977 = vmatprep.subr.bf16.mxu0 %v2597
    %2978 = vmatpush2.bf16.msra.mxu0 %v2596
    %2979 = vmatprep.subr.bf16.mxu0 %v2589
    %2980 = vmatpush2.bf16.msra.mxu0 %v2588
    %2981 = vmatprep.mubr.bf16.mxu0 %v1585
    %2982 = vmatmul.mubr.bf16.gmra.mxu0 %v1584
    %v2983 = vpop.f32.mrf.mxu0
    %v2984 = vadd.f32 %v2943, %v2983
    %v2985 = vpop.f32.mrf.mxu0
    %v2986 = vadd.f32 %v2945, %v2985
    %v2987 = vpop.f32.mrf.mxu0
    %v2988 = vpop.f32.mrf.mxu0
    %2989 = vdwg.mxu0
    %2990 = vmatprep.subr.bf16.mxu0 %v2455
    %2991 = vmatpush1.bf16.msra.mxu0 %v2454
    %2992 = vmatprep.subr.bf16.mxu0 %v2447
    %2993 = vmatpush1.bf16.msra.mxu0 %v2446
    %2994 = vmatprep.subr.bf16.mxu0 %v2439
    %2995 = vmatpush1.bf16.msra.mxu0 %v2438
    %2996 = vmatprep.subr.bf16.mxu0 %v2431
    %2997 = vmatpush1.bf16.msra.mxu0 %v2430
    %2998 = vmatprep.subr.bf16.mxu0 %v2423
    %2999 = vmatpush1.bf16.msra.mxu0 %v2422
    %3000 = vmatprep.subr.bf16.mxu0 %v2415
    %3001 = vmatpush1.bf16.msra.mxu0 %v2414
    %3002 = vmatprep.subr.bf16.mxu0 %v2407
    %3003 = vmatpush1.bf16.msra.mxu0 %v2406
    %3004 = vmatprep.subr.bf16.mxu0 %v2399
    %3005 = vmatpush1.bf16.msra.mxu0 %v2398
    %3006 = vmatprep.subr.bf16.mxu0 %v2519
    %3007 = vmatpush2.bf16.msra.mxu0 %v2518
    %3008 = vmatprep.subr.bf16.mxu0 %v2511
    %3009 = vmatpush2.bf16.msra.mxu0 %v2510
    %3010 = vmatprep.subr.bf16.mxu0 %v2503
    %3011 = vmatpush2.bf16.msra.mxu0 %v2502
    %3012 = vmatprep.subr.bf16.mxu0 %v2495
    %3013 = vmatpush2.bf16.msra.mxu0 %v2494
    %3014 = vmatprep.subr.bf16.mxu0 %v2487
    %3015 = vmatpush2.bf16.msra.mxu0 %v2486
    %3016 = vmatprep.subr.bf16.mxu0 %v2479
    %3017 = vmatpush2.bf16.msra.mxu0 %v2478
    %3018 = vmatprep.subr.bf16.mxu0 %v2471
    %3019 = vmatpush2.bf16.msra.mxu0 %v2470
    %3020 = vmatprep.subr.bf16.mxu0 %v2463
    %3021 = vmatpush2.bf16.msra.mxu0 %v2462
    %3022 = vmatprep.mubr.bf16.mxu0 %v1583
    %3023 = vmatmul.mubr.bf16.gmra.mxu0 %v1582
    %v3024 = vpop.f32.mrf.mxu0
    %v3025 = vadd.f32 %v1599, %v3024
    %v3026 = vpop.f32.mrf.mxu0
    %v3027 = vadd.f32 %v1603, %v3026
    %v3028 = vpop.f32.mrf.mxu0
    %v3029 = vpop.f32.mrf.mxu0
    %3030 = vdwg.mxu0
    %3031 = vmatprep.subr.bf16.mxu0 %v2583
    %3032 = vmatpush1.bf16.msra.mxu0 %v2582
    %3033 = vmatprep.subr.bf16.mxu0 %v2575
    %3034 = vmatpush1.bf16.msra.mxu0 %v2574
    %3035 = vmatprep.subr.bf16.mxu0 %v2567
    %3036 = vmatpush1.bf16.msra.mxu0 %v2566
    %3037 = vmatprep.subr.bf16.mxu0 %v2559
    %3038 = vmatpush1.bf16.msra.mxu0 %v2558
    %3039 = vmatprep.subr.bf16.mxu0 %v2551
    %3040 = vmatpush1.bf16.msra.mxu0 %v2550
    %3041 = vmatprep.subr.bf16.mxu0 %v2543
    %3042 = vmatpush1.bf16.msra.mxu0 %v2542
    %3043 = vmatprep.subr.bf16.mxu0 %v2535
    %3044 = vmatpush1.bf16.msra.mxu0 %v2534
    %3045 = vmatprep.subr.bf16.mxu0 %v2527
    %3046 = vmatpush1.bf16.msra.mxu0 %v2526
    %3047 = vmatprep.subr.bf16.mxu0 %v2647
    %3048 = vmatpush2.bf16.msra.mxu0 %v2646
    %3049 = vmatprep.subr.bf16.mxu0 %v2639
    %3050 = vmatpush2.bf16.msra.mxu0 %v2638
    %3051 = vmatprep.subr.bf16.mxu0 %v2631
    %3052 = vmatpush2.bf16.msra.mxu0 %v2630
    %3053 = vmatprep.subr.bf16.mxu0 %v2623
    %3054 = vmatpush2.bf16.msra.mxu0 %v2622
    %3055 = vmatprep.subr.bf16.mxu0 %v2615
    %3056 = vmatpush2.bf16.msra.mxu0 %v2614
    %3057 = vmatprep.subr.bf16.mxu0 %v2607
    %3058 = vmatpush2.bf16.msra.mxu0 %v2606
    %3059 = vmatprep.subr.bf16.mxu0 %v2599
    %3060 = vmatpush2.bf16.msra.mxu0 %v2598
    %3061 = vmatprep.subr.bf16.mxu0 %v2591
    %3062 = vmatpush2.bf16.msra.mxu0 %v2590
    %3063 = vmatprep.mubr.bf16.mxu0 %v1585
    %3064 = vmatmul.mubr.bf16.gmra.mxu0 %v1584
    %v3065 = vpop.f32.mrf.mxu0
    %v3066 = vadd.f32 %v3025, %v3065
    %v3067 = vpop.f32.mrf.mxu0
    %v3068 = vadd.f32 %v3027, %v3067
    %v3069 = vpop.f32.mrf.mxu0
    %v3070 = vpop.f32.mrf.mxu0
    %3071 = vdwg.mxu0
    %3072 = vmatprep.subr.bf16.mxu0 %v2457
    %3073 = vmatpush1.bf16.msra.mxu0 %v2456
    %3074 = vmatprep.subr.bf16.mxu0 %v2449
    %3075 = vmatpush1.bf16.msra.mxu0 %v2448
    %3076 = vmatprep.subr.bf16.mxu0 %v2441
    %3077 = vmatpush1.bf16.msra.mxu0 %v2440
    %3078 = vmatprep.subr.bf16.mxu0 %v2433
    %3079 = vmatpush1.bf16.msra.mxu0 %v2432
    %3080 = vmatprep.subr.bf16.mxu0 %v2425
    %3081 = vmatpush1.bf16.msra.mxu0 %v2424
    %3082 = vmatprep.subr.bf16.mxu0 %v2417
    %3083 = vmatpush1.bf16.msra.mxu0 %v2416
    %3084 = vmatprep.subr.bf16.mxu0 %v2409
    %3085 = vmatpush1.bf16.msra.mxu0 %v2408
    %3086 = vmatprep.subr.bf16.mxu0 %v2401
    %3087 = vmatpush1.bf16.msra.mxu0 %v2400
    %3088 = vmatprep.subr.bf16.mxu0 %v2521
    %3089 = vmatpush2.bf16.msra.mxu0 %v2520
    %3090 = vmatprep.subr.bf16.mxu0 %v2513
    %3091 = vmatpush2.bf16.msra.mxu0 %v2512
    %3092 = vmatprep.subr.bf16.mxu0 %v2505
    %3093 = vmatpush2.bf16.msra.mxu0 %v2504
    %3094 = vmatprep.subr.bf16.mxu0 %v2497
    %3095 = vmatpush2.bf16.msra.mxu0 %v2496
    %3096 = vmatprep.subr.bf16.mxu0 %v2489
    %3097 = vmatpush2.bf16.msra.mxu0 %v2488
    %3098 = vmatprep.subr.bf16.mxu0 %v2481
    %3099 = vmatpush2.bf16.msra.mxu0 %v2480
    %3100 = vmatprep.subr.bf16.mxu0 %v2473
    %3101 = vmatpush2.bf16.msra.mxu0 %v2472
    %3102 = vmatprep.subr.bf16.mxu0 %v2465
    %3103 = vmatpush2.bf16.msra.mxu0 %v2464
    %3104 = vmatprep.mubr.bf16.mxu0 %v1583
    %3105 = vmatmul.mubr.bf16.gmra.mxu0 %v1582
    %v3106 = vpop.f32.mrf.mxu0
    %v3107 = vadd.f32 %v1607, %v3106
    %v3108 = vpop.f32.mrf.mxu0
    %v3109 = vadd.f32 %v1611, %v3108
    %v3110 = vpop.f32.mrf.mxu0
    %v3111 = vpop.f32.mrf.mxu0
    %3112 = vdwg.mxu0
    %3113 = vmatprep.subr.bf16.mxu0 %v2585
    %3114 = vmatpush1.bf16.msra.mxu0 %v2584
    %3115 = vmatprep.subr.bf16.mxu0 %v2577
    %3116 = vmatpush1.bf16.msra.mxu0 %v2576
    %3117 = vmatprep.subr.bf16.mxu0 %v2569
    %3118 = vmatpush1.bf16.msra.mxu0 %v2568
    %3119 = vmatprep.subr.bf16.mxu0 %v2561
    %3120 = vmatpush1.bf16.msra.mxu0 %v2560
    %3121 = vmatprep.subr.bf16.mxu0 %v2553
    %3122 = vmatpush1.bf16.msra.mxu0 %v2552
    %3123 = vmatprep.subr.bf16.mxu0 %v2545
    %3124 = vmatpush1.bf16.msra.mxu0 %v2544
    %3125 = vmatprep.subr.bf16.mxu0 %v2537
    %3126 = vmatpush1.bf16.msra.mxu0 %v2536
    %3127 = vmatprep.subr.bf16.mxu0 %v2529
    %3128 = vmatpush1.bf16.msra.mxu0 %v2528
    %3129 = vmatprep.subr.bf16.mxu0 %v2649
    %3130 = vmatpush2.bf16.msra.mxu0 %v2648
    %3131 = vmatprep.subr.bf16.mxu0 %v2641
    %3132 = vmatpush2.bf16.msra.mxu0 %v2640
    %3133 = vmatprep.subr.bf16.mxu0 %v2633
    %3134 = vmatpush2.bf16.msra.mxu0 %v2632
    %3135 = vmatprep.subr.bf16.mxu0 %v2625
    %3136 = vmatpush2.bf16.msra.mxu0 %v2624
    %3137 = vmatprep.subr.bf16.mxu0 %v2617
    %3138 = vmatpush2.bf16.msra.mxu0 %v2616
    %3139 = vmatprep.subr.bf16.mxu0 %v2609
    %3140 = vmatpush2.bf16.msra.mxu0 %v2608
    %3141 = vmatprep.subr.bf16.mxu0 %v2601
    %3142 = vmatpush2.bf16.msra.mxu0 %v2600
    %3143 = vmatprep.subr.bf16.mxu0 %v2593
    %3144 = vmatpush2.bf16.msra.mxu0 %v2592
    %3145 = vmatprep.mubr.bf16.mxu0 %v1585
    %3146 = vmatmul.mubr.bf16.gmra.mxu0 %v1584
    %v3147 = vpop.f32.mrf.mxu0
    %v3148 = vadd.f32 %v3107, %v3147
    %v3149 = vpop.f32.mrf.mxu0
    %v3150 = vadd.f32 %v3109, %v3149
    %v3151 = vpop.f32.mrf.mxu0
    %v3152 = vpop.f32.mrf.mxu0
    %3153 = vdwg.mxu0
    %3154 = vmatprep.subr.bf16.mxu0 %v2459
    %3155 = vmatpush1.bf16.msra.mxu0 %v2458
    %3156 = vmatprep.subr.bf16.mxu0 %v2451
    %3157 = vmatpush1.bf16.msra.mxu0 %v2450
    %3158 = vmatprep.subr.bf16.mxu0 %v2443
    %3159 = vmatpush1.bf16.msra.mxu0 %v2442
    %3160 = vmatprep.subr.bf16.mxu0 %v2435
    %3161 = vmatpush1.bf16.msra.mxu0 %v2434
    %3162 = vmatprep.subr.bf16.mxu0 %v2427
    %3163 = vmatpush1.bf16.msra.mxu0 %v2426
    %3164 = vmatprep.subr.bf16.mxu0 %v2419
    %3165 = vmatpush1.bf16.msra.mxu0 %v2418
    %3166 = vmatprep.subr.bf16.mxu0 %v2411
    %3167 = vmatpush1.bf16.msra.mxu0 %v2410
    %3168 = vmatprep.subr.bf16.mxu0 %v2403
    %3169 = vmatpush1.bf16.msra.mxu0 %v2402
    %3170 = vmatprep.subr.bf16.mxu0 %v2523
    %3171 = vmatpush2.bf16.msra.mxu0 %v2522
    %3172 = vmatprep.subr.bf16.mxu0 %v2515
    %3173 = vmatpush2.bf16.msra.mxu0 %v2514
    %3174 = vmatprep.subr.bf16.mxu0 %v2507
    %3175 = vmatpush2.bf16.msra.mxu0 %v2506
    %3176 = vmatprep.subr.bf16.mxu0 %v2499
    %3177 = vmatpush2.bf16.msra.mxu0 %v2498
    %3178 = vmatprep.subr.bf16.mxu0 %v2491
    %3179 = vmatpush2.bf16.msra.mxu0 %v2490
    %3180 = vmatprep.subr.bf16.mxu0 %v2483
    %3181 = vmatpush2.bf16.msra.mxu0 %v2482
    %3182 = vmatprep.subr.bf16.mxu0 %v2475
    %3183 = vmatpush2.bf16.msra.mxu0 %v2474
    %3184 = vmatprep.subr.bf16.mxu0 %v2467
    %3185 = vmatpush2.bf16.msra.mxu0 %v2466
    %3186 = vmatprep.mubr.bf16.mxu0 %v1583
    %3187 = vmatmul.mubr.bf16.gmra.mxu0 %v1582
    %v3188 = vpop.f32.mrf.mxu0
    %v3189 = vadd.f32 %v1615, %v3188
    %v3190 = vpop.f32.mrf.mxu0
    %v3191 = vadd.f32 %v1619, %v3190
    %v3192 = vpop.f32.mrf.mxu0
    %v3193 = vpop.f32.mrf.mxu0
    %3194 = vdwg.mxu0
    %3195 = vmatprep.subr.bf16.mxu0 %v2587
    %3196 = vmatpush1.bf16.msra.mxu0 %v2586
    %3197 = vmatprep.subr.bf16.mxu0 %v2579
    %3198 = vmatpush1.bf16.msra.mxu0 %v2578
    %3199 = vmatprep.subr.bf16.mxu0 %v2571
    %3200 = vmatpush1.bf16.msra.mxu0 %v2570
    %3201 = vmatprep.subr.bf16.mxu0 %v2563
    %3202 = vmatpush1.bf16.msra.mxu0 %v2562
    %3203 = vmatprep.subr.bf16.mxu0 %v2555
    %3204 = vmatpush1.bf16.msra.mxu0 %v2554
    %3205 = vmatprep.subr.bf16.mxu0 %v2547
    %3206 = vmatpush1.bf16.msra.mxu0 %v2546
    %3207 = vmatprep.subr.bf16.mxu0 %v2539
    %3208 = vmatpush1.bf16.msra.mxu0 %v2538
    %3209 = vmatprep.subr.bf16.mxu0 %v2531
    %3210 = vmatpush1.bf16.msra.mxu0 %v2530
    %3211 = vmatprep.subr.bf16.mxu0 %v2651
    %3212 = vmatpush2.bf16.msra.mxu0 %v2650
    %3213 = vmatprep.subr.bf16.mxu0 %v2643
    %3214 = vmatpush2.bf16.msra.mxu0 %v2642
    %3215 = vmatprep.subr.bf16.mxu0 %v2635
    %3216 = vmatpush2.bf16.msra.mxu0 %v2634
    %3217 = vmatprep.subr.bf16.mxu0 %v2627
    %3218 = vmatpush2.bf16.msra.mxu0 %v2626
    %3219 = vmatprep.subr.bf16.mxu0 %v2619
    %3220 = vmatpush2.bf16.msra.mxu0 %v2618
    %3221 = vmatprep.subr.bf16.mxu0 %v2611
    %3222 = vmatpush2.bf16.msra.mxu0 %v2610
    %3223 = vmatprep.subr.bf16.mxu0 %v2603
    %3224 = vmatpush2.bf16.msra.mxu0 %v2602
    %3225 = vmatprep.subr.bf16.mxu0 %v2595
    %3226 = vmatpush2.bf16.msra.mxu0 %v2594
    %3227 = vmatprep.mubr.bf16.mxu0 %v1585
    %3228 = vmatmul.mubr.bf16.gmra.mxu0 %v1584
    %v3229 = vpop.f32.mrf.mxu0
    %v3230 = vadd.f32 %v3189, %v3229
    %v3231 = vpop.f32.mrf.mxu0
    %v3232 = vadd.f32 %v3191, %v3231
    %v3233 = vpop.f32.mrf.mxu0
    %v3234 = vpop.f32.mrf.mxu0
    %3235 = vdwg.mxu0
    %v3236 = vld [vmem:[#allocation22] sm:$0xff]
    %v3237 = vld [vmem:[#allocation24] sm:$0xff]
    %v3238 = vrot.slane %v2984, 4
    %v3239 = vadd.f32 %v2984, %v3238
    %v3240 = vrot.slane %v3239, 2
    %v3241 = vadd.f32 %v3239, %v3240
    %v3242 = vrot.slane %v3241, 1
    %v3243 = vadd.f32 %v3241, %v3242
    %v3244 = vrot.slane %v2986, 4
    %v3245 = vadd.f32 %v2986, %v3244
    %v3246 = vrot.slane %v3245, 2
    %v3247 = vadd.f32 %v3245, %v3246
    %v3248 = vrot.slane %v3247, 1
    %v3249 = vadd.f32 %v3247, %v3248
    %v3250 = vrot.slane %v3066, 4
    %v3251 = vadd.f32 %v3066, %v3250
    %v3252 = vrot.slane %v3251, 2
    %v3253 = vadd.f32 %v3251, %v3252
    %v3254 = vrot.slane %v3253, 1
    %v3255 = vadd.f32 %v3253, %v3254
    %v3256 = vrot.slane %v3068, 4
    %v3257 = vadd.f32 %v3068, %v3256
    %v3258 = vrot.slane %v3257, 2
    %v3259 = vadd.f32 %v3257, %v3258
    %v3260 = vrot.slane %v3259, 1
    %v3261 = vadd.f32 %v3259, %v3260
    %v3262 = vrot.slane %v3148, 4
    %v3263 = vadd.f32 %v3148, %v3262
    %v3264 = vrot.slane %v3263, 2
    %v3265 = vadd.f32 %v3263, %v3264
    %v3266 = vrot.slane %v3265, 1
    %v3267 = vadd.f32 %v3265, %v3266
    %v3268 = vrot.slane %v3150, 4
    %v3269 = vadd.f32 %v3150, %v3268
    %v3270 = vrot.slane %v3269, 2
    %v3271 = vadd.f32 %v3269, %v3270
    %v3272 = vrot.slane %v3271, 1
    %v3273 = vadd.f32 %v3271, %v3272
    %v3274 = vrot.slane %v3230, 4
    %v3275 = vadd.f32 %v3230, %v3274
    %v3276 = vrot.slane %v3275, 2
    %v3277 = vadd.f32 %v3275, %v3276
    %v3278 = vrot.slane %v3277, 1
    %v3279 = vadd.f32 %v3277, %v3278
    %v3280 = vrot.slane %v3232, 4
    %v3281 = vadd.f32 %v3232, %v3280
    %v3282 = vrot.slane %v3281, 2
    %v3283 = vadd.f32 %v3281, %v3282
    %v3284 = vrot.slane %v3283, 1
    %v3285 = vadd.f32 %v3283, %v3284
    %v3286 = vmul.f32 %v3243, 0.125
    %v3287 = vmul.f32 %v3249, 0.125
    %v3288 = vmul.f32 %v3255, 0.125
    %v3289 = vmul.f32 %v3261, 0.125
    %v3290 = vmul.f32 %v3267, 0.125
    %v3291 = vmul.f32 %v3273, 0.125
    %v3292 = vmul.f32 %v3279, 0.125
    %v3293 = vmul.f32 %v3285, 0.125
    %v3294 = vmul.f32 %v2984, %v2984
    %v3295 = vmul.f32 %v2986, %v2986
    %v3296 = vmul.f32 %v3066, %v3066
    %v3297 = vmul.f32 %v3068, %v3068
    %v3298 = vmul.f32 %v3148, %v3148
    %v3299 = vmul.f32 %v3150, %v3150
    %v3300 = vmul.f32 %v3230, %v3230
    %v3301 = vmul.f32 %v3232, %v3232
    %v3302 = vrot.slane %v3294, 4
    %v3303 = vadd.f32 %v3294, %v3302
    %v3304 = vrot.slane %v3303, 2
    %v3305 = vadd.f32 %v3303, %v3304
    %v3306 = vrot.slane %v3305, 1
    %v3307 = vadd.f32 %v3305, %v3306
    %v3308 = vrot.slane %v3295, 4
    %v3309 = vadd.f32 %v3295, %v3308
    %v3310 = vrot.slane %v3309, 2
    %v3311 = vadd.f32 %v3309, %v3310
    %v3312 = vrot.slane %v3311, 1
    %v3313 = vadd.f32 %v3311, %v3312
    %v3314 = vrot.slane %v3296, 4
    %v3315 = vadd.f32 %v3296, %v3314
    %v3316 = vrot.slane %v3315, 2
    %v3317 = vadd.f32 %v3315, %v3316
    %v3318 = vrot.slane %v3317, 1
    %v3319 = vadd.f32 %v3317, %v3318
    %v3320 = vrot.slane %v3297, 4
    %v3321 = vadd.f32 %v3297, %v3320
    %v3322 = vrot.slane %v3321, 2
    %v3323 = vadd.f32 %v3321, %v3322
    %v3324 = vrot.slane %v3323, 1
    %v3325 = vadd.f32 %v3323, %v3324
    %v3326 = vrot.slane %v3298, 4
    %v3327 = vadd.f32 %v3298, %v3326
    %v3328 = vrot.slane %v3327, 2
    %v3329 = vadd.f32 %v3327, %v3328
    %v3330 = vrot.slane %v3329, 1
    %v3331 = vadd.f32 %v3329, %v3330
    %v3332 = vrot.slane %v3299, 4
    %v3333 = vadd.f32 %v3299, %v3332
    %v3334 = vrot.slane %v3333, 2
    %v3335 = vadd.f32 %v3333, %v3334
    %v3336 = vrot.slane %v3335, 1
    %v3337 = vadd.f32 %v3335, %v3336
    %v3338 = vrot.slane %v3300, 4
    %v3339 = vadd.f32 %v3300, %v3338
    %v3340 = vrot.slane %v3339, 2
    %v3341 = vadd.f32 %v3339, %v3340
    %v3342 = vrot.slane %v3341, 1
    %v3343 = vadd.f32 %v3341, %v3342
    %v3344 = vrot.slane %v3301, 4
    %v3345 = vadd.f32 %v3301, %v3344
    %v3346 = vrot.slane %v3345, 2
    %v3347 = vadd.f32 %v3345, %v3346
    %v3348 = vrot.slane %v3347, 1
    %v3349 = vadd.f32 %v3347, %v3348
    %v3350 = vmul.f32 %v3307, 0.125
    %v3351 = vmul.f32 %v3313, 0.125
    %v3352 = vmul.f32 %v3319, 0.125
    %v3353 = vmul.f32 %v3325, 0.125
    %v3354 = vmul.f32 %v3331, 0.125
    %v3355 = vmul.f32 %v3337, 0.125
    %v3356 = vmul.f32 %v3343, 0.125
    %v3357 = vmul.f32 %v3349, 0.125
    %v3358 = vmul.f32 %v3286, %v3286
    %v3359 = vmul.f32 %v3287, %v3287
    %v3360 = vmul.f32 %v3288, %v3288
    %v3361 = vmul.f32 %v3289, %v3289
    %v3362 = vmul.f32 %v3290, %v3290
    %v3363 = vmul.f32 %v3291, %v3291
    %v3364 = vmul.f32 %v3292, %v3292
    %v3365 = vmul.f32 %v3293, %v3293
    %v3366 = vsub.f32 %v3350, %v3358
    %v3367 = vsub.f32 %v3351, %v3359
    %v3368 = vsub.f32 %v3352, %v3360
    %v3369 = vsub.f32 %v3353, %v3361
    %v3370 = vsub.f32 %v3354, %v3362
    %v3371 = vsub.f32 %v3355, %v3363
    %v3372 = vsub.f32 %v3356, %v3364
    %v3373 = vsub.f32 %v3357, %v3365
    %v3374 = vadd.f32 %v3366, 1e-05
    %v3375 = vadd.f32 %v3367, 1e-05
    %v3376 = vadd.f32 %v3368, 1e-05
    %v3377 = vadd.f32 %v3369, 1e-05
    %v3378 = vadd.f32 %v3370, 1e-05
    %v3379 = vadd.f32 %v3371, 1e-05
    %v3380 = vadd.f32 %v3372, 1e-05
    %v3381 = vadd.f32 %v3373, 1e-05
    %v3382 = vrsqrt.pop %v3374
    %v3383 = vrsqrt.pop %v3375
    %v3384 = vrsqrt.pop %v3376
    %v3385 = vrsqrt.pop %v3377
    %v3386 = vrsqrt.pop %v3378
    %v3387 = vrsqrt.pop %v3379
    %v3388 = vrsqrt.pop %v3380
    %v3389 = vrsqrt.pop %v3381
    %v3398 = vcombine.low %v3382, %v3383
    %v3399 = vcombine.low %v3384, %v3385
    %v3400 = vcombine.low %v3386, %v3387
    %v3401 = vcombine.low %v3388, %v3389
    %v3403 = vunpack.c.l.s4 1966171168
    %v3404 = vunpack.c.0.s8 %v3403
    %v3405 = vlaneseq
    %v3406 = vshrl.u32 %v3405, 7
    %v3407 = vsub.s32 %v3404, %v3406
    %v3408 = vrot.slane %v3398, %v3407
    %v3410 = vunpack.c.l.s4 1966171168
    %v3411 = vunpack.c.0.s8 %v3410
    %v3412 = vlaneseq
    %v3413 = vshrl.u32 %v3412, 7
    %v3414 = vsub.s32 %v3411, %v3413
    %v3415 = vrot.slane %v3399, %v3414
    %v3417 = vunpack.c.l.s4 1966171168
    %v3418 = vunpack.c.0.s8 %v3417
    %v3419 = vlaneseq
    %v3420 = vshrl.u32 %v3419, 7
    %v3421 = vsub.s32 %v3418, %v3420
    %v3422 = vrot.slane %v3400, %v3421
    %v3424 = vunpack.c.l.s4 1966171168
    %v3425 = vunpack.c.0.s8 %v3424
    %v3426 = vlaneseq
    %v3427 = vshrl.u32 %v3426, 7
    %v3428 = vsub.s32 %v3425, %v3427
    %v3429 = vrot.slane %v3401, %v3428
    %v3430 = vcombine.low %v3408, %v3415
    %v3431 = vcombine.low %v3422, %v3429
    %v3433 = vunpack.c.l.s4 1966171168
    %v3434 = vunpack.c.0.s8 %v3433
    %v3435 = vlaneseq
    %v3436 = vshrl.u32 %v3435, 7
    %v3437 = vsub.s32 %v3434, %v3436
    %v3438 = vrot.slane %v3430, %v3437
    %v3440 = vunpack.c.l.s4 1966171168
    %v3441 = vunpack.c.0.s8 %v3440
    %v3442 = vlaneseq
    %v3443 = vshrl.u32 %v3442, 7
    %v3444 = vsub.s32 %v3441, %v3443
    %v3445 = vrot.slane %v3431, %v3444
    %v3446 = vcombine.low %v3438, %v3445
    %v3448 = vmul.f32 %v3236, %v3446
    %v3450 = vlaneseq
    %v3451 = vshrl.u32 %v3450, 7
    %v3452 = vsub.s32 0, %v3451
    %v3453 = vrot.slane %v3448, %v3452
    %v3454 = vlaneseq
    %v3455 = vshrl.u32 %v3454, 7
    %v3456 = vsub.s32 1, %v3455
    %v3457 = vrot.slane %v3448, %v3456
    %v3458 = vlaneseq
    %v3459 = vshrl.u32 %v3458, 7
    %v3460 = vsub.s32 2, %v3459
    %v3461 = vrot.slane %v3448, %v3460
    %v3462 = vlaneseq
    %v3463 = vshrl.u32 %v3462, 7
    %v3464 = vsub.s32 3, %v3463
    %v3465 = vrot.slane %v3448, %v3464
    %v3466 = vlaneseq
    %v3467 = vshrl.u32 %v3466, 7
    %v3468 = vsub.s32 4, %v3467
    %v3469 = vrot.slane %v3448, %v3468
    %v3470 = vlaneseq
    %v3471 = vshrl.u32 %v3470, 7
    %v3472 = vsub.s32 5, %v3471
    %v3473 = vrot.slane %v3448, %v3472
    %v3474 = vlaneseq
    %v3475 = vshrl.u32 %v3474, 7
    %v3476 = vsub.s32 6, %v3475
    %v3477 = vrot.slane %v3448, %v3476
    %v3478 = vlaneseq
    %v3479 = vshrl.u32 %v3478, 7
    %v3480 = vsub.s32 7, %v3479
    %v3481 = vrot.slane %v3448, %v3480
    %v3490 = vmul.f32 %v3286, %v3453
    %v3491 = vmul.f32 %v3287, %v3457
    %v3492 = vmul.f32 %v3288, %v3461
    %v3493 = vmul.f32 %v3289, %v3465
    %v3494 = vmul.f32 %v3290, %v3469
    %v3495 = vmul.f32 %v3291, %v3473
    %v3496 = vmul.f32 %v3292, %v3477
    %v3497 = vmul.f32 %v3293, %v3481
    %v3506 = vcombine.low %v3490, %v3491
    %v3507 = vcombine.low %v3492, %v3493
    %v3508 = vcombine.low %v3494, %v3495
    %v3509 = vcombine.low %v3496, %v3497
    %v3511 = vunpack.c.l.s4 1966171168
    %v3512 = vunpack.c.0.s8 %v3511
    %v3513 = vlaneseq
    %v3514 = vshrl.u32 %v3513, 7
    %v3515 = vsub.s32 %v3512, %v3514
    %v3516 = vrot.slane %v3506, %v3515
    %v3518 = vunpack.c.l.s4 1966171168
    %v3519 = vunpack.c.0.s8 %v3518
    %v3520 = vlaneseq
    %v3521 = vshrl.u32 %v3520, 7
    %v3522 = vsub.s32 %v3519, %v3521
    %v3523 = vrot.slane %v3507, %v3522
    %v3525 = vunpack.c.l.s4 1966171168
    %v3526 = vunpack.c.0.s8 %v3525
    %v3527 = vlaneseq
    %v3528 = vshrl.u32 %v3527, 7
    %v3529 = vsub.s32 %v3526, %v3528
    %v3530 = vrot.slane %v3508, %v3529
    %v3532 = vunpack.c.l.s4 1966171168
    %v3533 = vunpack.c.0.s8 %v3532
    %v3534 = vlaneseq
    %v3535 = vshrl.u32 %v3534, 7
    %v3536 = vsub.s32 %v3533, %v3535
    %v3537 = vrot.slane %v3509, %v3536
    %v3538 = vcombine.low %v3516, %v3523
    %v3539 = vcombine.low %v3530, %v3537
    %v3541 = vunpack.c.l.s4 1966171168
    %v3542 = vunpack.c.0.s8 %v3541
    %v3543 = vlaneseq
    %v3544 = vshrl.u32 %v3543, 7
    %v3545 = vsub.s32 %v3542, %v3544
    %v3546 = vrot.slane %v3538, %v3545
    %v3548 = vunpack.c.l.s4 1966171168
    %v3549 = vunpack.c.0.s8 %v3548
    %v3550 = vlaneseq
    %v3551 = vshrl.u32 %v3550, 7
    %v3552 = vsub.s32 %v3549, %v3551
    %v3553 = vrot.slane %v3539, %v3552
    %v3554 = vcombine.low %v3546, %v3553
    %v3556 = vsub.f32 %v3237, %v3554
    %v3557 = vmul.f32 %v2984, %v3453
    %v3558 = vmul.f32 %v2986, %v3457
    %v3559 = vmul.f32 %v3066, %v3461
    %v3560 = vmul.f32 %v3068, %v3465
    %v3561 = vmul.f32 %v3148, %v3469
    %v3562 = vmul.f32 %v3150, %v3473
    %v3563 = vmul.f32 %v3230, %v3477
    %v3564 = vmul.f32 %v3232, %v3481
    %v3566 = vlaneseq
    %v3567 = vshrl.u32 %v3566, 7
    %v3568 = vsub.s32 0, %v3567
    %v3569 = vrot.slane %v3556, %v3568
    %v3570 = vlaneseq
    %v3571 = vshrl.u32 %v3570, 7
    %v3572 = vsub.s32 1, %v3571
    %v3573 = vrot.slane %v3556, %v3572
    %v3574 = vlaneseq
    %v3575 = vshrl.u32 %v3574, 7
    %v3576 = vsub.s32 2, %v3575
    %v3577 = vrot.slane %v3556, %v3576
    %v3578 = vlaneseq
    %v3579 = vshrl.u32 %v3578, 7
    %v3580 = vsub.s32 3, %v3579
    %v3581 = vrot.slane %v3556, %v3580
    %v3582 = vlaneseq
    %v3583 = vshrl.u32 %v3582, 7
    %v3584 = vsub.s32 4, %v3583
    %v3585 = vrot.slane %v3556, %v3584
    %v3586 = vlaneseq
    %v3587 = vshrl.u32 %v3586, 7
    %v3588 = vsub.s32 5, %v3587
    %v3589 = vrot.slane %v3556, %v3588
    %v3590 = vlaneseq
    %v3591 = vshrl.u32 %v3590, 7
    %v3592 = vsub.s32 6, %v3591
    %v3593 = vrot.slane %v3556, %v3592
    %v3594 = vlaneseq
    %v3595 = vshrl.u32 %v3594, 7
    %v3596 = vsub.s32 7, %v3595
    %v3597 = vrot.slane %v3556, %v3596
    %v3606 = vadd.f32 %v3557, %v3569
    %v3607 = vadd.f32 %v3558, %v3573
    %v3608 = vadd.f32 %v3559, %v3577
    %v3609 = vadd.f32 %v3560, %v3581
    %v3610 = vadd.f32 %v3561, %v3585
    %v3611 = vadd.f32 %v3562, %v3589
    %v3612 = vadd.f32 %v3563, %v3593
    %v3613 = vadd.f32 %v3564, %v3597
    %vm3614 = vcmp.gt.f32.partialorder %v3606, 0.0
    %vm3615 = vcmp.gt.f32.partialorder %v3607, 0.0
    %vm3616 = vcmp.gt.f32.partialorder %v3608, 0.0
    %vm3617 = vcmp.gt.f32.partialorder %v3609, 0.0
    %vm3618 = vcmp.gt.f32.partialorder %v3610, 0.0
    %vm3619 = vcmp.gt.f32.partialorder %v3611, 0.0
    %vm3620 = vcmp.gt.f32.partialorder %v3612, 0.0
    %vm3621 = vcmp.gt.f32.partialorder %v3613, 0.0
    %v3622 = vmul.f32 %v3606, 0.2
    %v3623 = vmul.f32 %v3607, 0.2
    %v3624 = vmul.f32 %v3608, 0.2
    %v3625 = vmul.f32 %v3609, 0.2
    %v3626 = vmul.f32 %v3610, 0.2
    %v3627 = vmul.f32 %v3611, 0.2
    %v3628 = vmul.f32 %v3612, 0.2
    %v3629 = vmul.f32 %v3613, 0.2
    %v3630 = vsel %vm3614, %v3606, %v3622
    %v3631 = vsel %vm3615, %v3607, %v3623
    %v3632 = vsel %vm3616, %v3608, %v3624
    %v3633 = vsel %vm3617, %v3609, %v3625
    %v3634 = vsel %vm3618, %v3610, %v3626
    %v3635 = vsel %vm3619, %v3611, %v3627
    %v3636 = vsel %vm3620, %v3612, %v3628
    %v3637 = vsel %vm3621, %v3613, %v3629
    // Predicated region
    $region134: #{generator_forward.1} parent=1 // pred_check
      %p3638 = pneg %p221
    $region135: #{generator_forward.1} parent=1 // pred_check_branch
      %3640 = sbr.rel (%p3638) target = $region137
    $region136: #{generator_forward.1} parent=1 // pred_region
      %s3641 = scalar_lea.sflag [#allocation4], 1
      %s3642 = smul.u32 4, 128
      %s3643 = smul.u32 %s3642, 7
      %s3644 = sshll.u32 %s3643, 4
      %3645 = dma.done %s3641, %s3644
    $region137: #{generator_forward.1} parent=1 // pred_fallthru
      _
    %v3646 = vld [vmem:[#allocation3] sm:$0xff]
    %v3647 = vld [vmem:[#allocation3 + $0x8] sm:$0xff]
    %v3648 = vld [vmem:[#allocation3 + $0x10] sm:$0xff]
    %v3649 = vld [vmem:[#allocation3 + $0x18] sm:$0xf]
    %v3650 = vld [vmem:[#allocation3 + $0x1c] sm:$0xff]
    %v3651 = vld [vmem:[#allocation3 + $0x24] sm:$0xff]
    %v3652 = vld [vmem:[#allocation3 + $0x2c] sm:$0xff]
    %v3653 = vld [vmem:[#allocation3 + $0x34] sm:$0xf]
    %v3654 = vld [vmem:[#allocation3 + $0x38] sm:$0xff]
    %v3655 = vld [vmem:[#allocation3 + $0x40] sm:$0xff]
    %v3656 = vld [vmem:[#allocation3 + $0x48] sm:$0xff]
    %v3657 = vld [vmem:[#allocation3 + $0x50] sm:$0xf]
    %v3658 = vld [vmem:[#allocation3 + $0x54] sm:$0xff]
    %v3659 = vld [vmem:[#allocation3 + $0x5c] sm:$0xff]
    %v3660 = vld [vmem:[#allocation3 + $0x64] sm:$0xff]
    %v3661 = vld [vmem:[#allocation3 + $0x6c] sm:$0xf]
    %v3662 = vld [vmem:[#allocation3 + $0x70] sm:$0xff]
    %v3663 = vld [vmem:[#allocation3 + $0x78] sm:$0xff]
    %v3664 = vld [vmem:[#allocation3 + $0x80] sm:$0xff]
    %v3665 = vld [vmem:[#allocation3 + $0x88] sm:$0xf]
    %v3666 = vld [vmem:[#allocation3 + $0x8c] sm:$0xff]
    %v3667 = vld [vmem:[#allocation3 + $0x94] sm:$0xff]
    %v3668 = vld [vmem:[#allocation3 + $0x9c] sm:$0xff]
    %v3669 = vld [vmem:[#allocation3 + $0xa4] sm:$0xf]
    %v3670 = vld [vmem:[#allocation3 + $0xa8] sm:$0xff]
    %v3671 = vld [vmem:[#allocation3 + $0xb0] sm:$0xff]
    %v3672 = vld [vmem:[#allocation3 + $0xb8] sm:$0xff]
    %v3673 = vld [vmem:[#allocation3 + $0xc0] sm:$0xf]
    %v3674 = vld [vmem:[#allocation3 + $0xc4] sm:$0xff]
    %v3675 = vld [vmem:[#allocation3 + $0xcc] sm:$0xff]
    %v3676 = vld [vmem:[#allocation3 + $0xd4] sm:$0xff]
    %v3677 = vld [vmem:[#allocation3 + $0xdc] sm:$0xf]
    %v3678 = vld [vmem:[#allocation3 + $0xe0] sm:$0xff]
    %v3679 = vld [vmem:[#allocation3 + $0xe8] sm:$0xff]
    %v3680 = vld [vmem:[#allocation3 + $0xf0] sm:$0xff]
    %v3681 = vld [vmem:[#allocation3 + $0xf8] sm:$0xf]
    %v3682 = vld [vmem:[#allocation3 + $0xfc] sm:$0xff]
    %v3683 = vld [vmem:[#allocation3 + $0x104] sm:$0xff]
    %v3684 = vld [vmem:[#allocation3 + $0x10c] sm:$0xff]
    %v3685 = vld [vmem:[#allocation3 + $0x114] sm:$0xf]
    %v3686 = vld [vmem:[#allocation3 + $0x118] sm:$0xff]
    %v3687 = vld [vmem:[#allocation3 + $0x120] sm:$0xff]
    %v3688 = vld [vmem:[#allocation3 + $0x128] sm:$0xff]
    %v3689 = vld [vmem:[#allocation3 + $0x130] sm:$0xf]
    %v3690 = vld [vmem:[#allocation3 + $0x134] sm:$0xff]
    %v3691 = vld [vmem:[#allocation3 + $0x13c] sm:$0xff]
    %v3692 = vld [vmem:[#allocation3 + $0x144] sm:$0xff]
    %v3693 = vld [vmem:[#allocation3 + $0x14c] sm:$0xf]
    %v3694 = vld [vmem:[#allocation3 + $0x150] sm:$0xff]
    %v3695 = vld [vmem:[#allocation3 + $0x158] sm:$0xff]
    %v3696 = vld [vmem:[#allocation3 + $0x160] sm:$0xff]
    %v3697 = vld [vmem:[#allocation3 + $0x168] sm:$0xf]
    %v3698 = vld [vmem:[#allocation3 + $0x16c] sm:$0xff]
    %v3699 = vld [vmem:[#allocation3 + $0x174] sm:$0xff]
    %v3700 = vld [vmem:[#allocation3 + $0x17c] sm:$0xff]
    %v3701 = vld [vmem:[#allocation3 + $0x184] sm:$0xf]
    %v3702 = vld [vmem:[#allocation3 + $0x188] sm:$0xff]
    %v3703 = vld [vmem:[#allocation3 + $0x190] sm:$0xff]
    %v3704 = vld [vmem:[#allocation3 + $0x198] sm:$0xff]
    %v3705 = vld [vmem:[#allocation3 + $0x1a0] sm:$0xf]
    %v3706 = vld [vmem:[#allocation3 + $0x1a4] sm:$0xff]
    %v3707 = vld [vmem:[#allocation3 + $0x1ac] sm:$0xff]
    %v3708 = vld [vmem:[#allocation3 + $0x1b4] sm:$0xff]
    %v3709 = vld [vmem:[#allocation3 + $0x1bc] sm:$0xf]
    %v3710 = vld [vmem:[#allocation3 + $0x1c0] sm:$0xff]
    %v3711 = vld [vmem:[#allocation3 + $0x1c8] sm:$0xff]
    %v3712 = vld [vmem:[#allocation3 + $0x1d0] sm:$0xff]
    %v3713 = vld [vmem:[#allocation3 + $0x1d8] sm:$0xf]
    %v3714 = vld [vmem:[#allocation3 + $0x1dc] sm:$0xff]
    %v3715 = vld [vmem:[#allocation3 + $0x1e4] sm:$0xff]
    %v3716 = vld [vmem:[#allocation3 + $0x1ec] sm:$0xff]
    %v3717 = vld [vmem:[#allocation3 + $0x1f4] sm:$0xf]
    %v3718 = vld [vmem:[#allocation3 + $0x1f8] sm:$0xff]
    %v3719 = vld [vmem:[#allocation3 + $0x200] sm:$0xff]
    %v3720 = vld [vmem:[#allocation3 + $0x208] sm:$0xff]
    %v3721 = vld [vmem:[#allocation3 + $0x210] sm:$0xf]
    %v3722 = vld [vmem:[#allocation3 + $0x214] sm:$0xff]
    %v3723 = vld [vmem:[#allocation3 + $0x21c] sm:$0xff]
    %v3724 = vld [vmem:[#allocation3 + $0x224] sm:$0xff]
    %v3725 = vld [vmem:[#allocation3 + $0x22c] sm:$0xf]
    %v3726 = vld [vmem:[#allocation3 + $0x230] sm:$0xff]
    %v3727 = vld [vmem:[#allocation3 + $0x238] sm:$0xff]
    %v3728 = vld [vmem:[#allocation3 + $0x240] sm:$0xff]
    %v3729 = vld [vmem:[#allocation3 + $0x248] sm:$0xf]
    %v3730 = vld [vmem:[#allocation3 + $0x24c] sm:$0xff]
    %v3731 = vld [vmem:[#allocation3 + $0x254] sm:$0xff]
    %v3732 = vld [vmem:[#allocation3 + $0x25c] sm:$0xff]
    %v3733 = vld [vmem:[#allocation3 + $0x264] sm:$0xf]
    %v3734 = vld [vmem:[#allocation3 + $0x268] sm:$0xff]
    %v3735 = vld [vmem:[#allocation3 + $0x270] sm:$0xff]
    %v3736 = vld [vmem:[#allocation3 + $0x278] sm:$0xff]
    %v3737 = vld [vmem:[#allocation3 + $0x280] sm:$0xf]
    %v3738 = vld [vmem:[#allocation3 + $0x284] sm:$0xff]
    %v3739 = vld [vmem:[#allocation3 + $0x28c] sm:$0xff]
    %v3740 = vld [vmem:[#allocation3 + $0x294] sm:$0xff]
    %v3741 = vld [vmem:[#allocation3 + $0x29c] sm:$0xf]
    %v3742 = vld [vmem:[#allocation3 + $0x2a0] sm:$0xff]
    %v3743 = vld [vmem:[#allocation3 + $0x2a8] sm:$0xff]
    %v3744 = vld [vmem:[#allocation3 + $0x2b0] sm:$0xff]
    %v3745 = vld [vmem:[#allocation3 + $0x2b8] sm:$0xf]
    %v3746 = vld [vmem:[#allocation3 + $0x2bc] sm:$0xff]
    %v3747 = vld [vmem:[#allocation3 + $0x2c4] sm:$0xff]
    %v3748 = vld [vmem:[#allocation3 + $0x2cc] sm:$0xff]
    %v3749 = vld [vmem:[#allocation3 + $0x2d4] sm:$0xf]
    %v3750 = vld [vmem:[#allocation3 + $0x2d8] sm:$0xff]
    %v3751 = vld [vmem:[#allocation3 + $0x2e0] sm:$0xff]
    %v3752 = vld [vmem:[#allocation3 + $0x2e8] sm:$0xff]
    %v3753 = vld [vmem:[#allocation3 + $0x2f0] sm:$0xf]
    %v3754 = vld [vmem:[#allocation3 + $0x2f4] sm:$0xff]
    %v3755 = vld [vmem:[#allocation3 + $0x2fc] sm:$0xff]
    %v3756 = vld [vmem:[#allocation3 + $0x304] sm:$0xff]
    %v3757 = vld [vmem:[#allocation3 + $0x30c] sm:$0xf]
    %v3758 = vld [vmem:[#allocation3 + $0x310] sm:$0xff]
    %v3759 = vld [vmem:[#allocation3 + $0x318] sm:$0xff]
    %v3760 = vld [vmem:[#allocation3 + $0x320] sm:$0xff]
    %v3761 = vld [vmem:[#allocation3 + $0x328] sm:$0xf]
    %v3762 = vld [vmem:[#allocation3 + $0x32c] sm:$0xff]
    %v3763 = vld [vmem:[#allocation3 + $0x334] sm:$0xff]
    %v3764 = vld [vmem:[#allocation3 + $0x33c] sm:$0xff]
    %v3765 = vld [vmem:[#allocation3 + $0x344] sm:$0xf]
    %v3766 = vld [vmem:[#allocation3 + $0x348] sm:$0xff]
    %v3767 = vld [vmem:[#allocation3 + $0x350] sm:$0xff]
    %v3768 = vld [vmem:[#allocation3 + $0x358] sm:$0xff]
    %v3769 = vld [vmem:[#allocation3 + $0x360] sm:$0xf]
    %v3770 = vld [vmem:[#allocation3 + $0x364] sm:$0xff]
    %v3771 = vld [vmem:[#allocation3 + $0x36c] sm:$0xff]
    %v3772 = vld [vmem:[#allocation3 + $0x374] sm:$0xff]
    %v3773 = vld [vmem:[#allocation3 + $0x37c] sm:$0xf]
    %v3774 = vld [vmem:[#allocation3 + $0x380] sm:$0xff]
    %v3775 = vld [vmem:[#allocation3 + $0x388] sm:$0xff]
    %v3776 = vld [vmem:[#allocation3 + $0x390] sm:$0xff]
    %v3777 = vld [vmem:[#allocation3 + $0x398] sm:$0xf]
    %v3778 = vld [vmem:[#allocation3 + $0x39c] sm:$0xff]
    %v3779 = vld [vmem:[#allocation3 + $0x3a4] sm:$0xff]
    %v3780 = vld [vmem:[#allocation3 + $0x3ac] sm:$0xff]
    %v3781 = vld [vmem:[#allocation3 + $0x3b4] sm:$0xf]
    %v3782 = vld [vmem:[#allocation3 + $0x3b8] sm:$0xff]
    %v3783 = vld [vmem:[#allocation3 + $0x3c0] sm:$0xff]
    %v3784 = vld [vmem:[#allocation3 + $0x3c8] sm:$0xff]
    %v3785 = vld [vmem:[#allocation3 + $0x3d0] sm:$0xf]
    %v3786 = vld [vmem:[#allocation3 + $0x3d4] sm:$0xff]
    %v3787 = vld [vmem:[#allocation3 + $0x3dc] sm:$0xff]
    %v3788 = vld [vmem:[#allocation3 + $0x3e4] sm:$0xff]
    %v3789 = vld [vmem:[#allocation3 + $0x3ec] sm:$0xf]
    %v3790 = vld [vmem:[#allocation3 + $0x3f0] sm:$0xff]
    %v3791 = vld [vmem:[#allocation3 + $0x3f8] sm:$0xff]
    %v3792 = vld [vmem:[#allocation3 + $0x400] sm:$0xff]
    %v3793 = vld [vmem:[#allocation3 + $0x408] sm:$0xf]
    %v3794 = vld [vmem:[#allocation3 + $0x40c] sm:$0xff]
    %v3795 = vld [vmem:[#allocation3 + $0x414] sm:$0xff]
    %v3796 = vld [vmem:[#allocation3 + $0x41c] sm:$0xff]
    %v3797 = vld [vmem:[#allocation3 + $0x424] sm:$0xf]
    %v3798 = vld [vmem:[#allocation3 + $0x428] sm:$0xff]
    %v3799 = vld [vmem:[#allocation3 + $0x430] sm:$0xff]
    %v3800 = vld [vmem:[#allocation3 + $0x438] sm:$0xff]
    %v3801 = vld [vmem:[#allocation3 + $0x440] sm:$0xf]
    %v3802 = vld [vmem:[#allocation3 + $0x444] sm:$0xff]
    %v3803 = vld [vmem:[#allocation3 + $0x44c] sm:$0xff]
    %v3804 = vld [vmem:[#allocation3 + $0x454] sm:$0xff]
    %v3805 = vld [vmem:[#allocation3 + $0x45c] sm:$0xf]
    %v3806 = vld [vmem:[#allocation3 + $0x460] sm:$0xff]
    %v3807 = vld [vmem:[#allocation3 + $0x468] sm:$0xff]
    %v3808 = vld [vmem:[#allocation3 + $0x470] sm:$0xff]
    %v3809 = vld [vmem:[#allocation3 + $0x478] sm:$0xf]
    %v3810 = vld [vmem:[#allocation3 + $0x47c] sm:$0xff]
    %v3811 = vld [vmem:[#allocation3 + $0x484] sm:$0xff]
    %v3812 = vld [vmem:[#allocation3 + $0x48c] sm:$0xff]
    %v3813 = vld [vmem:[#allocation3 + $0x494] sm:$0xf]
    %v3814 = vld [vmem:[#allocation3 + $0x498] sm:$0xff]
    %v3815 = vld [vmem:[#allocation3 + $0x4a0] sm:$0xff]
    %v3816 = vld [vmem:[#allocation3 + $0x4a8] sm:$0xff]
    %v3817 = vld [vmem:[#allocation3 + $0x4b0] sm:$0xf]
    %v3818 = vld [vmem:[#allocation3 + $0x4b4] sm:$0xff]
    %v3819 = vld [vmem:[#allocation3 + $0x4bc] sm:$0xff]
    %v3820 = vld [vmem:[#allocation3 + $0x4c4] sm:$0xff]
    %v3821 = vld [vmem:[#allocation3 + $0x4cc] sm:$0xf]
    %v3822 = vld [vmem:[#allocation3 + $0x4d0] sm:$0xff]
    %v3823 = vld [vmem:[#allocation3 + $0x4d8] sm:$0xff]
    %v3824 = vld [vmem:[#allocation3 + $0x4e0] sm:$0xff]
    %v3825 = vld [vmem:[#allocation3 + $0x4e8] sm:$0xf]
    %v3826 = vld [vmem:[#allocation3 + $0x4ec] sm:$0xff]
    %v3827 = vld [vmem:[#allocation3 + $0x4f4] sm:$0xff]
    %v3828 = vld [vmem:[#allocation3 + $0x4fc] sm:$0xff]
    %v3829 = vld [vmem:[#allocation3 + $0x504] sm:$0xf]
    %v3830 = vld [vmem:[#allocation3 + $0x508] sm:$0xff]
    %v3831 = vld [vmem:[#allocation3 + $0x510] sm:$0xff]
    %v3832 = vld [vmem:[#allocation3 + $0x518] sm:$0xff]
    %v3833 = vld [vmem:[#allocation3 + $0x520] sm:$0xf]
    %v3834 = vld [vmem:[#allocation3 + $0x524] sm:$0xff]
    %v3835 = vld [vmem:[#allocation3 + $0x52c] sm:$0xff]
    %v3836 = vld [vmem:[#allocation3 + $0x534] sm:$0xff]
    %v3837 = vld [vmem:[#allocation3 + $0x53c] sm:$0xf]
    %v3838 = vld [vmem:[#allocation3 + $0x540] sm:$0xff]
    %v3839 = vld [vmem:[#allocation3 + $0x548] sm:$0xff]
    %v3840 = vld [vmem:[#allocation3 + $0x550] sm:$0xff]
    %v3841 = vld [vmem:[#allocation3 + $0x558] sm:$0xf]
    %v3842 = vld [vmem:[#allocation3 + $0x55c] sm:$0xff]
    %v3843 = vld [vmem:[#allocation3 + $0x564] sm:$0xff]
    %v3844 = vld [vmem:[#allocation3 + $0x56c] sm:$0xff]
    %v3845 = vld [vmem:[#allocation3 + $0x574] sm:$0xf]
    %v3846 = vld [vmem:[#allocation3 + $0x578] sm:$0xff]
    %v3847 = vld [vmem:[#allocation3 + $0x580] sm:$0xff]
    %v3848 = vld [vmem:[#allocation3 + $0x588] sm:$0xff]
    %v3849 = vld [vmem:[#allocation3 + $0x590] sm:$0xf]
    %v3850 = vld [vmem:[#allocation3 + $0x594] sm:$0xff]
    %v3851 = vld [vmem:[#allocation3 + $0x59c] sm:$0xff]
    %v3852 = vld [vmem:[#allocation3 + $0x5a4] sm:$0xff]
    %v3853 = vld [vmem:[#allocation3 + $0x5ac] sm:$0xf]
    %v3854 = vld [vmem:[#allocation3 + $0x5b0] sm:$0xff]
    %v3855 = vld [vmem:[#allocation3 + $0x5b8] sm:$0xff]
    %v3856 = vld [vmem:[#allocation3 + $0x5c0] sm:$0xff]
    %v3857 = vld [vmem:[#allocation3 + $0x5c8] sm:$0xf]
    %v3858 = vld [vmem:[#allocation3 + $0x5cc] sm:$0xff]
    %v3859 = vld [vmem:[#allocation3 + $0x5d4] sm:$0xff]
    %v3860 = vld [vmem:[#allocation3 + $0x5dc] sm:$0xff]
    %v3861 = vld [vmem:[#allocation3 + $0x5e4] sm:$0xf]
    %v3862 = vld [vmem:[#allocation3 + $0x5e8] sm:$0xff]
    %v3863 = vld [vmem:[#allocation3 + $0x5f0] sm:$0xff]
    %v3864 = vld [vmem:[#allocation3 + $0x5f8] sm:$0xff]
    %v3865 = vld [vmem:[#allocation3 + $0x600] sm:$0xf]
    %v3866 = vld [vmem:[#allocation3 + $0x604] sm:$0xff]
    %v3867 = vld [vmem:[#allocation3 + $0x60c] sm:$0xff]
    %v3868 = vld [vmem:[#allocation3 + $0x614] sm:$0xff]
    %v3869 = vld [vmem:[#allocation3 + $0x61c] sm:$0xf]
    %v3870 = vld [vmem:[#allocation3 + $0x620] sm:$0xff]
    %v3871 = vld [vmem:[#allocation3 + $0x628] sm:$0xff]
    %v3872 = vld [vmem:[#allocation3 + $0x630] sm:$0xff]
    %v3873 = vld [vmem:[#allocation3 + $0x638] sm:$0xf]
    %v3874 = vld [vmem:[#allocation3 + $0x63c] sm:$0xff]
    %v3875 = vld [vmem:[#allocation3 + $0x644] sm:$0xff]
    %v3876 = vld [vmem:[#allocation3 + $0x64c] sm:$0xff]
    %v3877 = vld [vmem:[#allocation3 + $0x654] sm:$0xf]
    %v3878 = vld [vmem:[#allocation3 + $0x658] sm:$0xff]
    %v3879 = vld [vmem:[#allocation3 + $0x660] sm:$0xff]
    %v3880 = vld [vmem:[#allocation3 + $0x668] sm:$0xff]
    %v3881 = vld [vmem:[#allocation3 + $0x670] sm:$0xf]
    %v3882 = vld [vmem:[#allocation3 + $0x674] sm:$0xff]
    %v3883 = vld [vmem:[#allocation3 + $0x67c] sm:$0xff]
    %v3884 = vld [vmem:[#allocation3 + $0x684] sm:$0xff]
    %v3885 = vld [vmem:[#allocation3 + $0x68c] sm:$0xf]
    %v3886 = vld [vmem:[#allocation3 + $0x690] sm:$0xff]
    %v3887 = vld [vmem:[#allocation3 + $0x698] sm:$0xff]
    %v3888 = vld [vmem:[#allocation3 + $0x6a0] sm:$0xff]
    %v3889 = vld [vmem:[#allocation3 + $0x6a8] sm:$0xf]
    %v3890 = vld [vmem:[#allocation3 + $0x6ac] sm:$0xff]
    %v3891 = vld [vmem:[#allocation3 + $0x6b4] sm:$0xff]
    %v3892 = vld [vmem:[#allocation3 + $0x6bc] sm:$0xff]
    %v3893 = vld [vmem:[#allocation3 + $0x6c4] sm:$0xf]
    %v3894 = vld [vmem:[#allocation3 + $0x6c8] sm:$0xff]
    %v3895 = vld [vmem:[#allocation3 + $0x6d0] sm:$0xff]
    %v3896 = vld [vmem:[#allocation3 + $0x6d8] sm:$0xff]
    %v3897 = vld [vmem:[#allocation3 + $0x6e0] sm:$0xf]
    %v3898 = vld [vmem:[#allocation3 + $0x6e4] sm:$0xff]
    %v3899 = vld [vmem:[#allocation3 + $0x6ec] sm:$0xff]
    %v3900 = vld [vmem:[#allocation3 + $0x6f4] sm:$0xff]
    %v3901 = vld [vmem:[#allocation3 + $0x6fc] sm:$0xf]
    %v3902 = vld [vmem:[#allocation3 + $0x700] sm:$0xff]
    %v3903 = vld [vmem:[#allocation3 + $0x708] sm:$0xff]
    %v3904 = vld [vmem:[#allocation3 + $0x710] sm:$0xff]
    %v3905 = vld [vmem:[#allocation3 + $0x718] sm:$0xf]
    %v3906 = vld [vmem:[#allocation3 + $0x71c] sm:$0xff]
    %v3907 = vld [vmem:[#allocation3 + $0x724] sm:$0xff]
    %v3908 = vld [vmem:[#allocation3 + $0x72c] sm:$0xff]
    %v3909 = vld [vmem:[#allocation3 + $0x734] sm:$0xf]
    %v3910 = vld [vmem:[#allocation3 + $0x738] sm:$0xff]
    %v3911 = vld [vmem:[#allocation3 + $0x740] sm:$0xff]
    %v3912 = vld [vmem:[#allocation3 + $0x748] sm:$0xff]
    %v3913 = vld [vmem:[#allocation3 + $0x750] sm:$0xf]
    %v3914 = vld [vmem:[#allocation3 + $0x754] sm:$0xff]
    %v3915 = vld [vmem:[#allocation3 + $0x75c] sm:$0xff]
    %v3916 = vld [vmem:[#allocation3 + $0x764] sm:$0xff]
    %v3917 = vld [vmem:[#allocation3 + $0x76c] sm:$0xf]
    %v3918 = vld [vmem:[#allocation3 + $0x770] sm:$0xff]
    %v3919 = vld [vmem:[#allocation3 + $0x778] sm:$0xff]
    %v3920 = vld [vmem:[#allocation3 + $0x780] sm:$0xff]
    %v3921 = vld [vmem:[#allocation3 + $0x788] sm:$0xf]
    %v3922 = vld [vmem:[#allocation3 + $0x78c] sm:$0xff]
    %v3923 = vld [vmem:[#allocation3 + $0x794] sm:$0xff]
    %v3924 = vld [vmem:[#allocation3 + $0x79c] sm:$0xff]
    %v3925 = vld [vmem:[#allocation3 + $0x7a4] sm:$0xf]
    %v3926 = vld [vmem:[#allocation3 + $0x7a8] sm:$0xff]
    %v3927 = vld [vmem:[#allocation3 + $0x7b0] sm:$0xff]
    %v3928 = vld [vmem:[#allocation3 + $0x7b8] sm:$0xff]
    %v3929 = vld [vmem:[#allocation3 + $0x7c0] sm:$0xf]
    %v3930 = vld [vmem:[#allocation3 + $0x7c4] sm:$0xff]
    %v3931 = vld [vmem:[#allocation3 + $0x7cc] sm:$0xff]
    %v3932 = vld [vmem:[#allocation3 + $0x7d4] sm:$0xff]
    %v3933 = vld [vmem:[#allocation3 + $0x7dc] sm:$0xf]
    %v3934 = vld [vmem:[#allocation3 + $0x7e0] sm:$0xff]
    %v3935 = vld [vmem:[#allocation3 + $0x7e8] sm:$0xff]
    %v3936 = vld [vmem:[#allocation3 + $0x7f0] sm:$0xff]
    %v3937 = vld [vmem:[#allocation3 + $0x7f8] sm:$0xf]
    %v3938 = vld [vmem:[#allocation3 + $0x7fc] sm:$0xff]
    %v3939 = vld [vmem:[#allocation3 + $0x804] sm:$0xff]
    %v3940 = vld [vmem:[#allocation3 + $0x80c] sm:$0xff]
    %v3941 = vld [vmem:[#allocation3 + $0x814] sm:$0xf]
    %v3942 = vld [vmem:[#allocation3 + $0x818] sm:$0xff]
    %v3943 = vld [vmem:[#allocation3 + $0x820] sm:$0xff]
    %v3944 = vld [vmem:[#allocation3 + $0x828] sm:$0xff]
    %v3945 = vld [vmem:[#allocation3 + $0x830] sm:$0xf]
    %v3946 = vld [vmem:[#allocation3 + $0x834] sm:$0xff]
    %v3947 = vld [vmem:[#allocation3 + $0x83c] sm:$0xff]
    %v3948 = vld [vmem:[#allocation3 + $0x844] sm:$0xff]
    %v3949 = vld [vmem:[#allocation3 + $0x84c] sm:$0xf]
    %v3950 = vld [vmem:[#allocation3 + $0x850] sm:$0xff]
    %v3951 = vld [vmem:[#allocation3 + $0x858] sm:$0xff]
    %v3952 = vld [vmem:[#allocation3 + $0x860] sm:$0xff]
    %v3953 = vld [vmem:[#allocation3 + $0x868] sm:$0xf]
    %v3954 = vld [vmem:[#allocation3 + $0x86c] sm:$0xff]
    %v3955 = vld [vmem:[#allocation3 + $0x874] sm:$0xff]
    %v3956 = vld [vmem:[#allocation3 + $0x87c] sm:$0xff]
    %v3957 = vld [vmem:[#allocation3 + $0x884] sm:$0xf]
    %v3958 = vld [vmem:[#allocation3 + $0x888] sm:$0xff]
    %v3959 = vld [vmem:[#allocation3 + $0x890] sm:$0xff]
    %v3960 = vld [vmem:[#allocation3 + $0x898] sm:$0xff]
    %v3961 = vld [vmem:[#allocation3 + $0x8a0] sm:$0xf]
    %v3962 = vld [vmem:[#allocation3 + $0x8a4] sm:$0xff]
    %v3963 = vld [vmem:[#allocation3 + $0x8ac] sm:$0xff]
    %v3964 = vld [vmem:[#allocation3 + $0x8b4] sm:$0xff]
    %v3965 = vld [vmem:[#allocation3 + $0x8bc] sm:$0xf]
    %v3966 = vld [vmem:[#allocation3 + $0x8c0] sm:$0xff]
    %v3967 = vld [vmem:[#allocation3 + $0x8c8] sm:$0xff]
    %v3968 = vld [vmem:[#allocation3 + $0x8d0] sm:$0xff]
    %v3969 = vld [vmem:[#allocation3 + $0x8d8] sm:$0xf]
    %v3970 = vld [vmem:[#allocation3 + $0x8dc] sm:$0xff]
    %v3971 = vld [vmem:[#allocation3 + $0x8e4] sm:$0xff]
    %v3972 = vld [vmem:[#allocation3 + $0x8ec] sm:$0xff]
    %v3973 = vld [vmem:[#allocation3 + $0x8f4] sm:$0xf]
    %v3974 = vld [vmem:[#allocation3 + $0x8f8] sm:$0xff]
    %v3975 = vld [vmem:[#allocation3 + $0x900] sm:$0xff]
    %v3976 = vld [vmem:[#allocation3 + $0x908] sm:$0xff]
    %v3977 = vld [vmem:[#allocation3 + $0x910] sm:$0xf]
    %v3978 = vld [vmem:[#allocation3 + $0x914] sm:$0xff]
    %v3979 = vld [vmem:[#allocation3 + $0x91c] sm:$0xff]
    %v3980 = vld [vmem:[#allocation3 + $0x924] sm:$0xff]
    %v3981 = vld [vmem:[#allocation3 + $0x92c] sm:$0xf]
    %v3982 = vld [vmem:[#allocation3 + $0x930] sm:$0xff]
    %v3983 = vld [vmem:[#allocation3 + $0x938] sm:$0xff]
    %v3984 = vld [vmem:[#allocation3 + $0x940] sm:$0xff]
    %v3985 = vld [vmem:[#allocation3 + $0x948] sm:$0xf]
    %v3986 = vld [vmem:[#allocation3 + $0x94c] sm:$0xff]
    %v3987 = vld [vmem:[#allocation3 + $0x954] sm:$0xff]
    %v3988 = vld [vmem:[#allocation3 + $0x95c] sm:$0xff]
    %v3989 = vld [vmem:[#allocation3 + $0x964] sm:$0xf]
    %v3990 = vld [vmem:[#allocation3 + $0x968] sm:$0xff]
    %v3991 = vld [vmem:[#allocation3 + $0x970] sm:$0xff]
    %v3992 = vld [vmem:[#allocation3 + $0x978] sm:$0xff]
    %v3993 = vld [vmem:[#allocation3 + $0x980] sm:$0xf]
    %v3994 = vld [vmem:[#allocation3 + $0x984] sm:$0xff]
    %v3995 = vld [vmem:[#allocation3 + $0x98c] sm:$0xff]
    %v3996 = vld [vmem:[#allocation3 + $0x994] sm:$0xff]
    %v3997 = vld [vmem:[#allocation3 + $0x99c] sm:$0xf]
    %v3998 = vld [vmem:[#allocation3 + $0x9a0] sm:$0xff]
    %v3999 = vld [vmem:[#allocation3 + $0x9a8] sm:$0xff]
    %v4000 = vld [vmem:[#allocation3 + $0x9b0] sm:$0xff]
    %v4001 = vld [vmem:[#allocation3 + $0x9b8] sm:$0xf]
    %v4002 = vld [vmem:[#allocation3 + $0x9bc] sm:$0xff]
    %v4003 = vld [vmem:[#allocation3 + $0x9c4] sm:$0xff]
    %v4004 = vld [vmem:[#allocation3 + $0x9cc] sm:$0xff]
    %v4005 = vld [vmem:[#allocation3 + $0x9d4] sm:$0xf]
    %v4006 = vld [vmem:[#allocation3 + $0x9d8] sm:$0xff]
    %v4007 = vld [vmem:[#allocation3 + $0x9e0] sm:$0xff]
    %v4008 = vld [vmem:[#allocation3 + $0x9e8] sm:$0xff]
    %v4009 = vld [vmem:[#allocation3 + $0x9f0] sm:$0xf]
    %v4010 = vld [vmem:[#allocation3 + $0x9f4] sm:$0xff]
    %v4011 = vld [vmem:[#allocation3 + $0x9fc] sm:$0xff]
    %v4012 = vld [vmem:[#allocation3 + $0xa04] sm:$0xff]
    %v4013 = vld [vmem:[#allocation3 + $0xa0c] sm:$0xf]
    %v4014 = vld [vmem:[#allocation3 + $0xa10] sm:$0xff]
    %v4015 = vld [vmem:[#allocation3 + $0xa18] sm:$0xff]
    %v4016 = vld [vmem:[#allocation3 + $0xa20] sm:$0xff]
    %v4017 = vld [vmem:[#allocation3 + $0xa28] sm:$0xf]
    %v4018 = vld [vmem:[#allocation3 + $0xa2c] sm:$0xff]
    %v4019 = vld [vmem:[#allocation3 + $0xa34] sm:$0xff]
    %v4020 = vld [vmem:[#allocation3 + $0xa3c] sm:$0xff]
    %v4021 = vld [vmem:[#allocation3 + $0xa44] sm:$0xf]
    %v4022 = vld [vmem:[#allocation3 + $0xa48] sm:$0xff]
    %v4023 = vld [vmem:[#allocation3 + $0xa50] sm:$0xff]
    %v4024 = vld [vmem:[#allocation3 + $0xa58] sm:$0xff]
    %v4025 = vld [vmem:[#allocation3 + $0xa60] sm:$0xf]
    %v4026 = vld [vmem:[#allocation3 + $0xa64] sm:$0xff]
    %v4027 = vld [vmem:[#allocation3 + $0xa6c] sm:$0xff]
    %v4028 = vld [vmem:[#allocation3 + $0xa74] sm:$0xff]
    %v4029 = vld [vmem:[#allocation3 + $0xa7c] sm:$0xf]
    %v4030 = vld [vmem:[#allocation3 + $0xa80] sm:$0xff]
    %v4031 = vld [vmem:[#allocation3 + $0xa88] sm:$0xff]
    %v4032 = vld [vmem:[#allocation3 + $0xa90] sm:$0xff]
    %v4033 = vld [vmem:[#allocation3 + $0xa98] sm:$0xf]
    %v4034 = vld [vmem:[#allocation3 + $0xa9c] sm:$0xff]
    %v4035 = vld [vmem:[#allocation3 + $0xaa4] sm:$0xff]
    %v4036 = vld [vmem:[#allocation3 + $0xaac] sm:$0xff]
    %v4037 = vld [vmem:[#allocation3 + $0xab4] sm:$0xf]
    %v4038 = vld [vmem:[#allocation3 + $0xab8] sm:$0xff]
    %v4039 = vld [vmem:[#allocation3 + $0xac0] sm:$0xff]
    %v4040 = vld [vmem:[#allocation3 + $0xac8] sm:$0xff]
    %v4041 = vld [vmem:[#allocation3 + $0xad0] sm:$0xf]
    %v4042 = vld [vmem:[#allocation3 + $0xad4] sm:$0xff]
    %v4043 = vld [vmem:[#allocation3 + $0xadc] sm:$0xff]
    %v4044 = vld [vmem:[#allocation3 + $0xae4] sm:$0xff]
    %v4045 = vld [vmem:[#allocation3 + $0xaec] sm:$0xf]
    %v4046 = vld [vmem:[#allocation3 + $0xaf0] sm:$0xff]
    %v4047 = vld [vmem:[#allocation3 + $0xaf8] sm:$0xff]
    %v4048 = vld [vmem:[#allocation3 + $0xb00] sm:$0xff]
    %v4049 = vld [vmem:[#allocation3 + $0xb08] sm:$0xf]
    %v4050 = vld [vmem:[#allocation3 + $0xb0c] sm:$0xff]
    %v4051 = vld [vmem:[#allocation3 + $0xb14] sm:$0xff]
    %v4052 = vld [vmem:[#allocation3 + $0xb1c] sm:$0xff]
    %v4053 = vld [vmem:[#allocation3 + $0xb24] sm:$0xf]
    %v4054 = vld [vmem:[#allocation3 + $0xb28] sm:$0xff]
    %v4055 = vld [vmem:[#allocation3 + $0xb30] sm:$0xff]
    %v4056 = vld [vmem:[#allocation3 + $0xb38] sm:$0xff]
    %v4057 = vld [vmem:[#allocation3 + $0xb40] sm:$0xf]
    %v4058 = vld [vmem:[#allocation3 + $0xb44] sm:$0xff]
    %v4059 = vld [vmem:[#allocation3 + $0xb4c] sm:$0xff]
    %v4060 = vld [vmem:[#allocation3 + $0xb54] sm:$0xff]
    %v4061 = vld [vmem:[#allocation3 + $0xb5c] sm:$0xf]
    %v4062 = vld [vmem:[#allocation3 + $0xb60] sm:$0xff]
    %v4063 = vld [vmem:[#allocation3 + $0xb68] sm:$0xff]
    %v4064 = vld [vmem:[#allocation3 + $0xb70] sm:$0xff]
    %v4065 = vld [vmem:[#allocation3 + $0xb78] sm:$0xf]
    %v4066 = vld [vmem:[#allocation3 + $0xb7c] sm:$0xff]
    %v4067 = vld [vmem:[#allocation3 + $0xb84] sm:$0xff]
    %v4068 = vld [vmem:[#allocation3 + $0xb8c] sm:$0xff]
    %v4069 = vld [vmem:[#allocation3 + $0xb94] sm:$0xf]
    %v4070 = vld [vmem:[#allocation3 + $0xb98] sm:$0xff]
    %v4071 = vld [vmem:[#allocation3 + $0xba0] sm:$0xff]
    %v4072 = vld [vmem:[#allocation3 + $0xba8] sm:$0xff]
    %v4073 = vld [vmem:[#allocation3 + $0xbb0] sm:$0xf]
    %v4074 = vld [vmem:[#allocation3 + $0xbb4] sm:$0xff]
    %v4075 = vld [vmem:[#allocation3 + $0xbbc] sm:$0xff]
    %v4076 = vld [vmem:[#allocation3 + $0xbc4] sm:$0xff]
    %v4077 = vld [vmem:[#allocation3 + $0xbcc] sm:$0xf]
    %v4078 = vld [vmem:[#allocation3 + $0xbd0] sm:$0xff]
    %v4079 = vld [vmem:[#allocation3 + $0xbd8] sm:$0xff]
    %v4080 = vld [vmem:[#allocation3 + $0xbe0] sm:$0xff]
    %v4081 = vld [vmem:[#allocation3 + $0xbe8] sm:$0xf]
    %v4082 = vld [vmem:[#allocation3 + $0xbec] sm:$0xff]
    %v4083 = vld [vmem:[#allocation3 + $0xbf4] sm:$0xff]
    %v4084 = vld [vmem:[#allocation3 + $0xbfc] sm:$0xff]
    %v4085 = vld [vmem:[#allocation3 + $0xc04] sm:$0xf]
    %v4086 = vld [vmem:[#allocation3 + $0xc08] sm:$0xff]
    %v4087 = vld [vmem:[#allocation3 + $0xc10] sm:$0xff]
    %v4088 = vld [vmem:[#allocation3 + $0xc18] sm:$0xff]
    %v4089 = vld [vmem:[#allocation3 + $0xc20] sm:$0xf]
    %v4090 = vld [vmem:[#allocation3 + $0xc24] sm:$0xff]
    %v4091 = vld [vmem:[#allocation3 + $0xc2c] sm:$0xff]
    %v4092 = vld [vmem:[#allocation3 + $0xc34] sm:$0xff]
    %v4093 = vld [vmem:[#allocation3 + $0xc3c] sm:$0xf]
    %v4094 = vld [vmem:[#allocation3 + $0xc40] sm:$0xff]
    %v4095 = vld [vmem:[#allocation3 + $0xc48] sm:$0xff]
    %v4096 = vld [vmem:[#allocation3 + $0xc50] sm:$0xff]
    %v4097 = vld [vmem:[#allocation3 + $0xc58] sm:$0xf]
    %v4098 = vld [vmem:[#allocation3 + $0xc5c] sm:$0xff]
    %v4099 = vld [vmem:[#allocation3 + $0xc64] sm:$0xff]
    %v4100 = vld [vmem:[#allocation3 + $0xc6c] sm:$0xff]
    %v4101 = vld [vmem:[#allocation3 + $0xc74] sm:$0xf]
    %v4102 = vld [vmem:[#allocation3 + $0xc78] sm:$0xff]
    %v4103 = vld [vmem:[#allocation3 + $0xc80] sm:$0xff]
    %v4104 = vld [vmem:[#allocation3 + $0xc88] sm:$0xff]
    %v4105 = vld [vmem:[#allocation3 + $0xc90] sm:$0xf]
    %v4106 = vld [vmem:[#allocation3 + $0xc94] sm:$0xff]
    %v4107 = vld [vmem:[#allocation3 + $0xc9c] sm:$0xff]
    %v4108 = vld [vmem:[#allocation3 + $0xca4] sm:$0xff]
    %v4109 = vld [vmem:[#allocation3 + $0xcac] sm:$0xf]
    %v4110 = vld [vmem:[#allocation3 + $0xcb0] sm:$0xff]
    %v4111 = vld [vmem:[#allocation3 + $0xcb8] sm:$0xff]
    %v4112 = vld [vmem:[#allocation3 + $0xcc0] sm:$0xff]
    %v4113 = vld [vmem:[#allocation3 + $0xcc8] sm:$0xf]
    %v4114 = vld [vmem:[#allocation3 + $0xccc] sm:$0xff]
    %v4115 = vld [vmem:[#allocation3 + $0xcd4] sm:$0xff]
    %v4116 = vld [vmem:[#allocation3 + $0xcdc] sm:$0xff]
    %v4117 = vld [vmem:[#allocation3 + $0xce4] sm:$0xf]
    %v4118 = vld [vmem:[#allocation3 + $0xce8] sm:$0xff]
    %v4119 = vld [vmem:[#allocation3 + $0xcf0] sm:$0xff]
    %v4120 = vld [vmem:[#allocation3 + $0xcf8] sm:$0xff]
    %v4121 = vld [vmem:[#allocation3 + $0xd00] sm:$0xf]
    %v4122 = vld [vmem:[#allocation3 + $0xd04] sm:$0xff]
    %v4123 = vld [vmem:[#allocation3 + $0xd0c] sm:$0xff]
    %v4124 = vld [vmem:[#allocation3 + $0xd14] sm:$0xff]
    %v4125 = vld [vmem:[#allocation3 + $0xd1c] sm:$0xf]
    %v4126 = vld [vmem:[#allocation3 + $0xd20] sm:$0xff]
    %v4127 = vld [vmem:[#allocation3 + $0xd28] sm:$0xff]
    %v4128 = vld [vmem:[#allocation3 + $0xd30] sm:$0xff]
    %v4129 = vld [vmem:[#allocation3 + $0xd38] sm:$0xf]
    %v4130 = vld [vmem:[#allocation3 + $0xd3c] sm:$0xff]
    %v4131 = vld [vmem:[#allocation3 + $0xd44] sm:$0xff]
    %v4132 = vld [vmem:[#allocation3 + $0xd4c] sm:$0xff]
    %v4133 = vld [vmem:[#allocation3 + $0xd54] sm:$0xf]
    %v4134 = vld [vmem:[#allocation3 + $0xd58] sm:$0xff]
    %v4135 = vld [vmem:[#allocation3 + $0xd60] sm:$0xff]
    %v4136 = vld [vmem:[#allocation3 + $0xd68] sm:$0xff]
    %v4137 = vld [vmem:[#allocation3 + $0xd70] sm:$0xf]
    %v4138 = vld [vmem:[#allocation3 + $0xd74] sm:$0xff]
    %v4139 = vld [vmem:[#allocation3 + $0xd7c] sm:$0xff]
    %v4140 = vld [vmem:[#allocation3 + $0xd84] sm:$0xff]
    %v4141 = vld [vmem:[#allocation3 + $0xd8c] sm:$0xf]
    %v4142 = vld [vmem:[#allocation3 + $0xd90] sm:$0xff]
    %v4143 = vld [vmem:[#allocation3 + $0xd98] sm:$0xff]
    %v4144 = vld [vmem:[#allocation3 + $0xda0] sm:$0xff]
    %v4145 = vld [vmem:[#allocation3 + $0xda8] sm:$0xf]
    %v4146 = vld [vmem:[#allocation3 + $0xdac] sm:$0xff]
    %v4147 = vld [vmem:[#allocation3 + $0xdb4] sm:$0xff]
    %v4148 = vld [vmem:[#allocation3 + $0xdbc] sm:$0xff]
    %v4149 = vld [vmem:[#allocation3 + $0xdc4] sm:$0xf]
    %v4150 = vld [vmem:[#allocation3 + $0xdc8] sm:$0xff]
    %v4151 = vld [vmem:[#allocation3 + $0xdd0] sm:$0xff]
    %v4152 = vld [vmem:[#allocation3 + $0xdd8] sm:$0xff]
    %v4153 = vld [vmem:[#allocation3 + $0xde0] sm:$0xf]
    %v4154 = vld [vmem:[#allocation3 + $0xde4] sm:$0xff]
    %v4155 = vld [vmem:[#allocation3 + $0xdec] sm:$0xff]
    %v4156 = vld [vmem:[#allocation3 + $0xdf4] sm:$0xff]
    %v4157 = vld [vmem:[#allocation3 + $0xdfc] sm:$0xf]
    %v4158 = vpack.c.bf16 %v3630, %v3630
    %v4159 = vpack.c.bf16 %v3631, %v3631
    %v4160 = vpack.c.bf16 %v3632, %v3632
    %v4161 = vpack.c.bf16 %v3633, %v3633
    %v4162 = vpack.c.bf16 %v3634, %v3634
    %v4163 = vpack.c.bf16 %v3635, %v3635
    %v4164 = vpack.c.bf16 %v3636, %v3636
    %v4165 = vpack.c.bf16 %v3637, %v3637
    %v4166 = vld [vmem:[#allocation25] sm:$0xff]
    %v4168 = vlaneseq
    %v4169 = vshrl.u32 %v4168, 7
    %v4170 = vsub.s32 0, %v4169
    %v4171 = vrot.slane %v4166, %v4170
    %v4172 = vlaneseq
    %v4173 = vshrl.u32 %v4172, 7
    %v4174 = vsub.s32 1, %v4173
    %v4175 = vrot.slane %v4166, %v4174
    %v4176 = vlaneseq
    %v4177 = vshrl.u32 %v4176, 7
    %v4178 = vsub.s32 2, %v4177
    %v4179 = vrot.slane %v4166, %v4178
    %v4180 = vlaneseq
    %v4181 = vshrl.u32 %v4180, 7
    %v4182 = vsub.s32 3, %v4181
    %v4183 = vrot.slane %v4166, %v4182
    %v4184 = vlaneseq
    %v4185 = vshrl.u32 %v4184, 7
    %v4186 = vsub.s32 4, %v4185
    %v4187 = vrot.slane %v4166, %v4186
    %v4188 = vlaneseq
    %v4189 = vshrl.u32 %v4188, 7
    %v4190 = vsub.s32 5, %v4189
    %v4191 = vrot.slane %v4166, %v4190
    %v4192 = vlaneseq
    %v4193 = vshrl.u32 %v4192, 7
    %v4194 = vsub.s32 6, %v4193
    %v4195 = vrot.slane %v4166, %v4194
    %v4715 = vunpack.c.l.b16 %v3646
    %v4716 = vunpack.c.h.b16 %v3646
    %v4717 = vunpack.c.l.b16 %v3647
    %v4718 = vunpack.c.h.b16 %v3647
    %v4719 = vunpack.c.l.b16 %v3648
    %v4720 = vunpack.c.h.b16 %v3648
    %v4721 = vunpack.c.l.b16 %v3649
    %v4722 = vunpack.c.l.b16 %v3650
    %v4723 = vunpack.c.h.b16 %v3650
    %v4724 = vunpack.c.l.b16 %v3651
    %v4725 = vunpack.c.h.b16 %v3651
    %v4726 = vunpack.c.l.b16 %v3652
    %v4727 = vunpack.c.h.b16 %v3652
    %v4728 = vunpack.c.l.b16 %v3653
    %v4729 = vunpack.c.l.b16 %v3654
    %v4730 = vunpack.c.h.b16 %v3654
    %v4731 = vunpack.c.l.b16 %v3655
    %v4732 = vunpack.c.h.b16 %v3655
    %v4733 = vunpack.c.l.b16 %v3656
    %v4734 = vunpack.c.h.b16 %v3656
    %v4735 = vunpack.c.l.b16 %v3657
    %v4736 = vunpack.c.l.b16 %v3658
    %v4737 = vunpack.c.h.b16 %v3658
    %v4738 = vunpack.c.l.b16 %v3659
    %v4739 = vunpack.c.h.b16 %v3659
    %v4740 = vunpack.c.l.b16 %v3660
    %v4741 = vunpack.c.h.b16 %v3660
    %v4742 = vunpack.c.l.b16 %v3661
    %v4743 = vunpack.c.l.b16 %v3662
    %v4744 = vunpack.c.h.b16 %v3662
    %v4745 = vunpack.c.l.b16 %v3663
    %v4746 = vunpack.c.h.b16 %v3663
    %v4747 = vunpack.c.l.b16 %v3664
    %v4748 = vunpack.c.h.b16 %v3664
    %v4749 = vunpack.c.l.b16 %v3665
    %v4750 = vunpack.c.l.b16 %v3666
    %v4751 = vunpack.c.h.b16 %v3666
    %v4752 = vunpack.c.l.b16 %v3667
    %v4753 = vunpack.c.h.b16 %v3667
    %v4754 = vunpack.c.l.b16 %v3668
    %v4755 = vunpack.c.h.b16 %v3668
    %v4756 = vunpack.c.l.b16 %v3669
    %v4757 = vunpack.c.l.b16 %v3670
    %v4758 = vunpack.c.h.b16 %v3670
    %v4759 = vunpack.c.l.b16 %v3671
    %v4760 = vunpack.c.h.b16 %v3671
    %v4761 = vunpack.c.l.b16 %v3672
    %v4762 = vunpack.c.h.b16 %v3672
    %v4763 = vunpack.c.l.b16 %v3673
    %v4764 = vunpack.c.l.b16 %v3674
    %v4765 = vunpack.c.h.b16 %v3674
    %v4766 = vunpack.c.l.b16 %v3675
    %v4767 = vunpack.c.h.b16 %v3675
    %v4768 = vunpack.c.l.b16 %v3676
    %v4769 = vunpack.c.h.b16 %v3676
    %v4770 = vunpack.c.l.b16 %v3677
    %v4771 = vunpack.c.l.b16 %v3678
    %v4772 = vunpack.c.h.b16 %v3678
    %v4773 = vunpack.c.l.b16 %v3679
    %v4774 = vunpack.c.h.b16 %v3679
    %v4775 = vunpack.c.l.b16 %v3680
    %v4776 = vunpack.c.h.b16 %v3680
    %v4777 = vunpack.c.l.b16 %v3681
    %v4778 = vunpack.c.l.b16 %v3682
    %v4779 = vunpack.c.h.b16 %v3682
    %v4780 = vunpack.c.l.b16 %v3683
    %v4781 = vunpack.c.h.b16 %v3683
    %v4782 = vunpack.c.l.b16 %v3684
    %v4783 = vunpack.c.h.b16 %v3684
    %v4784 = vunpack.c.l.b16 %v3685
    %v4785 = vunpack.c.l.b16 %v3686
    %v4786 = vunpack.c.h.b16 %v3686
    %v4787 = vunpack.c.l.b16 %v3687
    %v4788 = vunpack.c.h.b16 %v3687
    %v4789 = vunpack.c.l.b16 %v3688
    %v4790 = vunpack.c.h.b16 %v3688
    %v4791 = vunpack.c.l.b16 %v3689
    %v4792 = vunpack.c.l.b16 %v3690
    %v4793 = vunpack.c.h.b16 %v3690
    %v4794 = vunpack.c.l.b16 %v3691
    %v4795 = vunpack.c.h.b16 %v3691
    %v4796 = vunpack.c.l.b16 %v3692
    %v4797 = vunpack.c.h.b16 %v3692
    %v4798 = vunpack.c.l.b16 %v3693
    %v4799 = vunpack.c.l.b16 %v3694
    %v4800 = vunpack.c.h.b16 %v3694
    %v4801 = vunpack.c.l.b16 %v3695
    %v4802 = vunpack.c.h.b16 %v3695
    %v4803 = vunpack.c.l.b16 %v3696
    %v4804 = vunpack.c.h.b16 %v3696
    %v4805 = vunpack.c.l.b16 %v3697
    %v4806 = vunpack.c.l.b16 %v3698
    %v4807 = vunpack.c.h.b16 %v3698
    %v4808 = vunpack.c.l.b16 %v3699
    %v4809 = vunpack.c.h.b16 %v3699
    %v4810 = vunpack.c.l.b16 %v3700
    %v4811 = vunpack.c.h.b16 %v3700
    %v4812 = vunpack.c.l.b16 %v3701
    %v4813 = vunpack.c.l.b16 %v3702
    %v4814 = vunpack.c.h.b16 %v3702
    %v4815 = vunpack.c.l.b16 %v3703
    %v4816 = vunpack.c.h.b16 %v3703
    %v4817 = vunpack.c.l.b16 %v3704
    %v4818 = vunpack.c.h.b16 %v3704
    %v4819 = vunpack.c.l.b16 %v3705
    %v4820 = vunpack.c.l.b16 %v3706
    %v4821 = vunpack.c.h.b16 %v3706
    %v4822 = vunpack.c.l.b16 %v3707
    %v4823 = vunpack.c.h.b16 %v3707
    %v4824 = vunpack.c.l.b16 %v3708
    %v4825 = vunpack.c.h.b16 %v3708
    %v4826 = vunpack.c.l.b16 %v3709
    %v4827 = vunpack.c.l.b16 %v3710
    %v4828 = vunpack.c.h.b16 %v3710
    %v4829 = vunpack.c.l.b16 %v3711
    %v4830 = vunpack.c.h.b16 %v3711
    %v4831 = vunpack.c.l.b16 %v3712
    %v4832 = vunpack.c.h.b16 %v3712
    %v4833 = vunpack.c.l.b16 %v3713
    %v4834 = vunpack.c.l.b16 %v3714
    %v4835 = vunpack.c.h.b16 %v3714
    %v4836 = vunpack.c.l.b16 %v3715
    %v4837 = vunpack.c.h.b16 %v3715
    %v4838 = vunpack.c.l.b16 %v3716
    %v4839 = vunpack.c.h.b16 %v3716
    %v4840 = vunpack.c.l.b16 %v3717
    %v4841 = vunpack.c.l.b16 %v3718
    %v4842 = vunpack.c.h.b16 %v3718
    %v4843 = vunpack.c.l.b16 %v3719
    %v4844 = vunpack.c.h.b16 %v3719
    %v4845 = vunpack.c.l.b16 %v3720
    %v4846 = vunpack.c.h.b16 %v3720
    %v4847 = vunpack.c.l.b16 %v3721
    %v4848 = vunpack.c.l.b16 %v3722
    %v4849 = vunpack.c.h.b16 %v3722
    %v4850 = vunpack.c.l.b16 %v3723
    %v4851 = vunpack.c.h.b16 %v3723
    %v4852 = vunpack.c.l.b16 %v3724
    %v4853 = vunpack.c.h.b16 %v3724
    %v4854 = vunpack.c.l.b16 %v3725
    %v4855 = vunpack.c.l.b16 %v3726
    %v4856 = vunpack.c.h.b16 %v3726
    %v4857 = vunpack.c.l.b16 %v3727
    %v4858 = vunpack.c.h.b16 %v3727
    %v4859 = vunpack.c.l.b16 %v3728
    %v4860 = vunpack.c.h.b16 %v3728
    %v4861 = vunpack.c.l.b16 %v3729
    %v4862 = vunpack.c.l.b16 %v3730
    %v4863 = vunpack.c.h.b16 %v3730
    %v4864 = vunpack.c.l.b16 %v3731
    %v4865 = vunpack.c.h.b16 %v3731
    %v4866 = vunpack.c.l.b16 %v3732
    %v4867 = vunpack.c.h.b16 %v3732
    %v4868 = vunpack.c.l.b16 %v3733
    %v4869 = vunpack.c.l.b16 %v3734
    %v4870 = vunpack.c.h.b16 %v3734
    %v4871 = vunpack.c.l.b16 %v3735
    %v4872 = vunpack.c.h.b16 %v3735
    %v4873 = vunpack.c.l.b16 %v3736
    %v4874 = vunpack.c.h.b16 %v3736
    %v4875 = vunpack.c.l.b16 %v3737
    %v4876 = vunpack.c.l.b16 %v3738
    %v4877 = vunpack.c.h.b16 %v3738
    %v4878 = vunpack.c.l.b16 %v3739
    %v4879 = vunpack.c.h.b16 %v3739
    %v4880 = vunpack.c.l.b16 %v3740
    %v4881 = vunpack.c.h.b16 %v3740
    %v4882 = vunpack.c.l.b16 %v3741
    %v4883 = vunpack.c.l.b16 %v3742
    %v4884 = vunpack.c.h.b16 %v3742
    %v4885 = vunpack.c.l.b16 %v3743
    %v4886 = vunpack.c.h.b16 %v3743
    %v4887 = vunpack.c.l.b16 %v3744
    %v4888 = vunpack.c.h.b16 %v3744
    %v4889 = vunpack.c.l.b16 %v3745
    %v4890 = vunpack.c.l.b16 %v3746
    %v4891 = vunpack.c.h.b16 %v3746
    %v4892 = vunpack.c.l.b16 %v3747
    %v4893 = vunpack.c.h.b16 %v3747
    %v4894 = vunpack.c.l.b16 %v3748
    %v4895 = vunpack.c.h.b16 %v3748
    %v4896 = vunpack.c.l.b16 %v3749
    %v4897 = vunpack.c.l.b16 %v3750
    %v4898 = vunpack.c.h.b16 %v3750
    %v4899 = vunpack.c.l.b16 %v3751
    %v4900 = vunpack.c.h.b16 %v3751
    %v4901 = vunpack.c.l.b16 %v3752
    %v4902 = vunpack.c.h.b16 %v3752
    %v4903 = vunpack.c.l.b16 %v3753
    %v4904 = vunpack.c.l.b16 %v3754
    %v4905 = vunpack.c.h.b16 %v3754
    %v4906 = vunpack.c.l.b16 %v3755
    %v4907 = vunpack.c.h.b16 %v3755
    %v4908 = vunpack.c.l.b16 %v3756
    %v4909 = vunpack.c.h.b16 %v3756
    %v4910 = vunpack.c.l.b16 %v3757
    %v4911 = vunpack.c.l.b16 %v3758
    %v4912 = vunpack.c.h.b16 %v3758
    %v4913 = vunpack.c.l.b16 %v3759
    %v4914 = vunpack.c.h.b16 %v3759
    %v4915 = vunpack.c.l.b16 %v3760
    %v4916 = vunpack.c.h.b16 %v3760
    %v4917 = vunpack.c.l.b16 %v3761
    %v4918 = vunpack.c.l.b16 %v3762
    %v4919 = vunpack.c.h.b16 %v3762
    %v4920 = vunpack.c.l.b16 %v3763
    %v4921 = vunpack.c.h.b16 %v3763
    %v4922 = vunpack.c.l.b16 %v3764
    %v4923 = vunpack.c.h.b16 %v3764
    %v4924 = vunpack.c.l.b16 %v3765
    %v4925 = vunpack.c.l.b16 %v3766
    %v4926 = vunpack.c.h.b16 %v3766
    %v4927 = vunpack.c.l.b16 %v3767
    %v4928 = vunpack.c.h.b16 %v3767
    %v4929 = vunpack.c.l.b16 %v3768
    %v4930 = vunpack.c.h.b16 %v3768
    %v4931 = vunpack.c.l.b16 %v3769
    %v4932 = vunpack.c.l.b16 %v3770
    %v4933 = vunpack.c.h.b16 %v3770
    %v4934 = vunpack.c.l.b16 %v3771
    %v4935 = vunpack.c.h.b16 %v3771
    %v4936 = vunpack.c.l.b16 %v3772
    %v4937 = vunpack.c.h.b16 %v3772
    %v4938 = vunpack.c.l.b16 %v3773
    %v4939 = vunpack.c.l.b16 %v3774
    %v4940 = vunpack.c.h.b16 %v3774
    %v4941 = vunpack.c.l.b16 %v3775
    %v4942 = vunpack.c.h.b16 %v3775
    %v4943 = vunpack.c.l.b16 %v3776
    %v4944 = vunpack.c.h.b16 %v3776
    %v4945 = vunpack.c.l.b16 %v3777
    %v4946 = vunpack.c.l.b16 %v3778
    %v4947 = vunpack.c.h.b16 %v3778
    %v4948 = vunpack.c.l.b16 %v3779
    %v4949 = vunpack.c.h.b16 %v3779
    %v4950 = vunpack.c.l.b16 %v3780
    %v4951 = vunpack.c.h.b16 %v3780
    %v4952 = vunpack.c.l.b16 %v3781
    %v4953 = vunpack.c.l.b16 %v3782
    %v4954 = vunpack.c.h.b16 %v3782
    %v4955 = vunpack.c.l.b16 %v3783
    %v4956 = vunpack.c.h.b16 %v3783
    %v4957 = vunpack.c.l.b16 %v3784
    %v4958 = vunpack.c.h.b16 %v3784
    %v4959 = vunpack.c.l.b16 %v3785
    %v4960 = vunpack.c.l.b16 %v3786
    %v4961 = vunpack.c.h.b16 %v3786
    %v4962 = vunpack.c.l.b16 %v3787
    %v4963 = vunpack.c.h.b16 %v3787
    %v4964 = vunpack.c.l.b16 %v3788
    %v4965 = vunpack.c.h.b16 %v3788
    %v4966 = vunpack.c.l.b16 %v3789
    %v4967 = vunpack.c.l.b16 %v3790
    %v4968 = vunpack.c.h.b16 %v3790
    %v4969 = vunpack.c.l.b16 %v3791
    %v4970 = vunpack.c.h.b16 %v3791
    %v4971 = vunpack.c.l.b16 %v3792
    %v4972 = vunpack.c.h.b16 %v3792
    %v4973 = vunpack.c.l.b16 %v3793
    %v4974 = vunpack.c.l.b16 %v3794
    %v4975 = vunpack.c.h.b16 %v3794
    %v4976 = vunpack.c.l.b16 %v3795
    %v4977 = vunpack.c.h.b16 %v3795
    %v4978 = vunpack.c.l.b16 %v3796
    %v4979 = vunpack.c.h.b16 %v3796
    %v4980 = vunpack.c.l.b16 %v3797
    %v4981 = vunpack.c.l.b16 %v3798
    %v4982 = vunpack.c.h.b16 %v3798
    %v4983 = vunpack.c.l.b16 %v3799
    %v4984 = vunpack.c.h.b16 %v3799
    %v4985 = vunpack.c.l.b16 %v3800
    %v4986 = vunpack.c.h.b16 %v3800
    %v4987 = vunpack.c.l.b16 %v3801
    %v4988 = vunpack.c.l.b16 %v3802
    %v4989 = vunpack.c.h.b16 %v3802
    %v4990 = vunpack.c.l.b16 %v3803
    %v4991 = vunpack.c.h.b16 %v3803
    %v4992 = vunpack.c.l.b16 %v3804
    %v4993 = vunpack.c.h.b16 %v3804
    %v4994 = vunpack.c.l.b16 %v3805
    %v4995 = vunpack.c.l.b16 %v3806
    %v4996 = vunpack.c.h.b16 %v3806
    %v4997 = vunpack.c.l.b16 %v3807
    %v4998 = vunpack.c.h.b16 %v3807
    %v4999 = vunpack.c.l.b16 %v3808
    %v5000 = vunpack.c.h.b16 %v3808
    %v5001 = vunpack.c.l.b16 %v3809
    %v5002 = vunpack.c.l.b16 %v3810
    %v5003 = vunpack.c.h.b16 %v3810
    %v5004 = vunpack.c.l.b16 %v3811
    %v5005 = vunpack.c.h.b16 %v3811
    %v5006 = vunpack.c.l.b16 %v3812
    %v5007 = vunpack.c.h.b16 %v3812
    %v5008 = vunpack.c.l.b16 %v3813
    %v5009 = vunpack.c.l.b16 %v3814
    %v5010 = vunpack.c.h.b16 %v3814
    %v5011 = vunpack.c.l.b16 %v3815
    %v5012 = vunpack.c.h.b16 %v3815
    %v5013 = vunpack.c.l.b16 %v3816
    %v5014 = vunpack.c.h.b16 %v3816
    %v5015 = vunpack.c.l.b16 %v3817
    %v5016 = vunpack.c.l.b16 %v3818
    %v5017 = vunpack.c.h.b16 %v3818
    %v5018 = vunpack.c.l.b16 %v3819
    %v5019 = vunpack.c.h.b16 %v3819
    %v5020 = vunpack.c.l.b16 %v3820
    %v5021 = vunpack.c.h.b16 %v3820
    %v5022 = vunpack.c.l.b16 %v3821
    %v5023 = vunpack.c.l.b16 %v3822
    %v5024 = vunpack.c.h.b16 %v3822
    %v5025 = vunpack.c.l.b16 %v3823
    %v5026 = vunpack.c.h.b16 %v3823
    %v5027 = vunpack.c.l.b16 %v3824
    %v5028 = vunpack.c.h.b16 %v3824
    %v5029 = vunpack.c.l.b16 %v3825
    %v5030 = vunpack.c.l.b16 %v3826
    %v5031 = vunpack.c.h.b16 %v3826
    %v5032 = vunpack.c.l.b16 %v3827
    %v5033 = vunpack.c.h.b16 %v3827
    %v5034 = vunpack.c.l.b16 %v3828
    %v5035 = vunpack.c.h.b16 %v3828
    %v5036 = vunpack.c.l.b16 %v3829
    %v5037 = vunpack.c.l.b16 %v3830
    %v5038 = vunpack.c.h.b16 %v3830
    %v5039 = vunpack.c.l.b16 %v3831
    %v5040 = vunpack.c.h.b16 %v3831
    %v5041 = vunpack.c.l.b16 %v3832
    %v5042 = vunpack.c.h.b16 %v3832
    %v5043 = vunpack.c.l.b16 %v3833
    %v5044 = vunpack.c.l.b16 %v3834
    %v5045 = vunpack.c.h.b16 %v3834
    %v5046 = vunpack.c.l.b16 %v3835
    %v5047 = vunpack.c.h.b16 %v3835
    %v5048 = vunpack.c.l.b16 %v3836
    %v5049 = vunpack.c.h.b16 %v3836
    %v5050 = vunpack.c.l.b16 %v3837
    %v5051 = vunpack.c.l.b16 %v3838
    %v5052 = vunpack.c.h.b16 %v3838
    %v5053 = vunpack.c.l.b16 %v3839
    %v5054 = vunpack.c.h.b16 %v3839
    %v5055 = vunpack.c.l.b16 %v3840
    %v5056 = vunpack.c.h.b16 %v3840
    %v5057 = vunpack.c.l.b16 %v3841
    %v5058 = vunpack.c.l.b16 %v3842
    %v5059 = vunpack.c.h.b16 %v3842
    %v5060 = vunpack.c.l.b16 %v3843
    %v5061 = vunpack.c.h.b16 %v3843
    %v5062 = vunpack.c.l.b16 %v3844
    %v5063 = vunpack.c.h.b16 %v3844
    %v5064 = vunpack.c.l.b16 %v3845
    %v5065 = vunpack.c.l.b16 %v3846
    %v5066 = vunpack.c.h.b16 %v3846
    %v5067 = vunpack.c.l.b16 %v3847
    %v5068 = vunpack.c.h.b16 %v3847
    %v5069 = vunpack.c.l.b16 %v3848
    %v5070 = vunpack.c.h.b16 %v3848
    %v5071 = vunpack.c.l.b16 %v3849
    %v5072 = vunpack.c.l.b16 %v3850
    %v5073 = vunpack.c.h.b16 %v3850
    %v5074 = vunpack.c.l.b16 %v3851
    %v5075 = vunpack.c.h.b16 %v3851
    %v5076 = vunpack.c.l.b16 %v3852
    %v5077 = vunpack.c.h.b16 %v3852
    %v5078 = vunpack.c.l.b16 %v3853
    %v5079 = vunpack.c.l.b16 %v3854
    %v5080 = vunpack.c.h.b16 %v3854
    %v5081 = vunpack.c.l.b16 %v3855
    %v5082 = vunpack.c.h.b16 %v3855
    %v5083 = vunpack.c.l.b16 %v3856
    %v5084 = vunpack.c.h.b16 %v3856
    %v5085 = vunpack.c.l.b16 %v3857
    %v5086 = vunpack.c.l.b16 %v3858
    %v5087 = vunpack.c.h.b16 %v3858
    %v5088 = vunpack.c.l.b16 %v3859
    %v5089 = vunpack.c.h.b16 %v3859
    %v5090 = vunpack.c.l.b16 %v3860
    %v5091 = vunpack.c.h.b16 %v3860
    %v5092 = vunpack.c.l.b16 %v3861
    %v5093 = vunpack.c.l.b16 %v3862
    %v5094 = vunpack.c.h.b16 %v3862
    %v5095 = vunpack.c.l.b16 %v3863
    %v5096 = vunpack.c.h.b16 %v3863
    %v5097 = vunpack.c.l.b16 %v3864
    %v5098 = vunpack.c.h.b16 %v3864
    %v5099 = vunpack.c.l.b16 %v3865
    %v5100 = vunpack.c.l.b16 %v3866
    %v5101 = vunpack.c.h.b16 %v3866
    %v5102 = vunpack.c.l.b16 %v3867
    %v5103 = vunpack.c.h.b16 %v3867
    %v5104 = vunpack.c.l.b16 %v3868
    %v5105 = vunpack.c.h.b16 %v3868
    %v5106 = vunpack.c.l.b16 %v3869
    %v5107 = vunpack.c.l.b16 %v3870
    %v5108 = vunpack.c.h.b16 %v3870
    %v5109 = vunpack.c.l.b16 %v3871
    %v5110 = vunpack.c.h.b16 %v3871
    %v5111 = vunpack.c.l.b16 %v3872
    %v5112 = vunpack.c.h.b16 %v3872
    %v5113 = vunpack.c.l.b16 %v3873
    %v5114 = vunpack.c.l.b16 %v3874
    %v5115 = vunpack.c.h.b16 %v3874
    %v5116 = vunpack.c.l.b16 %v3875
    %v5117 = vunpack.c.h.b16 %v3875
    %v5118 = vunpack.c.l.b16 %v3876
    %v5119 = vunpack.c.h.b16 %v3876
    %v5120 = vunpack.c.l.b16 %v3877
    %v5121 = vunpack.c.l.b16 %v3878
    %v5122 = vunpack.c.h.b16 %v3878
    %v5123 = vunpack.c.l.b16 %v3879
    %v5124 = vunpack.c.h.b16 %v3879
    %v5125 = vunpack.c.l.b16 %v3880
    %v5126 = vunpack.c.h.b16 %v3880
    %v5127 = vunpack.c.l.b16 %v3881
    %v5128 = vunpack.c.l.b16 %v3882
    %v5129 = vunpack.c.h.b16 %v3882
    %v5130 = vunpack.c.l.b16 %v3883
    %v5131 = vunpack.c.h.b16 %v3883
    %v5132 = vunpack.c.l.b16 %v3884
    %v5133 = vunpack.c.h.b16 %v3884
    %v5134 = vunpack.c.l.b16 %v3885
    %v5135 = vunpack.c.l.b16 %v3886
    %v5136 = vunpack.c.h.b16 %v3886
    %v5137 = vunpack.c.l.b16 %v3887
    %v5138 = vunpack.c.h.b16 %v3887
    %v5139 = vunpack.c.l.b16 %v3888
    %v5140 = vunpack.c.h.b16 %v3888
    %v5141 = vunpack.c.l.b16 %v3889
    %v5142 = vunpack.c.l.b16 %v3890
    %v5143 = vunpack.c.h.b16 %v3890
    %v5144 = vunpack.c.l.b16 %v3891
    %v5145 = vunpack.c.h.b16 %v3891
    %v5146 = vunpack.c.l.b16 %v3892
    %v5147 = vunpack.c.h.b16 %v3892
    %v5148 = vunpack.c.l.b16 %v3893
    %v5149 = vunpack.c.l.b16 %v3894
    %v5150 = vunpack.c.h.b16 %v3894
    %v5151 = vunpack.c.l.b16 %v3895
    %v5152 = vunpack.c.h.b16 %v3895
    %v5153 = vunpack.c.l.b16 %v3896
    %v5154 = vunpack.c.h.b16 %v3896
    %v5155 = vunpack.c.l.b16 %v3897
    %v5156 = vunpack.c.l.b16 %v3898
    %v5157 = vunpack.c.h.b16 %v3898
    %v5158 = vunpack.c.l.b16 %v3899
    %v5159 = vunpack.c.h.b16 %v3899
    %v5160 = vunpack.c.l.b16 %v3900
    %v5161 = vunpack.c.h.b16 %v3900
    %v5162 = vunpack.c.l.b16 %v3901
    %v5163 = vunpack.c.l.b16 %v3902
    %v5164 = vunpack.c.h.b16 %v3902
    %v5165 = vunpack.c.l.b16 %v3903
    %v5166 = vunpack.c.h.b16 %v3903
    %v5167 = vunpack.c.l.b16 %v3904
    %v5168 = vunpack.c.h.b16 %v3904
    %v5169 = vunpack.c.l.b16 %v3905
    %v5170 = vunpack.c.l.b16 %v3906
    %v5171 = vunpack.c.h.b16 %v3906
    %v5172 = vunpack.c.l.b16 %v3907
    %v5173 = vunpack.c.h.b16 %v3907
    %v5174 = vunpack.c.l.b16 %v3908
    %v5175 = vunpack.c.h.b16 %v3908
    %v5176 = vunpack.c.l.b16 %v3909
    %v5177 = vunpack.c.l.b16 %v3910
    %v5178 = vunpack.c.h.b16 %v3910
    %v5179 = vunpack.c.l.b16 %v3911
    %v5180 = vunpack.c.h.b16 %v3911
    %v5181 = vunpack.c.l.b16 %v3912
    %v5182 = vunpack.c.h.b16 %v3912
    %v5183 = vunpack.c.l.b16 %v3913
    %v5184 = vunpack.c.l.b16 %v3914
    %v5185 = vunpack.c.h.b16 %v3914
    %v5186 = vunpack.c.l.b16 %v3915
    %v5187 = vunpack.c.h.b16 %v3915
    %v5188 = vunpack.c.l.b16 %v3916
    %v5189 = vunpack.c.h.b16 %v3916
    %v5190 = vunpack.c.l.b16 %v3917
    %v5191 = vunpack.c.l.b16 %v3918
    %v5192 = vunpack.c.h.b16 %v3918
    %v5193 = vunpack.c.l.b16 %v3919
    %v5194 = vunpack.c.h.b16 %v3919
    %v5195 = vunpack.c.l.b16 %v3920
    %v5196 = vunpack.c.h.b16 %v3920
    %v5197 = vunpack.c.l.b16 %v3921
    %v5198 = vunpack.c.l.b16 %v3922
    %v5199 = vunpack.c.h.b16 %v3922
    %v5200 = vunpack.c.l.b16 %v3923
    %v5201 = vunpack.c.h.b16 %v3923
    %v5202 = vunpack.c.l.b16 %v3924
    %v5203 = vunpack.c.h.b16 %v3924
    %v5204 = vunpack.c.l.b16 %v3925
    %v5205 = vunpack.c.l.b16 %v3926
    %v5206 = vunpack.c.h.b16 %v3926
    %v5207 = vunpack.c.l.b16 %v3927
    %v5208 = vunpack.c.h.b16 %v3927
    %v5209 = vunpack.c.l.b16 %v3928
    %v5210 = vunpack.c.h.b16 %v3928
    %v5211 = vunpack.c.l.b16 %v3929
    %v5212 = vunpack.c.l.b16 %v3930
    %v5213 = vunpack.c.h.b16 %v3930
    %v5214 = vunpack.c.l.b16 %v3931
    %v5215 = vunpack.c.h.b16 %v3931
    %v5216 = vunpack.c.l.b16 %v3932
    %v5217 = vunpack.c.h.b16 %v3932
    %v5218 = vunpack.c.l.b16 %v3933
    %v5219 = vunpack.c.l.b16 %v3934
    %v5220 = vunpack.c.h.b16 %v3934
    %v5221 = vunpack.c.l.b16 %v3935
    %v5222 = vunpack.c.h.b16 %v3935
    %v5223 = vunpack.c.l.b16 %v3936
    %v5224 = vunpack.c.h.b16 %v3936
    %v5225 = vunpack.c.l.b16 %v3937
    %v5226 = vunpack.c.l.b16 %v3938
    %v5227 = vunpack.c.h.b16 %v3938
    %v5228 = vunpack.c.l.b16 %v3939
    %v5229 = vunpack.c.h.b16 %v3939
    %v5230 = vunpack.c.l.b16 %v3940
    %v5231 = vunpack.c.h.b16 %v3940
    %v5232 = vunpack.c.l.b16 %v3941
    %v5233 = vunpack.c.l.b16 %v3942
    %v5234 = vunpack.c.h.b16 %v3942
    %v5235 = vunpack.c.l.b16 %v3943
    %v5236 = vunpack.c.h.b16 %v3943
    %v5237 = vunpack.c.l.b16 %v3944
    %v5238 = vunpack.c.h.b16 %v3944
    %v5239 = vunpack.c.l.b16 %v3945
    %v5240 = vunpack.c.l.b16 %v3946
    %v5241 = vunpack.c.h.b16 %v3946
    %v5242 = vunpack.c.l.b16 %v3947
    %v5243 = vunpack.c.h.b16 %v3947
    %v5244 = vunpack.c.l.b16 %v3948
    %v5245 = vunpack.c.h.b16 %v3948
    %v5246 = vunpack.c.l.b16 %v3949
    %v5247 = vunpack.c.l.b16 %v3950
    %v5248 = vunpack.c.h.b16 %v3950
    %v5249 = vunpack.c.l.b16 %v3951
    %v5250 = vunpack.c.h.b16 %v3951
    %v5251 = vunpack.c.l.b16 %v3952
    %v5252 = vunpack.c.h.b16 %v3952
    %v5253 = vunpack.c.l.b16 %v3953
    %v5254 = vunpack.c.l.b16 %v3954
    %v5255 = vunpack.c.h.b16 %v3954
    %v5256 = vunpack.c.l.b16 %v3955
    %v5257 = vunpack.c.h.b16 %v3955
    %v5258 = vunpack.c.l.b16 %v3956
    %v5259 = vunpack.c.h.b16 %v3956
    %v5260 = vunpack.c.l.b16 %v3957
    %v5261 = vunpack.c.l.b16 %v3958
    %v5262 = vunpack.c.h.b16 %v3958
    %v5263 = vunpack.c.l.b16 %v3959
    %v5264 = vunpack.c.h.b16 %v3959
    %v5265 = vunpack.c.l.b16 %v3960
    %v5266 = vunpack.c.h.b16 %v3960
    %v5267 = vunpack.c.l.b16 %v3961
    %v5268 = vunpack.c.l.b16 %v3962
    %v5269 = vunpack.c.h.b16 %v3962
    %v5270 = vunpack.c.l.b16 %v3963
    %v5271 = vunpack.c.h.b16 %v3963
    %v5272 = vunpack.c.l.b16 %v3964
    %v5273 = vunpack.c.h.b16 %v3964
    %v5274 = vunpack.c.l.b16 %v3965
    %v5275 = vunpack.c.l.b16 %v3966
    %v5276 = vunpack.c.h.b16 %v3966
    %v5277 = vunpack.c.l.b16 %v3967
    %v5278 = vunpack.c.h.b16 %v3967
    %v5279 = vunpack.c.l.b16 %v3968
    %v5280 = vunpack.c.h.b16 %v3968
    %v5281 = vunpack.c.l.b16 %v3969
    %v5282 = vunpack.c.l.b16 %v3970
    %v5283 = vunpack.c.h.b16 %v3970
    %v5284 = vunpack.c.l.b16 %v3971
    %v5285 = vunpack.c.h.b16 %v3971
    %v5286 = vunpack.c.l.b16 %v3972
    %v5287 = vunpack.c.h.b16 %v3972
    %v5288 = vunpack.c.l.b16 %v3973
    %v5289 = vunpack.c.l.b16 %v3974
    %v5290 = vunpack.c.h.b16 %v3974
    %v5291 = vunpack.c.l.b16 %v3975
    %v5292 = vunpack.c.h.b16 %v3975
    %v5293 = vunpack.c.l.b16 %v3976
    %v5294 = vunpack.c.h.b16 %v3976
    %v5295 = vunpack.c.l.b16 %v3977
    %v5296 = vunpack.c.l.b16 %v3978
    %v5297 = vunpack.c.h.b16 %v3978
    %v5298 = vunpack.c.l.b16 %v3979
    %v5299 = vunpack.c.h.b16 %v3979
    %v5300 = vunpack.c.l.b16 %v3980
    %v5301 = vunpack.c.h.b16 %v3980
    %v5302 = vunpack.c.l.b16 %v3981
    %v5303 = vunpack.c.l.b16 %v3982
    %v5304 = vunpack.c.h.b16 %v3982
    %v5305 = vunpack.c.l.b16 %v3983
    %v5306 = vunpack.c.h.b16 %v3983
    %v5307 = vunpack.c.l.b16 %v3984
    %v5308 = vunpack.c.h.b16 %v3984
    %v5309 = vunpack.c.l.b16 %v3985
    %v5310 = vunpack.c.l.b16 %v3986
    %v5311 = vunpack.c.h.b16 %v3986
    %v5312 = vunpack.c.l.b16 %v3987
    %v5313 = vunpack.c.h.b16 %v3987
    %v5314 = vunpack.c.l.b16 %v3988
    %v5315 = vunpack.c.h.b16 %v3988
    %v5316 = vunpack.c.l.b16 %v3989
    %v5317 = vunpack.c.l.b16 %v3990
    %v5318 = vunpack.c.h.b16 %v3990
    %v5319 = vunpack.c.l.b16 %v3991
    %v5320 = vunpack.c.h.b16 %v3991
    %v5321 = vunpack.c.l.b16 %v3992
    %v5322 = vunpack.c.h.b16 %v3992
    %v5323 = vunpack.c.l.b16 %v3993
    %v5324 = vunpack.c.l.b16 %v3994
    %v5325 = vunpack.c.h.b16 %v3994
    %v5326 = vunpack.c.l.b16 %v3995
    %v5327 = vunpack.c.h.b16 %v3995
    %v5328 = vunpack.c.l.b16 %v3996
    %v5329 = vunpack.c.h.b16 %v3996
    %v5330 = vunpack.c.l.b16 %v3997
    %v5331 = vunpack.c.l.b16 %v3998
    %v5332 = vunpack.c.h.b16 %v3998
    %v5333 = vunpack.c.l.b16 %v3999
    %v5334 = vunpack.c.h.b16 %v3999
    %v5335 = vunpack.c.l.b16 %v4000
    %v5336 = vunpack.c.h.b16 %v4000
    %v5337 = vunpack.c.l.b16 %v4001
    %v5338 = vunpack.c.l.b16 %v4002
    %v5339 = vunpack.c.h.b16 %v4002
    %v5340 = vunpack.c.l.b16 %v4003
    %v5341 = vunpack.c.h.b16 %v4003
    %v5342 = vunpack.c.l.b16 %v4004
    %v5343 = vunpack.c.h.b16 %v4004
    %v5344 = vunpack.c.l.b16 %v4005
    %v5345 = vunpack.c.l.b16 %v4006
    %v5346 = vunpack.c.h.b16 %v4006
    %v5347 = vunpack.c.l.b16 %v4007
    %v5348 = vunpack.c.h.b16 %v4007
    %v5349 = vunpack.c.l.b16 %v4008
    %v5350 = vunpack.c.h.b16 %v4008
    %v5351 = vunpack.c.l.b16 %v4009
    %v5352 = vunpack.c.l.b16 %v4010
    %v5353 = vunpack.c.h.b16 %v4010
    %v5354 = vunpack.c.l.b16 %v4011
    %v5355 = vunpack.c.h.b16 %v4011
    %v5356 = vunpack.c.l.b16 %v4012
    %v5357 = vunpack.c.h.b16 %v4012
    %v5358 = vunpack.c.l.b16 %v4013
    %v5359 = vunpack.c.l.b16 %v4014
    %v5360 = vunpack.c.h.b16 %v4014
    %v5361 = vunpack.c.l.b16 %v4015
    %v5362 = vunpack.c.h.b16 %v4015
    %v5363 = vunpack.c.l.b16 %v4016
    %v5364 = vunpack.c.h.b16 %v4016
    %v5365 = vunpack.c.l.b16 %v4017
    %v5366 = vunpack.c.l.b16 %v4018
    %v5367 = vunpack.c.h.b16 %v4018
    %v5368 = vunpack.c.l.b16 %v4019
    %v5369 = vunpack.c.h.b16 %v4019
    %v5370 = vunpack.c.l.b16 %v4020
    %v5371 = vunpack.c.h.b16 %v4020
    %v5372 = vunpack.c.l.b16 %v4021
    %v5373 = vunpack.c.l.b16 %v4022
    %v5374 = vunpack.c.h.b16 %v4022
    %v5375 = vunpack.c.l.b16 %v4023
    %v5376 = vunpack.c.h.b16 %v4023
    %v5377 = vunpack.c.l.b16 %v4024
    %v5378 = vunpack.c.h.b16 %v4024
    %v5379 = vunpack.c.l.b16 %v4025
    %v5380 = vunpack.c.l.b16 %v4026
    %v5381 = vunpack.c.h.b16 %v4026
    %v5382 = vunpack.c.l.b16 %v4027
    %v5383 = vunpack.c.h.b16 %v4027
    %v5384 = vunpack.c.l.b16 %v4028
    %v5385 = vunpack.c.h.b16 %v4028
    %v5386 = vunpack.c.l.b16 %v4029
    %v5387 = vunpack.c.l.b16 %v4030
    %v5388 = vunpack.c.h.b16 %v4030
    %v5389 = vunpack.c.l.b16 %v4031
    %v5390 = vunpack.c.h.b16 %v4031
    %v5391 = vunpack.c.l.b16 %v4032
    %v5392 = vunpack.c.h.b16 %v4032
    %v5393 = vunpack.c.l.b16 %v4033
    %v5394 = vunpack.c.l.b16 %v4034
    %v5395 = vunpack.c.h.b16 %v4034
    %v5396 = vunpack.c.l.b16 %v4035
    %v5397 = vunpack.c.h.b16 %v4035
    %v5398 = vunpack.c.l.b16 %v4036
    %v5399 = vunpack.c.h.b16 %v4036
    %v5400 = vunpack.c.l.b16 %v4037
    %v5401 = vunpack.c.l.b16 %v4038
    %v5402 = vunpack.c.h.b16 %v4038
    %v5403 = vunpack.c.l.b16 %v4039
    %v5404 = vunpack.c.h.b16 %v4039
    %v5405 = vunpack.c.l.b16 %v4040
    %v5406 = vunpack.c.h.b16 %v4040
    %v5407 = vunpack.c.l.b16 %v4041
    %v5408 = vunpack.c.l.b16 %v4042
    %v5409 = vunpack.c.h.b16 %v4042
    %v5410 = vunpack.c.l.b16 %v4043
    %v5411 = vunpack.c.h.b16 %v4043
    %v5412 = vunpack.c.l.b16 %v4044
    %v5413 = vunpack.c.h.b16 %v4044
    %v5414 = vunpack.c.l.b16 %v4045
    %v5415 = vunpack.c.l.b16 %v4046
    %v5416 = vunpack.c.h.b16 %v4046
    %v5417 = vunpack.c.l.b16 %v4047
    %v5418 = vunpack.c.h.b16 %v4047
    %v5419 = vunpack.c.l.b16 %v4048
    %v5420 = vunpack.c.h.b16 %v4048
    %v5421 = vunpack.c.l.b16 %v4049
    %v5422 = vunpack.c.l.b16 %v4050
    %v5423 = vunpack.c.h.b16 %v4050
    %v5424 = vunpack.c.l.b16 %v4051
    %v5425 = vunpack.c.h.b16 %v4051
    %v5426 = vunpack.c.l.b16 %v4052
    %v5427 = vunpack.c.h.b16 %v4052
    %v5428 = vunpack.c.l.b16 %v4053
    %v5429 = vunpack.c.l.b16 %v4054
    %v5430 = vunpack.c.h.b16 %v4054
    %v5431 = vunpack.c.l.b16 %v4055
    %v5432 = vunpack.c.h.b16 %v4055
    %v5433 = vunpack.c.l.b16 %v4056
    %v5434 = vunpack.c.h.b16 %v4056
    %v5435 = vunpack.c.l.b16 %v4057
    %v5436 = vunpack.c.l.b16 %v4058
    %v5437 = vunpack.c.h.b16 %v4058
    %v5438 = vunpack.c.l.b16 %v4059
    %v5439 = vunpack.c.h.b16 %v4059
    %v5440 = vunpack.c.l.b16 %v4060
    %v5441 = vunpack.c.h.b16 %v4060
    %v5442 = vunpack.c.l.b16 %v4061
    %v5443 = vunpack.c.l.b16 %v4062
    %v5444 = vunpack.c.h.b16 %v4062
    %v5445 = vunpack.c.l.b16 %v4063
    %v5446 = vunpack.c.h.b16 %v4063
    %v5447 = vunpack.c.l.b16 %v4064
    %v5448 = vunpack.c.h.b16 %v4064
    %v5449 = vunpack.c.l.b16 %v4065
    %v5450 = vunpack.c.l.b16 %v4066
    %v5451 = vunpack.c.h.b16 %v4066
    %v5452 = vunpack.c.l.b16 %v4067
    %v5453 = vunpack.c.h.b16 %v4067
    %v5454 = vunpack.c.l.b16 %v4068
    %v5455 = vunpack.c.h.b16 %v4068
    %v5456 = vunpack.c.l.b16 %v4069
    %v5457 = vunpack.c.l.b16 %v4070
    %v5458 = vunpack.c.h.b16 %v4070
    %v5459 = vunpack.c.l.b16 %v4071
    %v5460 = vunpack.c.h.b16 %v4071
    %v5461 = vunpack.c.l.b16 %v4072
    %v5462 = vunpack.c.h.b16 %v4072
    %v5463 = vunpack.c.l.b16 %v4073
    %v5464 = vunpack.c.l.b16 %v4074
    %v5465 = vunpack.c.h.b16 %v4074
    %v5466 = vunpack.c.l.b16 %v4075
    %v5467 = vunpack.c.h.b16 %v4075
    %v5468 = vunpack.c.l.b16 %v4076
    %v5469 = vunpack.c.h.b16 %v4076
    %v5470 = vunpack.c.l.b16 %v4077
    %v5471 = vunpack.c.l.b16 %v4078
    %v5472 = vunpack.c.h.b16 %v4078
    %v5473 = vunpack.c.l.b16 %v4079
    %v5474 = vunpack.c.h.b16 %v4079
    %v5475 = vunpack.c.l.b16 %v4080
    %v5476 = vunpack.c.h.b16 %v4080
    %v5477 = vunpack.c.l.b16 %v4081
    %v5478 = vunpack.c.l.b16 %v4082
    %v5479 = vunpack.c.h.b16 %v4082
    %v5480 = vunpack.c.l.b16 %v4083
    %v5481 = vunpack.c.h.b16 %v4083
    %v5482 = vunpack.c.l.b16 %v4084
    %v5483 = vunpack.c.h.b16 %v4084
    %v5484 = vunpack.c.l.b16 %v4085
    %v5485 = vunpack.c.l.b16 %v4086
    %v5486 = vunpack.c.h.b16 %v4086
    %v5487 = vunpack.c.l.b16 %v4087
    %v5488 = vunpack.c.h.b16 %v4087
    %v5489 = vunpack.c.l.b16 %v4088
    %v5490 = vunpack.c.h.b16 %v4088
    %v5491 = vunpack.c.l.b16 %v4089
    %v5492 = vunpack.c.l.b16 %v4090
    %v5493 = vunpack.c.h.b16 %v4090
    %v5494 = vunpack.c.l.b16 %v4091
    %v5495 = vunpack.c.h.b16 %v4091
    %v5496 = vunpack.c.l.b16 %v4092
    %v5497 = vunpack.c.h.b16 %v4092
    %v5498 = vunpack.c.l.b16 %v4093
    %v5499 = vunpack.c.l.b16 %v4094
    %v5500 = vunpack.c.h.b16 %v4094
    %v5501 = vunpack.c.l.b16 %v4095
    %v5502 = vunpack.c.h.b16 %v4095
    %v5503 = vunpack.c.l.b16 %v4096
    %v5504 = vunpack.c.h.b16 %v4096
    %v5505 = vunpack.c.l.b16 %v4097
    %v5506 = vunpack.c.l.b16 %v4098
    %v5507 = vunpack.c.h.b16 %v4098
    %v5508 = vunpack.c.l.b16 %v4099
    %v5509 = vunpack.c.h.b16 %v4099
    %v5510 = vunpack.c.l.b16 %v4100
    %v5511 = vunpack.c.h.b16 %v4100
    %v5512 = vunpack.c.l.b16 %v4101
    %v5513 = vunpack.c.l.b16 %v4102
    %v5514 = vunpack.c.h.b16 %v4102
    %v5515 = vunpack.c.l.b16 %v4103
    %v5516 = vunpack.c.h.b16 %v4103
    %v5517 = vunpack.c.l.b16 %v4104
    %v5518 = vunpack.c.h.b16 %v4104
    %v5519 = vunpack.c.l.b16 %v4105
    %v5520 = vunpack.c.l.b16 %v4106
    %v5521 = vunpack.c.h.b16 %v4106
    %v5522 = vunpack.c.l.b16 %v4107
    %v5523 = vunpack.c.h.b16 %v4107
    %v5524 = vunpack.c.l.b16 %v4108
    %v5525 = vunpack.c.h.b16 %v4108
    %v5526 = vunpack.c.l.b16 %v4109
    %v5527 = vunpack.c.l.b16 %v4110
    %v5528 = vunpack.c.h.b16 %v4110
    %v5529 = vunpack.c.l.b16 %v4111
    %v5530 = vunpack.c.h.b16 %v4111
    %v5531 = vunpack.c.l.b16 %v4112
    %v5532 = vunpack.c.h.b16 %v4112
    %v5533 = vunpack.c.l.b16 %v4113
    %v5534 = vunpack.c.l.b16 %v4114
    %v5535 = vunpack.c.h.b16 %v4114
    %v5536 = vunpack.c.l.b16 %v4115
    %v5537 = vunpack.c.h.b16 %v4115
    %v5538 = vunpack.c.l.b16 %v4116
    %v5539 = vunpack.c.h.b16 %v4116
    %v5540 = vunpack.c.l.b16 %v4117
    %v5541 = vunpack.c.l.b16 %v4118
    %v5542 = vunpack.c.h.b16 %v4118
    %v5543 = vunpack.c.l.b16 %v4119
    %v5544 = vunpack.c.h.b16 %v4119
    %v5545 = vunpack.c.l.b16 %v4120
    %v5546 = vunpack.c.h.b16 %v4120
    %v5547 = vunpack.c.l.b16 %v4121
    %v5548 = vunpack.c.l.b16 %v4122
    %v5549 = vunpack.c.h.b16 %v4122
    %v5550 = vunpack.c.l.b16 %v4123
    %v5551 = vunpack.c.h.b16 %v4123
    %v5552 = vunpack.c.l.b16 %v4124
    %v5553 = vunpack.c.h.b16 %v4124
    %v5554 = vunpack.c.l.b16 %v4125
    %v5555 = vunpack.c.l.b16 %v4126
    %v5556 = vunpack.c.h.b16 %v4126
    %v5557 = vunpack.c.l.b16 %v4127
    %v5558 = vunpack.c.h.b16 %v4127
    %v5559 = vunpack.c.l.b16 %v4128
    %v5560 = vunpack.c.h.b16 %v4128
    %v5561 = vunpack.c.l.b16 %v4129
    %v5562 = vunpack.c.l.b16 %v4130
    %v5563 = vunpack.c.h.b16 %v4130
    %v5564 = vunpack.c.l.b16 %v4131
    %v5565 = vunpack.c.h.b16 %v4131
    %v5566 = vunpack.c.l.b16 %v4132
    %v5567 = vunpack.c.h.b16 %v4132
    %v5568 = vunpack.c.l.b16 %v4133
    %v5569 = vunpack.c.l.b16 %v4134
    %v5570 = vunpack.c.h.b16 %v4134
    %v5571 = vunpack.c.l.b16 %v4135
    %v5572 = vunpack.c.h.b16 %v4135
    %v5573 = vunpack.c.l.b16 %v4136
    %v5574 = vunpack.c.h.b16 %v4136
    %v5575 = vunpack.c.l.b16 %v4137
    %v5576 = vunpack.c.l.b16 %v4138
    %v5577 = vunpack.c.h.b16 %v4138
    %v5578 = vunpack.c.l.b16 %v4139
    %v5579 = vunpack.c.h.b16 %v4139
    %v5580 = vunpack.c.l.b16 %v4140
    %v5581 = vunpack.c.h.b16 %v4140
    %v5582 = vunpack.c.l.b16 %v4141
    %v5583 = vunpack.c.l.b16 %v4142
    %v5584 = vunpack.c.h.b16 %v4142
    %v5585 = vunpack.c.l.b16 %v4143
    %v5586 = vunpack.c.h.b16 %v4143
    %v5587 = vunpack.c.l.b16 %v4144
    %v5588 = vunpack.c.h.b16 %v4144
    %v5589 = vunpack.c.l.b16 %v4145
    %v5590 = vunpack.c.l.b16 %v4146
    %v5591 = vunpack.c.h.b16 %v4146
    %v5592 = vunpack.c.l.b16 %v4147
    %v5593 = vunpack.c.h.b16 %v4147
    %v5594 = vunpack.c.l.b16 %v4148
    %v5595 = vunpack.c.h.b16 %v4148
    %v5596 = vunpack.c.l.b16 %v4149
    %v5597 = vunpack.c.l.b16 %v4150
    %v5598 = vunpack.c.h.b16 %v4150
    %v5599 = vunpack.c.l.b16 %v4151
    %v5600 = vunpack.c.h.b16 %v4151
    %v5601 = vunpack.c.l.b16 %v4152
    %v5602 = vunpack.c.h.b16 %v4152
    %v5603 = vunpack.c.l.b16 %v4153
    %v5604 = vunpack.c.l.b16 %v4154
    %v5605 = vunpack.c.h.b16 %v4154
    %v5606 = vunpack.c.l.b16 %v4155
    %v5607 = vunpack.c.h.b16 %v4155
    %v5608 = vunpack.c.l.b16 %v4156
    %v5609 = vunpack.c.h.b16 %v4156
    %v5610 = vunpack.c.l.b16 %v4157
    %v5611 = vpack.c.b16 %v4722, %v4715
    %v5612 = vpack.c.b16 %v4723, %v4716
    %v5613 = vpack.c.b16 %v4724, %v4717
    %v5614 = vpack.c.b16 %v4725, %v4718
    %v5615 = vpack.c.b16 %v4726, %v4719
    %v5616 = vpack.c.b16 %v4727, %v4720
    %v5617 = vpack.c.b16 %v4728, %v4721
    %v5618 = vpack.c.b16 %v4736, %v4729
    %v5619 = vpack.c.b16 %v4737, %v4730
    %v5620 = vpack.c.b16 %v4738, %v4731
    %v5621 = vpack.c.b16 %v4739, %v4732
    %v5622 = vpack.c.b16 %v4740, %v4733
    %v5623 = vpack.c.b16 %v4741, %v4734
    %v5624 = vpack.c.b16 %v4742, %v4735
    %v5625 = vpack.c.b16 %v4750, %v4743
    %v5626 = vpack.c.b16 %v4751, %v4744
    %v5627 = vpack.c.b16 %v4752, %v4745
    %v5628 = vpack.c.b16 %v4753, %v4746
    %v5629 = vpack.c.b16 %v4754, %v4747
    %v5630 = vpack.c.b16 %v4755, %v4748
    %v5631 = vpack.c.b16 %v4756, %v4749
    %v5632 = vpack.c.b16 %v4764, %v4757
    %v5633 = vpack.c.b16 %v4765, %v4758
    %v5634 = vpack.c.b16 %v4766, %v4759
    %v5635 = vpack.c.b16 %v4767, %v4760
    %v5636 = vpack.c.b16 %v4768, %v4761
    %v5637 = vpack.c.b16 %v4769, %v4762
    %v5638 = vpack.c.b16 %v4770, %v4763
    %v5639 = vpack.c.b16 %v4778, %v4771
    %v5640 = vpack.c.b16 %v4779, %v4772
    %v5641 = vpack.c.b16 %v4780, %v4773
    %v5642 = vpack.c.b16 %v4781, %v4774
    %v5643 = vpack.c.b16 %v4782, %v4775
    %v5644 = vpack.c.b16 %v4783, %v4776
    %v5645 = vpack.c.b16 %v4784, %v4777
    %v5646 = vpack.c.b16 %v4792, %v4785
    %v5647 = vpack.c.b16 %v4793, %v4786
    %v5648 = vpack.c.b16 %v4794, %v4787
    %v5649 = vpack.c.b16 %v4795, %v4788
    %v5650 = vpack.c.b16 %v4796, %v4789
    %v5651 = vpack.c.b16 %v4797, %v4790
    %v5652 = vpack.c.b16 %v4798, %v4791
    %v5653 = vpack.c.b16 %v4806, %v4799
    %v5654 = vpack.c.b16 %v4807, %v4800
    %v5655 = vpack.c.b16 %v4808, %v4801
    %v5656 = vpack.c.b16 %v4809, %v4802
    %v5657 = vpack.c.b16 %v4810, %v4803
    %v5658 = vpack.c.b16 %v4811, %v4804
    %v5659 = vpack.c.b16 %v4812, %v4805
    %v5660 = vpack.c.b16 %v4820, %v4813
    %v5661 = vpack.c.b16 %v4821, %v4814
    %v5662 = vpack.c.b16 %v4822, %v4815
    %v5663 = vpack.c.b16 %v4823, %v4816
    %v5664 = vpack.c.b16 %v4824, %v4817
    %v5665 = vpack.c.b16 %v4825, %v4818
    %v5666 = vpack.c.b16 %v4826, %v4819
    %v5667 = vpack.c.b16 %v4834, %v4827
    %v5668 = vpack.c.b16 %v4835, %v4828
    %v5669 = vpack.c.b16 %v4836, %v4829
    %v5670 = vpack.c.b16 %v4837, %v4830
    %v5671 = vpack.c.b16 %v4838, %v4831
    %v5672 = vpack.c.b16 %v4839, %v4832
    %v5673 = vpack.c.b16 %v4840, %v4833
    %v5674 = vpack.c.b16 %v4848, %v4841
    %v5675 = vpack.c.b16 %v4849, %v4842
    %v5676 = vpack.c.b16 %v4850, %v4843
    %v5677 = vpack.c.b16 %v4851, %v4844
    %v5678 = vpack.c.b16 %v4852, %v4845
    %v5679 = vpack.c.b16 %v4853, %v4846
    %v5680 = vpack.c.b16 %v4854, %v4847
    %v5681 = vpack.c.b16 %v4862, %v4855
    %v5682 = vpack.c.b16 %v4863, %v4856
    %v5683 = vpack.c.b16 %v4864, %v4857
    %v5684 = vpack.c.b16 %v4865, %v4858
    %v5685 = vpack.c.b16 %v4866, %v4859
    %v5686 = vpack.c.b16 %v4867, %v4860
    %v5687 = vpack.c.b16 %v4868, %v4861
    %v5688 = vpack.c.b16 %v4876, %v4869
    %v5689 = vpack.c.b16 %v4877, %v4870
    %v5690 = vpack.c.b16 %v4878, %v4871
    %v5691 = vpack.c.b16 %v4879, %v4872
    %v5692 = vpack.c.b16 %v4880, %v4873
    %v5693 = vpack.c.b16 %v4881, %v4874
    %v5694 = vpack.c.b16 %v4882, %v4875
    %v5695 = vpack.c.b16 %v4890, %v4883
    %v5696 = vpack.c.b16 %v4891, %v4884
    %v5697 = vpack.c.b16 %v4892, %v4885
    %v5698 = vpack.c.b16 %v4893, %v4886
    %v5699 = vpack.c.b16 %v4894, %v4887
    %v5700 = vpack.c.b16 %v4895, %v4888
    %v5701 = vpack.c.b16 %v4896, %v4889
    %v5702 = vpack.c.b16 %v4904, %v4897
    %v5703 = vpack.c.b16 %v4905, %v4898
    %v5704 = vpack.c.b16 %v4906, %v4899
    %v5705 = vpack.c.b16 %v4907, %v4900
    %v5706 = vpack.c.b16 %v4908, %v4901
    %v5707 = vpack.c.b16 %v4909, %v4902
    %v5708 = vpack.c.b16 %v4910, %v4903
    %v5709 = vpack.c.b16 %v4918, %v4911
    %v5710 = vpack.c.b16 %v4919, %v4912
    %v5711 = vpack.c.b16 %v4920, %v4913
    %v5712 = vpack.c.b16 %v4921, %v4914
    %v5713 = vpack.c.b16 %v4922, %v4915
    %v5714 = vpack.c.b16 %v4923, %v4916
    %v5715 = vpack.c.b16 %v4924, %v4917
    %v5716 = vpack.c.b16 %v4932, %v4925
    %v5717 = vpack.c.b16 %v4933, %v4926
    %v5718 = vpack.c.b16 %v4934, %v4927
    %v5719 = vpack.c.b16 %v4935, %v4928
    %v5720 = vpack.c.b16 %v4936, %v4929
    %v5721 = vpack.c.b16 %v4937, %v4930
    %v5722 = vpack.c.b16 %v4938, %v4931
    %v5723 = vpack.c.b16 %v4946, %v4939
    %v5724 = vpack.c.b16 %v4947, %v4940
    %v5725 = vpack.c.b16 %v4948, %v4941
    %v5726 = vpack.c.b16 %v4949, %v4942
    %v5727 = vpack.c.b16 %v4950, %v4943
    %v5728 = vpack.c.b16 %v4951, %v4944
    %v5729 = vpack.c.b16 %v4952, %v4945
    %v5730 = vpack.c.b16 %v4960, %v4953
    %v5731 = vpack.c.b16 %v4961, %v4954
    %v5732 = vpack.c.b16 %v4962, %v4955
    %v5733 = vpack.c.b16 %v4963, %v4956
    %v5734 = vpack.c.b16 %v4964, %v4957
    %v5735 = vpack.c.b16 %v4965, %v4958
    %v5736 = vpack.c.b16 %v4966, %v4959
    %v5737 = vpack.c.b16 %v4974, %v4967
    %v5738 = vpack.c.b16 %v4975, %v4968
    %v5739 = vpack.c.b16 %v4976, %v4969
    %v5740 = vpack.c.b16 %v4977, %v4970
    %v5741 = vpack.c.b16 %v4978, %v4971
    %v5742 = vpack.c.b16 %v4979, %v4972
    %v5743 = vpack.c.b16 %v4980, %v4973
    %v5744 = vpack.c.b16 %v4988, %v4981
    %v5745 = vpack.c.b16 %v4989, %v4982
    %v5746 = vpack.c.b16 %v4990, %v4983
    %v5747 = vpack.c.b16 %v4991, %v4984
    %v5748 = vpack.c.b16 %v4992, %v4985
    %v5749 = vpack.c.b16 %v4993, %v4986
    %v5750 = vpack.c.b16 %v4994, %v4987
    %v5751 = vpack.c.b16 %v5002, %v4995
    %v5752 = vpack.c.b16 %v5003, %v4996
    %v5753 = vpack.c.b16 %v5004, %v4997
    %v5754 = vpack.c.b16 %v5005, %v4998
    %v5755 = vpack.c.b16 %v5006, %v4999
    %v5756 = vpack.c.b16 %v5007, %v5000
    %v5757 = vpack.c.b16 %v5008, %v5001
    %v5758 = vpack.c.b16 %v5016, %v5009
    %v5759 = vpack.c.b16 %v5017, %v5010
    %v5760 = vpack.c.b16 %v5018, %v5011
    %v5761 = vpack.c.b16 %v5019, %v5012
    %v5762 = vpack.c.b16 %v5020, %v5013
    %v5763 = vpack.c.b16 %v5021, %v5014
    %v5764 = vpack.c.b16 %v5022, %v5015
    %v5765 = vpack.c.b16 %v5030, %v5023
    %v5766 = vpack.c.b16 %v5031, %v5024
    %v5767 = vpack.c.b16 %v5032, %v5025
    %v5768 = vpack.c.b16 %v5033, %v5026
    %v5769 = vpack.c.b16 %v5034, %v5027
    %v5770 = vpack.c.b16 %v5035, %v5028
    %v5771 = vpack.c.b16 %v5036, %v5029
    %v5772 = vpack.c.b16 %v5044, %v5037
    %v5773 = vpack.c.b16 %v5045, %v5038
    %v5774 = vpack.c.b16 %v5046, %v5039
    %v5775 = vpack.c.b16 %v5047, %v5040
    %v5776 = vpack.c.b16 %v5048, %v5041
    %v5777 = vpack.c.b16 %v5049, %v5042
    %v5778 = vpack.c.b16 %v5050, %v5043
    %v5779 = vpack.c.b16 %v5058, %v5051
    %v5780 = vpack.c.b16 %v5059, %v5052
    %v5781 = vpack.c.b16 %v5060, %v5053
    %v5782 = vpack.c.b16 %v5061, %v5054
    %v5783 = vpack.c.b16 %v5062, %v5055
    %v5784 = vpack.c.b16 %v5063, %v5056
    %v5785 = vpack.c.b16 %v5064, %v5057
    %v5786 = vpack.c.b16 %v5072, %v5065
    %v5787 = vpack.c.b16 %v5073, %v5066
    %v5788 = vpack.c.b16 %v5074, %v5067
    %v5789 = vpack.c.b16 %v5075, %v5068
    %v5790 = vpack.c.b16 %v5076, %v5069
    %v5791 = vpack.c.b16 %v5077, %v5070
    %v5792 = vpack.c.b16 %v5078, %v5071
    %v5793 = vpack.c.b16 %v5086, %v5079
    %v5794 = vpack.c.b16 %v5087, %v5080
    %v5795 = vpack.c.b16 %v5088, %v5081
    %v5796 = vpack.c.b16 %v5089, %v5082
    %v5797 = vpack.c.b16 %v5090, %v5083
    %v5798 = vpack.c.b16 %v5091, %v5084
    %v5799 = vpack.c.b16 %v5092, %v5085
    %v5800 = vpack.c.b16 %v5100, %v5093
    %v5801 = vpack.c.b16 %v5101, %v5094
    %v5802 = vpack.c.b16 %v5102, %v5095
    %v5803 = vpack.c.b16 %v5103, %v5096
    %v5804 = vpack.c.b16 %v5104, %v5097
    %v5805 = vpack.c.b16 %v5105, %v5098
    %v5806 = vpack.c.b16 %v5106, %v5099
    %v5807 = vpack.c.b16 %v5114, %v5107
    %v5808 = vpack.c.b16 %v5115, %v5108
    %v5809 = vpack.c.b16 %v5116, %v5109
    %v5810 = vpack.c.b16 %v5117, %v5110
    %v5811 = vpack.c.b16 %v5118, %v5111
    %v5812 = vpack.c.b16 %v5119, %v5112
    %v5813 = vpack.c.b16 %v5120, %v5113
    %v5814 = vpack.c.b16 %v5128, %v5121
    %v5815 = vpack.c.b16 %v5129, %v5122
    %v5816 = vpack.c.b16 %v5130, %v5123
    %v5817 = vpack.c.b16 %v5131, %v5124
    %v5818 = vpack.c.b16 %v5132, %v5125
    %v5819 = vpack.c.b16 %v5133, %v5126
    %v5820 = vpack.c.b16 %v5134, %v5127
    %v5821 = vpack.c.b16 %v5142, %v5135
    %v5822 = vpack.c.b16 %v5143, %v5136
    %v5823 = vpack.c.b16 %v5144, %v5137
    %v5824 = vpack.c.b16 %v5145, %v5138
    %v5825 = vpack.c.b16 %v5146, %v5139
    %v5826 = vpack.c.b16 %v5147, %v5140
    %v5827 = vpack.c.b16 %v5148, %v5141
    %v5828 = vpack.c.b16 %v5156, %v5149
    %v5829 = vpack.c.b16 %v5157, %v5150
    %v5830 = vpack.c.b16 %v5158, %v5151
    %v5831 = vpack.c.b16 %v5159, %v5152
    %v5832 = vpack.c.b16 %v5160, %v5153
    %v5833 = vpack.c.b16 %v5161, %v5154
    %v5834 = vpack.c.b16 %v5162, %v5155
    %v5835 = vpack.c.b16 %v5170, %v5163
    %v5836 = vpack.c.b16 %v5171, %v5164
    %v5837 = vpack.c.b16 %v5172, %v5165
    %v5838 = vpack.c.b16 %v5173, %v5166
    %v5839 = vpack.c.b16 %v5174, %v5167
    %v5840 = vpack.c.b16 %v5175, %v5168
    %v5841 = vpack.c.b16 %v5176, %v5169
    %v5842 = vpack.c.b16 %v5184, %v5177
    %v5843 = vpack.c.b16 %v5185, %v5178
    %v5844 = vpack.c.b16 %v5186, %v5179
    %v5845 = vpack.c.b16 %v5187, %v5180
    %v5846 = vpack.c.b16 %v5188, %v5181
    %v5847 = vpack.c.b16 %v5189, %v5182
    %v5848 = vpack.c.b16 %v5190, %v5183
    %v5849 = vpack.c.b16 %v5198, %v5191
    %v5850 = vpack.c.b16 %v5199, %v5192
    %v5851 = vpack.c.b16 %v5200, %v5193
    %v5852 = vpack.c.b16 %v5201, %v5194
    %v5853 = vpack.c.b16 %v5202, %v5195
    %v5854 = vpack.c.b16 %v5203, %v5196
    %v5855 = vpack.c.b16 %v5204, %v5197
    %v5856 = vpack.c.b16 %v5212, %v5205
    %v5857 = vpack.c.b16 %v5213, %v5206
    %v5858 = vpack.c.b16 %v5214, %v5207
    %v5859 = vpack.c.b16 %v5215, %v5208
    %v5860 = vpack.c.b16 %v5216, %v5209
    %v5861 = vpack.c.b16 %v5217, %v5210
    %v5862 = vpack.c.b16 %v5218, %v5211
    %v5863 = vpack.c.b16 %v5226, %v5219
    %v5864 = vpack.c.b16 %v5227, %v5220
    %v5865 = vpack.c.b16 %v5228, %v5221
    %v5866 = vpack.c.b16 %v5229, %v5222
    %v5867 = vpack.c.b16 %v5230, %v5223
    %v5868 = vpack.c.b16 %v5231, %v5224
    %v5869 = vpack.c.b16 %v5232, %v5225
    %v5870 = vpack.c.b16 %v5240, %v5233
    %v5871 = vpack.c.b16 %v5241, %v5234
    %v5872 = vpack.c.b16 %v5242, %v5235
    %v5873 = vpack.c.b16 %v5243, %v5236
    %v5874 = vpack.c.b16 %v5244, %v5237
    %v5875 = vpack.c.b16 %v5245, %v5238
    %v5876 = vpack.c.b16 %v5246, %v5239
    %v5877 = vpack.c.b16 %v5254, %v5247
    %v5878 = vpack.c.b16 %v5255, %v5248
    %v5879 = vpack.c.b16 %v5256, %v5249
    %v5880 = vpack.c.b16 %v5257, %v5250
    %v5881 = vpack.c.b16 %v5258, %v5251
    %v5882 = vpack.c.b16 %v5259, %v5252
    %v5883 = vpack.c.b16 %v5260, %v5253
    %v5884 = vpack.c.b16 %v5268, %v5261
    %v5885 = vpack.c.b16 %v5269, %v5262
    %v5886 = vpack.c.b16 %v5270, %v5263
    %v5887 = vpack.c.b16 %v5271, %v5264
    %v5888 = vpack.c.b16 %v5272, %v5265
    %v5889 = vpack.c.b16 %v5273, %v5266
    %v5890 = vpack.c.b16 %v5274, %v5267
    %v5891 = vpack.c.b16 %v5282, %v5275
    %v5892 = vpack.c.b16 %v5283, %v5276
    %v5893 = vpack.c.b16 %v5284, %v5277
    %v5894 = vpack.c.b16 %v5285, %v5278
    %v5895 = vpack.c.b16 %v5286, %v5279
    %v5896 = vpack.c.b16 %v5287, %v5280
    %v5897 = vpack.c.b16 %v5288, %v5281
    %v5898 = vpack.c.b16 %v5296, %v5289
    %v5899 = vpack.c.b16 %v5297, %v5290
    %v5900 = vpack.c.b16 %v5298, %v5291
    %v5901 = vpack.c.b16 %v5299, %v5292
    %v5902 = vpack.c.b16 %v5300, %v5293
    %v5903 = vpack.c.b16 %v5301, %v5294
    %v5904 = vpack.c.b16 %v5302, %v5295
    %v5905 = vpack.c.b16 %v5310, %v5303
    %v5906 = vpack.c.b16 %v5311, %v5304
    %v5907 = vpack.c.b16 %v5312, %v5305
    %v5908 = vpack.c.b16 %v5313, %v5306
    %v5909 = vpack.c.b16 %v5314, %v5307
    %v5910 = vpack.c.b16 %v5315, %v5308
    %v5911 = vpack.c.b16 %v5316, %v5309
    %v5912 = vpack.c.b16 %v5324, %v5317
    %v5913 = vpack.c.b16 %v5325, %v5318
    %v5914 = vpack.c.b16 %v5326, %v5319
    %v5915 = vpack.c.b16 %v5327, %v5320
    %v5916 = vpack.c.b16 %v5328, %v5321
    %v5917 = vpack.c.b16 %v5329, %v5322
    %v5918 = vpack.c.b16 %v5330, %v5323
    %v5919 = vpack.c.b16 %v5338, %v5331
    %v5920 = vpack.c.b16 %v5339, %v5332
    %v5921 = vpack.c.b16 %v5340, %v5333
    %v5922 = vpack.c.b16 %v5341, %v5334
    %v5923 = vpack.c.b16 %v5342, %v5335
    %v5924 = vpack.c.b16 %v5343, %v5336
    %v5925 = vpack.c.b16 %v5344, %v5337
    %v5926 = vpack.c.b16 %v5352, %v5345
    %v5927 = vpack.c.b16 %v5353, %v5346
    %v5928 = vpack.c.b16 %v5354, %v5347
    %v5929 = vpack.c.b16 %v5355, %v5348
    %v5930 = vpack.c.b16 %v5356, %v5349
    %v5931 = vpack.c.b16 %v5357, %v5350
    %v5932 = vpack.c.b16 %v5358, %v5351
    %v5933 = vpack.c.b16 %v5366, %v5359
    %v5934 = vpack.c.b16 %v5367, %v5360
    %v5935 = vpack.c.b16 %v5368, %v5361
    %v5936 = vpack.c.b16 %v5369, %v5362
    %v5937 = vpack.c.b16 %v5370, %v5363
    %v5938 = vpack.c.b16 %v5371, %v5364
    %v5939 = vpack.c.b16 %v5372, %v5365
    %v5940 = vpack.c.b16 %v5380, %v5373
    %v5941 = vpack.c.b16 %v5381, %v5374
    %v5942 = vpack.c.b16 %v5382, %v5375
    %v5943 = vpack.c.b16 %v5383, %v5376
    %v5944 = vpack.c.b16 %v5384, %v5377
    %v5945 = vpack.c.b16 %v5385, %v5378
    %v5946 = vpack.c.b16 %v5386, %v5379
    %v5947 = vpack.c.b16 %v5394, %v5387
    %v5948 = vpack.c.b16 %v5395, %v5388
    %v5949 = vpack.c.b16 %v5396, %v5389
    %v5950 = vpack.c.b16 %v5397, %v5390
    %v5951 = vpack.c.b16 %v5398, %v5391
    %v5952 = vpack.c.b16 %v5399, %v5392
    %v5953 = vpack.c.b16 %v5400, %v5393
    %v5954 = vpack.c.b16 %v5408, %v5401
    %v5955 = vpack.c.b16 %v5409, %v5402
    %v5956 = vpack.c.b16 %v5410, %v5403
    %v5957 = vpack.c.b16 %v5411, %v5404
    %v5958 = vpack.c.b16 %v5412, %v5405
    %v5959 = vpack.c.b16 %v5413, %v5406
    %v5960 = vpack.c.b16 %v5414, %v5407
    %v5961 = vpack.c.b16 %v5422, %v5415
    %v5962 = vpack.c.b16 %v5423, %v5416
    %v5963 = vpack.c.b16 %v5424, %v5417
    %v5964 = vpack.c.b16 %v5425, %v5418
    %v5965 = vpack.c.b16 %v5426, %v5419
    %v5966 = vpack.c.b16 %v5427, %v5420
    %v5967 = vpack.c.b16 %v5428, %v5421
    %v5968 = vpack.c.b16 %v5436, %v5429
    %v5969 = vpack.c.b16 %v5437, %v5430
    %v5970 = vpack.c.b16 %v5438, %v5431
    %v5971 = vpack.c.b16 %v5439, %v5432
    %v5972 = vpack.c.b16 %v5440, %v5433
    %v5973 = vpack.c.b16 %v5441, %v5434
    %v5974 = vpack.c.b16 %v5442, %v5435
    %v5975 = vpack.c.b16 %v5450, %v5443
    %v5976 = vpack.c.b16 %v5451, %v5444
    %v5977 = vpack.c.b16 %v5452, %v5445
    %v5978 = vpack.c.b16 %v5453, %v5446
    %v5979 = vpack.c.b16 %v5454, %v5447
    %v5980 = vpack.c.b16 %v5455, %v5448
    %v5981 = vpack.c.b16 %v5456, %v5449
    %v5982 = vpack.c.b16 %v5464, %v5457
    %v5983 = vpack.c.b16 %v5465, %v5458
    %v5984 = vpack.c.b16 %v5466, %v5459
    %v5985 = vpack.c.b16 %v5467, %v5460
    %v5986 = vpack.c.b16 %v5468, %v5461
    %v5987 = vpack.c.b16 %v5469, %v5462
    %v5988 = vpack.c.b16 %v5470, %v5463
    %v5989 = vpack.c.b16 %v5478, %v5471
    %v5990 = vpack.c.b16 %v5479, %v5472
    %v5991 = vpack.c.b16 %v5480, %v5473
    %v5992 = vpack.c.b16 %v5481, %v5474
    %v5993 = vpack.c.b16 %v5482, %v5475
    %v5994 = vpack.c.b16 %v5483, %v5476
    %v5995 = vpack.c.b16 %v5484, %v5477
    %v5996 = vpack.c.b16 %v5492, %v5485
    %v5997 = vpack.c.b16 %v5493, %v5486
    %v5998 = vpack.c.b16 %v5494, %v5487
    %v5999 = vpack.c.b16 %v5495, %v5488
    %v6000 = vpack.c.b16 %v5496, %v5489
    %v6001 = vpack.c.b16 %v5497, %v5490
    %v6002 = vpack.c.b16 %v5498, %v5491
    %v6003 = vpack.c.b16 %v5506, %v5499
    %v6004 = vpack.c.b16 %v5507, %v5500
    %v6005 = vpack.c.b16 %v5508, %v5501
    %v6006 = vpack.c.b16 %v5509, %v5502
    %v6007 = vpack.c.b16 %v5510, %v5503
    %v6008 = vpack.c.b16 %v5511, %v5504
    %v6009 = vpack.c.b16 %v5512, %v5505
    %v6010 = vpack.c.b16 %v5520, %v5513
    %v6011 = vpack.c.b16 %v5521, %v5514
    %v6012 = vpack.c.b16 %v5522, %v5515
    %v6013 = vpack.c.b16 %v5523, %v5516
    %v6014 = vpack.c.b16 %v5524, %v5517
    %v6015 = vpack.c.b16 %v5525, %v5518
    %v6016 = vpack.c.b16 %v5526, %v5519
    %v6017 = vpack.c.b16 %v5534, %v5527
    %v6018 = vpack.c.b16 %v5535, %v5528
    %v6019 = vpack.c.b16 %v5536, %v5529
    %v6020 = vpack.c.b16 %v5537, %v5530
    %v6021 = vpack.c.b16 %v5538, %v5531
    %v6022 = vpack.c.b16 %v5539, %v5532
    %v6023 = vpack.c.b16 %v5540, %v5533
    %v6024 = vpack.c.b16 %v5548, %v5541
    %v6025 = vpack.c.b16 %v5549, %v5542
    %v6026 = vpack.c.b16 %v5550, %v5543
    %v6027 = vpack.c.b16 %v5551, %v5544
    %v6028 = vpack.c.b16 %v5552, %v5545
    %v6029 = vpack.c.b16 %v5553, %v5546
    %v6030 = vpack.c.b16 %v5554, %v5547
    %v6031 = vpack.c.b16 %v5562, %v5555
    %v6032 = vpack.c.b16 %v5563, %v5556
    %v6033 = vpack.c.b16 %v5564, %v5557
    %v6034 = vpack.c.b16 %v5565, %v5558
    %v6035 = vpack.c.b16 %v5566, %v5559
    %v6036 = vpack.c.b16 %v5567, %v5560
    %v6037 = vpack.c.b16 %v5568, %v5561
    %v6038 = vpack.c.b16 %v5576, %v5569
    %v6039 = vpack.c.b16 %v5577, %v5570
    %v6040 = vpack.c.b16 %v5578, %v5571
    %v6041 = vpack.c.b16 %v5579, %v5572
    %v6042 = vpack.c.b16 %v5580, %v5573
    %v6043 = vpack.c.b16 %v5581, %v5574
    %v6044 = vpack.c.b16 %v5582, %v5575
    %v6045 = vpack.c.b16 %v5590, %v5583
    %v6046 = vpack.c.b16 %v5591, %v5584
    %v6047 = vpack.c.b16 %v5592, %v5585
    %v6048 = vpack.c.b16 %v5593, %v5586
    %v6049 = vpack.c.b16 %v5594, %v5587
    %v6050 = vpack.c.b16 %v5595, %v5588
    %v6051 = vpack.c.b16 %v5596, %v5589
    %v6052 = vpack.c.b16 %v5604, %v5597
    %v6053 = vpack.c.b16 %v5605, %v5598
    %v6054 = vpack.c.b16 %v5606, %v5599
    %v6055 = vpack.c.b16 %v5607, %v5600
    %v6056 = vpack.c.b16 %v5608, %v5601
    %v6057 = vpack.c.b16 %v5609, %v5602
    %v6058 = vpack.c.b16 %v5610, %v5603
    %6507 = vmatprep.subr.bf16.mxu0 %v5661
    %6508 = vmatpush1.bf16.msra.mxu0 %v5660
    %6509 = vmatprep.subr.bf16.mxu0 %v5654
    %6510 = vmatpush1.bf16.msra.mxu0 %v5653
    %6511 = vmatprep.subr.bf16.mxu0 %v5647
    %6512 = vmatpush1.bf16.msra.mxu0 %v5646
    %6513 = vmatprep.subr.bf16.mxu0 %v5640
    %6514 = vmatpush1.bf16.msra.mxu0 %v5639
    %6515 = vmatprep.subr.bf16.mxu0 %v5633
    %6516 = vmatpush1.bf16.msra.mxu0 %v5632
    %6517 = vmatprep.subr.bf16.mxu0 %v5626
    %6518 = vmatpush1.bf16.msra.mxu0 %v5625
    %6519 = vmatprep.subr.bf16.mxu0 %v5619
    %6520 = vmatpush1.bf16.msra.mxu0 %v5618
    %6521 = vmatprep.subr.bf16.mxu0 %v5612
    %6522 = vmatpush1.bf16.msra.mxu0 %v5611
    %6523 = vmatprep.subr.bf16.mxu0 %v5717
    %6524 = vmatpush2.bf16.msra.mxu0 %v5716
    %6525 = vmatprep.subr.bf16.mxu0 %v5710
    %6526 = vmatpush2.bf16.msra.mxu0 %v5709
    %6527 = vmatprep.subr.bf16.mxu0 %v5703
    %6528 = vmatpush2.bf16.msra.mxu0 %v5702
    %6529 = vmatprep.subr.bf16.mxu0 %v5696
    %6530 = vmatpush2.bf16.msra.mxu0 %v5695
    %6531 = vmatprep.subr.bf16.mxu0 %v5689
    %6532 = vmatpush2.bf16.msra.mxu0 %v5688
    %6533 = vmatprep.subr.bf16.mxu0 %v5682
    %6534 = vmatpush2.bf16.msra.mxu0 %v5681
    %6535 = vmatprep.subr.bf16.mxu0 %v5675
    %6536 = vmatpush2.bf16.msra.mxu0 %v5674
    %6537 = vmatprep.subr.bf16.mxu0 %v5668
    %6538 = vmatpush2.bf16.msra.mxu0 %v5667
    %6539 = vmatprep.mubr.bf16.mxu0 %v4159
    %6540 = vmatmul.mubr.bf16.gmra.mxu0 %v4158
    %v6541 = vpop.f32.mrf.mxu0
    %v6542 = vadd.f32 %v4171, %v6541
    %v6543 = vpop.f32.mrf.mxu0
    %v6544 = vadd.f32 %v4175, %v6543
    %v6545 = vpop.f32.mrf.mxu0
    %v6546 = vpop.f32.mrf.mxu0
    %6547 = vdwg.mxu0
    %6548 = vmatprep.subr.bf16.mxu0 %v5773
    %6549 = vmatpush1.bf16.msra.mxu0 %v5772
    %6550 = vmatprep.subr.bf16.mxu0 %v5766
    %6551 = vmatpush1.bf16.msra.mxu0 %v5765
    %6552 = vmatprep.subr.bf16.mxu0 %v5759
    %6553 = vmatpush1.bf16.msra.mxu0 %v5758
    %6554 = vmatprep.subr.bf16.mxu0 %v5752
    %6555 = vmatpush1.bf16.msra.mxu0 %v5751
    %6556 = vmatprep.subr.bf16.mxu0 %v5745
    %6557 = vmatpush1.bf16.msra.mxu0 %v5744
    %6558 = vmatprep.subr.bf16.mxu0 %v5738
    %6559 = vmatpush1.bf16.msra.mxu0 %v5737
    %6560 = vmatprep.subr.bf16.mxu0 %v5731
    %6561 = vmatpush1.bf16.msra.mxu0 %v5730
    %6562 = vmatprep.subr.bf16.mxu0 %v5724
    %6563 = vmatpush1.bf16.msra.mxu0 %v5723
    %6564 = vmatprep.subr.bf16.mxu0 %v5829
    %6565 = vmatpush2.bf16.msra.mxu0 %v5828
    %6566 = vmatprep.subr.bf16.mxu0 %v5822
    %6567 = vmatpush2.bf16.msra.mxu0 %v5821
    %6568 = vmatprep.subr.bf16.mxu0 %v5815
    %6569 = vmatpush2.bf16.msra.mxu0 %v5814
    %6570 = vmatprep.subr.bf16.mxu0 %v5808
    %6571 = vmatpush2.bf16.msra.mxu0 %v5807
    %6572 = vmatprep.subr.bf16.mxu0 %v5801
    %6573 = vmatpush2.bf16.msra.mxu0 %v5800
    %6574 = vmatprep.subr.bf16.mxu0 %v5794
    %6575 = vmatpush2.bf16.msra.mxu0 %v5793
    %6576 = vmatprep.subr.bf16.mxu0 %v5787
    %6577 = vmatpush2.bf16.msra.mxu0 %v5786
    %6578 = vmatprep.subr.bf16.mxu0 %v5780
    %6579 = vmatpush2.bf16.msra.mxu0 %v5779
    %6580 = vmatprep.mubr.bf16.mxu0 %v4161
    %6581 = vmatmul.mubr.bf16.gmra.mxu0 %v4160
    %v6582 = vpop.f32.mrf.mxu0
    %v6583 = vadd.f32 %v6542, %v6582
    %v6584 = vpop.f32.mrf.mxu0
    %v6585 = vadd.f32 %v6544, %v6584
    %v6586 = vpop.f32.mrf.mxu0
    %v6587 = vpop.f32.mrf.mxu0
    %6588 = vdwg.mxu0
    %6589 = vmatprep.subr.bf16.mxu0 %v5885
    %6590 = vmatpush1.bf16.msra.mxu0 %v5884
    %6591 = vmatprep.subr.bf16.mxu0 %v5878
    %6592 = vmatpush1.bf16.msra.mxu0 %v5877
    %6593 = vmatprep.subr.bf16.mxu0 %v5871
    %6594 = vmatpush1.bf16.msra.mxu0 %v5870
    %6595 = vmatprep.subr.bf16.mxu0 %v5864
    %6596 = vmatpush1.bf16.msra.mxu0 %v5863
    %6597 = vmatprep.subr.bf16.mxu0 %v5857
    %6598 = vmatpush1.bf16.msra.mxu0 %v5856
    %6599 = vmatprep.subr.bf16.mxu0 %v5850
    %6600 = vmatpush1.bf16.msra.mxu0 %v5849
    %6601 = vmatprep.subr.bf16.mxu0 %v5843
    %6602 = vmatpush1.bf16.msra.mxu0 %v5842
    %6603 = vmatprep.subr.bf16.mxu0 %v5836
    %6604 = vmatpush1.bf16.msra.mxu0 %v5835
    %6605 = vmatprep.subr.bf16.mxu0 %v5941
    %6606 = vmatpush2.bf16.msra.mxu0 %v5940
    %6607 = vmatprep.subr.bf16.mxu0 %v5934
    %6608 = vmatpush2.bf16.msra.mxu0 %v5933
    %6609 = vmatprep.subr.bf16.mxu0 %v5927
    %6610 = vmatpush2.bf16.msra.mxu0 %v5926
    %6611 = vmatprep.subr.bf16.mxu0 %v5920
    %6612 = vmatpush2.bf16.msra.mxu0 %v5919
    %6613 = vmatprep.subr.bf16.mxu0 %v5913
    %6614 = vmatpush2.bf16.msra.mxu0 %v5912
    %6615 = vmatprep.subr.bf16.mxu0 %v5906
    %6616 = vmatpush2.bf16.msra.mxu0 %v5905
    %6617 = vmatprep.subr.bf16.mxu0 %v5899
    %6618 = vmatpush2.bf16.msra.mxu0 %v5898
    %6619 = vmatprep.subr.bf16.mxu0 %v5892
    %6620 = vmatpush2.bf16.msra.mxu0 %v5891
    %6621 = vmatprep.mubr.bf16.mxu0 %v4163
    %6622 = vmatmul.mubr.bf16.gmra.mxu0 %v4162
    %v6623 = vpop.f32.mrf.mxu0
    %v6624 = vadd.f32 %v6583, %v6623
    %v6625 = vpop.f32.mrf.mxu0
    %v6626 = vadd.f32 %v6585, %v6625
    %v6627 = vpop.f32.mrf.mxu0
    %v6628 = vpop.f32.mrf.mxu0
    %6629 = vdwg.mxu0
    %6630 = vmatprep.subr.bf16.mxu0 %v5997
    %6631 = vmatpush1.bf16.msra.mxu0 %v5996
    %6632 = vmatprep.subr.bf16.mxu0 %v5990
    %6633 = vmatpush1.bf16.msra.mxu0 %v5989
    %6634 = vmatprep.subr.bf16.mxu0 %v5983
    %6635 = vmatpush1.bf16.msra.mxu0 %v5982
    %6636 = vmatprep.subr.bf16.mxu0 %v5976
    %6637 = vmatpush1.bf16.msra.mxu0 %v5975
    %6638 = vmatprep.subr.bf16.mxu0 %v5969
    %6639 = vmatpush1.bf16.msra.mxu0 %v5968
    %6640 = vmatprep.subr.bf16.mxu0 %v5962
    %6641 = vmatpush1.bf16.msra.mxu0 %v5961
    %6642 = vmatprep.subr.bf16.mxu0 %v5955
    %6643 = vmatpush1.bf16.msra.mxu0 %v5954
    %6644 = vmatprep.subr.bf16.mxu0 %v5948
    %6645 = vmatpush1.bf16.msra.mxu0 %v5947
    %6646 = vmatprep.subr.bf16.mxu0 %v6053
    %6647 = vmatpush2.bf16.msra.mxu0 %v6052
    %6648 = vmatprep.subr.bf16.mxu0 %v6046
    %6649 = vmatpush2.bf16.msra.mxu0 %v6045
    %6650 = vmatprep.subr.bf16.mxu0 %v6039
    %6651 = vmatpush2.bf16.msra.mxu0 %v6038
    %6652 = vmatprep.subr.bf16.mxu0 %v6032
    %6653 = vmatpush2.bf16.msra.mxu0 %v6031
    %6654 = vmatprep.subr.bf16.mxu0 %v6025
    %6655 = vmatpush2.bf16.msra.mxu0 %v6024
    %6656 = vmatprep.subr.bf16.mxu0 %v6018
    %6657 = vmatpush2.bf16.msra.mxu0 %v6017
    %6658 = vmatprep.subr.bf16.mxu0 %v6011
    %6659 = vmatpush2.bf16.msra.mxu0 %v6010
    %6660 = vmatprep.subr.bf16.mxu0 %v6004
    %6661 = vmatpush2.bf16.msra.mxu0 %v6003
    %6662 = vmatprep.mubr.bf16.mxu0 %v4165
    %6663 = vmatmul.mubr.bf16.gmra.mxu0 %v4164
    %v6664 = vpop.f32.mrf.mxu0
    %v6665 = vadd.f32 %v6624, %v6664
    %v6666 = vpop.f32.mrf.mxu0
    %v6667 = vadd.f32 %v6626, %v6666
    %v6668 = vpop.f32.mrf.mxu0
    %v6669 = vpop.f32.mrf.mxu0
    %6670 = vdwg.mxu0
    %6671 = vmatprep.subr.bf16.mxu0 %v5663
    %6672 = vmatpush1.bf16.msra.mxu0 %v5662
    %6673 = vmatprep.subr.bf16.mxu0 %v5656
    %6674 = vmatpush1.bf16.msra.mxu0 %v5655
    %6675 = vmatprep.subr.bf16.mxu0 %v5649
    %6676 = vmatpush1.bf16.msra.mxu0 %v5648
    %6677 = vmatprep.subr.bf16.mxu0 %v5642
    %6678 = vmatpush1.bf16.msra.mxu0 %v5641
    %6679 = vmatprep.subr.bf16.mxu0 %v5635
    %6680 = vmatpush1.bf16.msra.mxu0 %v5634
    %6681 = vmatprep.subr.bf16.mxu0 %v5628
    %6682 = vmatpush1.bf16.msra.mxu0 %v5627
    %6683 = vmatprep.subr.bf16.mxu0 %v5621
    %6684 = vmatpush1.bf16.msra.mxu0 %v5620
    %6685 = vmatprep.subr.bf16.mxu0 %v5614
    %6686 = vmatpush1.bf16.msra.mxu0 %v5613
    %6687 = vmatprep.subr.bf16.mxu0 %v5719
    %6688 = vmatpush2.bf16.msra.mxu0 %v5718
    %6689 = vmatprep.subr.bf16.mxu0 %v5712
    %6690 = vmatpush2.bf16.msra.mxu0 %v5711
    %6691 = vmatprep.subr.bf16.mxu0 %v5705
    %6692 = vmatpush2.bf16.msra.mxu0 %v5704
    %6693 = vmatprep.subr.bf16.mxu0 %v5698
    %6694 = vmatpush2.bf16.msra.mxu0 %v5697
    %6695 = vmatprep.subr.bf16.mxu0 %v5691
    %6696 = vmatpush2.bf16.msra.mxu0 %v5690
    %6697 = vmatprep.subr.bf16.mxu0 %v5684
    %6698 = vmatpush2.bf16.msra.mxu0 %v5683
    %6699 = vmatprep.subr.bf16.mxu0 %v5677
    %6700 = vmatpush2.bf16.msra.mxu0 %v5676
    %6701 = vmatprep.subr.bf16.mxu0 %v5670
    %6702 = vmatpush2.bf16.msra.mxu0 %v5669
    %6703 = vmatprep.mubr.bf16.mxu0 %v4159
    %6704 = vmatmul.mubr.bf16.gmra.mxu0 %v4158
    %v6705 = vpop.f32.mrf.mxu0
    %v6706 = vadd.f32 %v4179, %v6705
    %v6707 = vpop.f32.mrf.mxu0
    %v6708 = vadd.f32 %v4183, %v6707
    %v6709 = vpop.f32.mrf.mxu0
    %v6710 = vpop.f32.mrf.mxu0
    %6711 = vdwg.mxu0
    %6712 = vmatprep.subr.bf16.mxu0 %v5775
    %6713 = vmatpush1.bf16.msra.mxu0 %v5774
    %6714 = vmatprep.subr.bf16.mxu0 %v5768
    %6715 = vmatpush1.bf16.msra.mxu0 %v5767
    %6716 = vmatprep.subr.bf16.mxu0 %v5761
    %6717 = vmatpush1.bf16.msra.mxu0 %v5760
    %6718 = vmatprep.subr.bf16.mxu0 %v5754
    %6719 = vmatpush1.bf16.msra.mxu0 %v5753
    %6720 = vmatprep.subr.bf16.mxu0 %v5747
    %6721 = vmatpush1.bf16.msra.mxu0 %v5746
    %6722 = vmatprep.subr.bf16.mxu0 %v5740
    %6723 = vmatpush1.bf16.msra.mxu0 %v5739
    %6724 = vmatprep.subr.bf16.mxu0 %v5733
    %6725 = vmatpush1.bf16.msra.mxu0 %v5732
    %6726 = vmatprep.subr.bf16.mxu0 %v5726
    %6727 = vmatpush1.bf16.msra.mxu0 %v5725
    %6728 = vmatprep.subr.bf16.mxu0 %v5831
    %6729 = vmatpush2.bf16.msra.mxu0 %v5830
    %6730 = vmatprep.subr.bf16.mxu0 %v5824
    %6731 = vmatpush2.bf16.msra.mxu0 %v5823
    %6732 = vmatprep.subr.bf16.mxu0 %v5817
    %6733 = vmatpush2.bf16.msra.mxu0 %v5816
    %6734 = vmatprep.subr.bf16.mxu0 %v5810
    %6735 = vmatpush2.bf16.msra.mxu0 %v5809
    %6736 = vmatprep.subr.bf16.mxu0 %v5803
    %6737 = vmatpush2.bf16.msra.mxu0 %v5802
    %6738 = vmatprep.subr.bf16.mxu0 %v5796
    %6739 = vmatpush2.bf16.msra.mxu0 %v5795
    %6740 = vmatprep.subr.bf16.mxu0 %v5789
    %6741 = vmatpush2.bf16.msra.mxu0 %v5788
    %6742 = vmatprep.subr.bf16.mxu0 %v5782
    %6743 = vmatpush2.bf16.msra.mxu0 %v5781
    %6744 = vmatprep.mubr.bf16.mxu0 %v4161
    %6745 = vmatmul.mubr.bf16.gmra.mxu0 %v4160
    %v6746 = vpop.f32.mrf.mxu0
    %v6747 = vadd.f32 %v6706, %v6746
    %v6748 = vpop.f32.mrf.mxu0
    %v6749 = vadd.f32 %v6708, %v6748
    %v6750 = vpop.f32.mrf.mxu0
    %v6751 = vpop.f32.mrf.mxu0
    %6752 = vdwg.mxu0
    %6753 = vmatprep.subr.bf16.mxu0 %v5887
    %6754 = vmatpush1.bf16.msra.mxu0 %v5886
    %6755 = vmatprep.subr.bf16.mxu0 %v5880
    %6756 = vmatpush1.bf16.msra.mxu0 %v5879
    %6757 = vmatprep.subr.bf16.mxu0 %v5873
    %6758 = vmatpush1.bf16.msra.mxu0 %v5872
    %6759 = vmatprep.subr.bf16.mxu0 %v5866
    %6760 = vmatpush1.bf16.msra.mxu0 %v5865
    %6761 = vmatprep.subr.bf16.mxu0 %v5859
    %6762 = vmatpush1.bf16.msra.mxu0 %v5858
    %6763 = vmatprep.subr.bf16.mxu0 %v5852
    %6764 = vmatpush1.bf16.msra.mxu0 %v5851
    %6765 = vmatprep.subr.bf16.mxu0 %v5845
    %6766 = vmatpush1.bf16.msra.mxu0 %v5844
    %6767 = vmatprep.subr.bf16.mxu0 %v5838
    %6768 = vmatpush1.bf16.msra.mxu0 %v5837
    %6769 = vmatprep.subr.bf16.mxu0 %v5943
    %6770 = vmatpush2.bf16.msra.mxu0 %v5942
    %6771 = vmatprep.subr.bf16.mxu0 %v5936
    %6772 = vmatpush2.bf16.msra.mxu0 %v5935
    %6773 = vmatprep.subr.bf16.mxu0 %v5929
    %6774 = vmatpush2.bf16.msra.mxu0 %v5928
    %6775 = vmatprep.subr.bf16.mxu0 %v5922
    %6776 = vmatpush2.bf16.msra.mxu0 %v5921
    %6777 = vmatprep.subr.bf16.mxu0 %v5915
    %6778 = vmatpush2.bf16.msra.mxu0 %v5914
    %6779 = vmatprep.subr.bf16.mxu0 %v5908
    %6780 = vmatpush2.bf16.msra.mxu0 %v5907
    %6781 = vmatprep.subr.bf16.mxu0 %v5901
    %6782 = vmatpush2.bf16.msra.mxu0 %v5900
    %6783 = vmatprep.subr.bf16.mxu0 %v5894
    %6784 = vmatpush2.bf16.msra.mxu0 %v5893
    %6785 = vmatprep.mubr.bf16.mxu0 %v4163
    %6786 = vmatmul.mubr.bf16.gmra.mxu0 %v4162
    %v6787 = vpop.f32.mrf.mxu0
    %v6788 = vadd.f32 %v6747, %v6787
    %v6789 = vpop.f32.mrf.mxu0
    %v6790 = vadd.f32 %v6749, %v6789
    %v6791 = vpop.f32.mrf.mxu0
    %v6792 = vpop.f32.mrf.mxu0
    %6793 = vdwg.mxu0
    %6794 = vmatprep.subr.bf16.mxu0 %v5999
    %6795 = vmatpush1.bf16.msra.mxu0 %v5998
    %6796 = vmatprep.subr.bf16.mxu0 %v5992
    %6797 = vmatpush1.bf16.msra.mxu0 %v5991
    %6798 = vmatprep.subr.bf16.mxu0 %v5985
    %6799 = vmatpush1.bf16.msra.mxu0 %v5984
    %6800 = vmatprep.subr.bf16.mxu0 %v5978
    %6801 = vmatpush1.bf16.msra.mxu0 %v5977
    %6802 = vmatprep.subr.bf16.mxu0 %v5971
    %6803 = vmatpush1.bf16.msra.mxu0 %v5970
    %6804 = vmatprep.subr.bf16.mxu0 %v5964
    %6805 = vmatpush1.bf16.msra.mxu0 %v5963
    %6806 = vmatprep.subr.bf16.mxu0 %v5957
    %6807 = vmatpush1.bf16.msra.mxu0 %v5956
    %6808 = vmatprep.subr.bf16.mxu0 %v5950
    %6809 = vmatpush1.bf16.msra.mxu0 %v5949
    %6810 = vmatprep.subr.bf16.mxu0 %v6055
    %6811 = vmatpush2.bf16.msra.mxu0 %v6054
    %6812 = vmatprep.subr.bf16.mxu0 %v6048
    %6813 = vmatpush2.bf16.msra.mxu0 %v6047
    %6814 = vmatprep.subr.bf16.mxu0 %v6041
    %6815 = vmatpush2.bf16.msra.mxu0 %v6040
    %6816 = vmatprep.subr.bf16.mxu0 %v6034
    %6817 = vmatpush2.bf16.msra.mxu0 %v6033
    %6818 = vmatprep.subr.bf16.mxu0 %v6027
    %6819 = vmatpush2.bf16.msra.mxu0 %v6026
    %6820 = vmatprep.subr.bf16.mxu0 %v6020
    %6821 = vmatpush2.bf16.msra.mxu0 %v6019
    %6822 = vmatprep.subr.bf16.mxu0 %v6013
    %6823 = vmatpush2.bf16.msra.mxu0 %v6012
    %6824 = vmatprep.subr.bf16.mxu0 %v6006
    %6825 = vmatpush2.bf16.msra.mxu0 %v6005
    %6826 = vmatprep.mubr.bf16.mxu0 %v4165
    %6827 = vmatmul.mubr.bf16.gmra.mxu0 %v4164
    %v6828 = vpop.f32.mrf.mxu0
    %v6829 = vadd.f32 %v6788, %v6828
    %v6830 = vpop.f32.mrf.mxu0
    %v6831 = vadd.f32 %v6790, %v6830
    %v6832 = vpop.f32.mrf.mxu0
    %v6833 = vpop.f32.mrf.mxu0
    %6834 = vdwg.mxu0
    %6835 = vmatprep.subr.bf16.mxu0 %v5665
    %6836 = vmatpush1.bf16.msra.mxu0 %v5664
    %6837 = vmatprep.subr.bf16.mxu0 %v5658
    %6838 = vmatpush1.bf16.msra.mxu0 %v5657
    %6839 = vmatprep.subr.bf16.mxu0 %v5651
    %6840 = vmatpush1.bf16.msra.mxu0 %v5650
    %6841 = vmatprep.subr.bf16.mxu0 %v5644
    %6842 = vmatpush1.bf16.msra.mxu0 %v5643
    %6843 = vmatprep.subr.bf16.mxu0 %v5637
    %6844 = vmatpush1.bf16.msra.mxu0 %v5636
    %6845 = vmatprep.subr.bf16.mxu0 %v5630
    %6846 = vmatpush1.bf16.msra.mxu0 %v5629
    %6847 = vmatprep.subr.bf16.mxu0 %v5623
    %6848 = vmatpush1.bf16.msra.mxu0 %v5622
    %6849 = vmatprep.subr.bf16.mxu0 %v5616
    %6850 = vmatpush1.bf16.msra.mxu0 %v5615
    %6851 = vmatprep.subr.bf16.mxu0 %v5721
    %6852 = vmatpush2.bf16.msra.mxu0 %v5720
    %6853 = vmatprep.subr.bf16.mxu0 %v5714
    %6854 = vmatpush2.bf16.msra.mxu0 %v5713
    %6855 = vmatprep.subr.bf16.mxu0 %v5707
    %6856 = vmatpush2.bf16.msra.mxu0 %v5706
    %6857 = vmatprep.subr.bf16.mxu0 %v5700
    %6858 = vmatpush2.bf16.msra.mxu0 %v5699
    %6859 = vmatprep.subr.bf16.mxu0 %v5693
    %6860 = vmatpush2.bf16.msra.mxu0 %v5692
    %6861 = vmatprep.subr.bf16.mxu0 %v5686
    %6862 = vmatpush2.bf16.msra.mxu0 %v5685
    %6863 = vmatprep.subr.bf16.mxu0 %v5679
    %6864 = vmatpush2.bf16.msra.mxu0 %v5678
    %6865 = vmatprep.subr.bf16.mxu0 %v5672
    %6866 = vmatpush2.bf16.msra.mxu0 %v5671
    %6867 = vmatprep.mubr.bf16.mxu0 %v4159
    %6868 = vmatmul.mubr.bf16.gmra.mxu0 %v4158
    %v6869 = vpop.f32.mrf.mxu0
    %v6870 = vadd.f32 %v4187, %v6869
    %v6871 = vpop.f32.mrf.mxu0
    %v6872 = vadd.f32 %v4191, %v6871
    %v6873 = vpop.f32.mrf.mxu0
    %v6874 = vpop.f32.mrf.mxu0
    %6875 = vdwg.mxu0
    %6876 = vmatprep.subr.bf16.mxu0 %v5777
    %6877 = vmatpush1.bf16.msra.mxu0 %v5776
    %6878 = vmatprep.subr.bf16.mxu0 %v5770
    %6879 = vmatpush1.bf16.msra.mxu0 %v5769
    %6880 = vmatprep.subr.bf16.mxu0 %v5763
    %6881 = vmatpush1.bf16.msra.mxu0 %v5762
    %6882 = vmatprep.subr.bf16.mxu0 %v5756
    %6883 = vmatpush1.bf16.msra.mxu0 %v5755
    %6884 = vmatprep.subr.bf16.mxu0 %v5749
    %6885 = vmatpush1.bf16.msra.mxu0 %v5748
    %6886 = vmatprep.subr.bf16.mxu0 %v5742
    %6887 = vmatpush1.bf16.msra.mxu0 %v5741
    %6888 = vmatprep.subr.bf16.mxu0 %v5735
    %6889 = vmatpush1.bf16.msra.mxu0 %v5734
    %6890 = vmatprep.subr.bf16.mxu0 %v5728
    %6891 = vmatpush1.bf16.msra.mxu0 %v5727
    %6892 = vmatprep.subr.bf16.mxu0 %v5833
    %6893 = vmatpush2.bf16.msra.mxu0 %v5832
    %6894 = vmatprep.subr.bf16.mxu0 %v5826
    %6895 = vmatpush2.bf16.msra.mxu0 %v5825
    %6896 = vmatprep.subr.bf16.mxu0 %v5819
    %6897 = vmatpush2.bf16.msra.mxu0 %v5818
    %6898 = vmatprep.subr.bf16.mxu0 %v5812
    %6899 = vmatpush2.bf16.msra.mxu0 %v5811
    %6900 = vmatprep.subr.bf16.mxu0 %v5805
    %6901 = vmatpush2.bf16.msra.mxu0 %v5804
    %6902 = vmatprep.subr.bf16.mxu0 %v5798
    %6903 = vmatpush2.bf16.msra.mxu0 %v5797
    %6904 = vmatprep.subr.bf16.mxu0 %v5791
    %6905 = vmatpush2.bf16.msra.mxu0 %v5790
    %6906 = vmatprep.subr.bf16.mxu0 %v5784
    %6907 = vmatpush2.bf16.msra.mxu0 %v5783
    %6908 = vmatprep.mubr.bf16.mxu0 %v4161
    %6909 = vmatmul.mubr.bf16.gmra.mxu0 %v4160
    %v6910 = vpop.f32.mrf.mxu0
    %v6911 = vadd.f32 %v6870, %v6910
    %v6912 = vpop.f32.mrf.mxu0
    %v6913 = vadd.f32 %v6872, %v6912
    %v6914 = vpop.f32.mrf.mxu0
    %v6915 = vpop.f32.mrf.mxu0
    %6916 = vdwg.mxu0
    %6917 = vmatprep.subr.bf16.mxu0 %v5889
    %6918 = vmatpush1.bf16.msra.mxu0 %v5888
    %6919 = vmatprep.subr.bf16.mxu0 %v5882
    %6920 = vmatpush1.bf16.msra.mxu0 %v5881
    %6921 = vmatprep.subr.bf16.mxu0 %v5875
    %6922 = vmatpush1.bf16.msra.mxu0 %v5874
    %6923 = vmatprep.subr.bf16.mxu0 %v5868
    %6924 = vmatpush1.bf16.msra.mxu0 %v5867
    %6925 = vmatprep.subr.bf16.mxu0 %v5861
    %6926 = vmatpush1.bf16.msra.mxu0 %v5860
    %6927 = vmatprep.subr.bf16.mxu0 %v5854
    %6928 = vmatpush1.bf16.msra.mxu0 %v5853
    %6929 = vmatprep.subr.bf16.mxu0 %v5847
    %6930 = vmatpush1.bf16.msra.mxu0 %v5846
    %6931 = vmatprep.subr.bf16.mxu0 %v5840
    %6932 = vmatpush1.bf16.msra.mxu0 %v5839
    %6933 = vmatprep.subr.bf16.mxu0 %v5945
    %6934 = vmatpush2.bf16.msra.mxu0 %v5944
    %6935 = vmatprep.subr.bf16.mxu0 %v5938
    %6936 = vmatpush2.bf16.msra.mxu0 %v5937
    %6937 = vmatprep.subr.bf16.mxu0 %v5931
    %6938 = vmatpush2.bf16.msra.mxu0 %v5930
    %6939 = vmatprep.subr.bf16.mxu0 %v5924
    %6940 = vmatpush2.bf16.msra.mxu0 %v5923
    %6941 = vmatprep.subr.bf16.mxu0 %v5917
    %6942 = vmatpush2.bf16.msra.mxu0 %v5916
    %6943 = vmatprep.subr.bf16.mxu0 %v5910
    %6944 = vmatpush2.bf16.msra.mxu0 %v5909
    %6945 = vmatprep.subr.bf16.mxu0 %v5903
    %6946 = vmatpush2.bf16.msra.mxu0 %v5902
    %6947 = vmatprep.subr.bf16.mxu0 %v5896
    %6948 = vmatpush2.bf16.msra.mxu0 %v5895
    %6949 = vmatprep.mubr.bf16.mxu0 %v4163
    %6950 = vmatmul.mubr.bf16.gmra.mxu0 %v4162
    %v6951 = vpop.f32.mrf.mxu0
    %v6952 = vadd.f32 %v6911, %v6951
    %v6953 = vpop.f32.mrf.mxu0
    %v6954 = vadd.f32 %v6913, %v6953
    %v6955 = vpop.f32.mrf.mxu0
    %v6956 = vpop.f32.mrf.mxu0
    %6957 = vdwg.mxu0
    %6958 = vmatprep.subr.bf16.mxu0 %v6001
    %6959 = vmatpush1.bf16.msra.mxu0 %v6000
    %6960 = vmatprep.subr.bf16.mxu0 %v5994
    %6961 = vmatpush1.bf16.msra.mxu0 %v5993
    %6962 = vmatprep.subr.bf16.mxu0 %v5987
    %6963 = vmatpush1.bf16.msra.mxu0 %v5986
    %6964 = vmatprep.subr.bf16.mxu0 %v5980
    %6965 = vmatpush1.bf16.msra.mxu0 %v5979
    %6966 = vmatprep.subr.bf16.mxu0 %v5973
    %6967 = vmatpush1.bf16.msra.mxu0 %v5972
    %6968 = vmatprep.subr.bf16.mxu0 %v5966
    %6969 = vmatpush1.bf16.msra.mxu0 %v5965
    %6970 = vmatprep.subr.bf16.mxu0 %v5959
    %6971 = vmatpush1.bf16.msra.mxu0 %v5958
    %6972 = vmatprep.subr.bf16.mxu0 %v5952
    %6973 = vmatpush1.bf16.msra.mxu0 %v5951
    %6974 = vmatprep.subr.bf16.mxu0 %v6057
    %6975 = vmatpush2.bf16.msra.mxu0 %v6056
    %6976 = vmatprep.subr.bf16.mxu0 %v6050
    %6977 = vmatpush2.bf16.msra.mxu0 %v6049
    %6978 = vmatprep.subr.bf16.mxu0 %v6043
    %6979 = vmatpush2.bf16.msra.mxu0 %v6042
    %6980 = vmatprep.subr.bf16.mxu0 %v6036
    %6981 = vmatpush2.bf16.msra.mxu0 %v6035
    %6982 = vmatprep.subr.bf16.mxu0 %v6029
    %6983 = vmatpush2.bf16.msra.mxu0 %v6028
    %6984 = vmatprep.subr.bf16.mxu0 %v6022
    %6985 = vmatpush2.bf16.msra.mxu0 %v6021
    %6986 = vmatprep.subr.bf16.mxu0 %v6015
    %6987 = vmatpush2.bf16.msra.mxu0 %v6014
    %6988 = vmatprep.subr.bf16.mxu0 %v6008
    %6989 = vmatpush2.bf16.msra.mxu0 %v6007
    %6990 = vmatprep.mubr.bf16.mxu0 %v4165
    %6991 = vmatmul.mubr.bf16.gmra.mxu0 %v4164
    %v6992 = vpop.f32.mrf.mxu0
    %v6993 = vadd.f32 %v6952, %v6992
    %v6994 = vpop.f32.mrf.mxu0
    %v6995 = vadd.f32 %v6954, %v6994
    %v6996 = vpop.f32.mrf.mxu0
    %v6997 = vpop.f32.mrf.mxu0
    %6998 = vdwg.mxu0
    %6999 = vmatprep.subr.bf16.mxu0 0
    %7000 = vmatpush1.bf16.msra.mxu0 %v5666
    %7001 = vmatprep.subr.bf16.mxu0 0
    %7002 = vmatpush1.bf16.msra.mxu0 %v5659
    %7003 = vmatprep.subr.bf16.mxu0 0
    %7004 = vmatpush1.bf16.msra.mxu0 %v5652
    %7005 = vmatprep.subr.bf16.mxu0 0
    %7006 = vmatpush1.bf16.msra.mxu0 %v5645
    %7007 = vmatprep.subr.bf16.mxu0 0
    %7008 = vmatpush1.bf16.msra.mxu0 %v5638
    %7009 = vmatprep.subr.bf16.mxu0 0
    %7010 = vmatpush1.bf16.msra.mxu0 %v5631
    %7011 = vmatprep.subr.bf16.mxu0 0
    %7012 = vmatpush1.bf16.msra.mxu0 %v5624
    %7013 = vmatprep.subr.bf16.mxu0 0
    %7014 = vmatpush1.bf16.msra.mxu0 %v5617
    %7015 = vmatprep.subr.bf16.mxu0 0
    %7016 = vmatpush2.bf16.msra.mxu0 %v5722
    %7017 = vmatprep.subr.bf16.mxu0 0
    %7018 = vmatpush2.bf16.msra.mxu0 %v5715
    %7019 = vmatprep.subr.bf16.mxu0 0
    %7020 = vmatpush2.bf16.msra.mxu0 %v5708
    %7021 = vmatprep.subr.bf16.mxu0 0
    %7022 = vmatpush2.bf16.msra.mxu0 %v5701
    %7023 = vmatprep.subr.bf16.mxu0 0
    %7024 = vmatpush2.bf16.msra.mxu0 %v5694
    %7025 = vmatprep.subr.bf16.mxu0 0
    %7026 = vmatpush2.bf16.msra.mxu0 %v5687
    %7027 = vmatprep.subr.bf16.mxu0 0
    %7028 = vmatpush2.bf16.msra.mxu0 %v5680
    %7029 = vmatprep.subr.bf16.mxu0 0
    %7030 = vmatpush2.bf16.msra.mxu0 %v5673
    %7031 = vmatprep.mubr.bf16.mxu0 %v4159
    %7032 = vmatmul.mubr.bf16.gmra.mxu0 %v4158
    %v7033 = vpop.f32.mrf.mxu0
    %v7034 = vadd.f32 %v4195, %v7033
    %v7035 = vpop.f32.mrf.mxu0
    %v7036 = vpop.f32.mrf.mxu0
    %v7037 = vpop.f32.mrf.mxu0
    %7038 = vdwg.mxu0
    %7039 = vmatprep.subr.bf16.mxu0 0
    %7040 = vmatpush1.bf16.msra.mxu0 %v5778
    %7041 = vmatprep.subr.bf16.mxu0 0
    %7042 = vmatpush1.bf16.msra.mxu0 %v5771
    %7043 = vmatprep.subr.bf16.mxu0 0
    %7044 = vmatpush1.bf16.msra.mxu0 %v5764
    %7045 = vmatprep.subr.bf16.mxu0 0
    %7046 = vmatpush1.bf16.msra.mxu0 %v5757
    %7047 = vmatprep.subr.bf16.mxu0 0
    %7048 = vmatpush1.bf16.msra.mxu0 %v5750
    %7049 = vmatprep.subr.bf16.mxu0 0
    %7050 = vmatpush1.bf16.msra.mxu0 %v5743
    %7051 = vmatprep.subr.bf16.mxu0 0
    %7052 = vmatpush1.bf16.msra.mxu0 %v5736
    %7053 = vmatprep.subr.bf16.mxu0 0
    %7054 = vmatpush1.bf16.msra.mxu0 %v5729
    %7055 = vmatprep.subr.bf16.mxu0 0
    %7056 = vmatpush2.bf16.msra.mxu0 %v5834
    %7057 = vmatprep.subr.bf16.mxu0 0
    %7058 = vmatpush2.bf16.msra.mxu0 %v5827
    %7059 = vmatprep.subr.bf16.mxu0 0
    %7060 = vmatpush2.bf16.msra.mxu0 %v5820
    %7061 = vmatprep.subr.bf16.mxu0 0
    %7062 = vmatpush2.bf16.msra.mxu0 %v5813
    %7063 = vmatprep.subr.bf16.mxu0 0
    %7064 = vmatpush2.bf16.msra.mxu0 %v5806
    %7065 = vmatprep.subr.bf16.mxu0 0
    %7066 = vmatpush2.bf16.msra.mxu0 %v5799
    %7067 = vmatprep.subr.bf16.mxu0 0
    %7068 = vmatpush2.bf16.msra.mxu0 %v5792
    %7069 = vmatprep.subr.bf16.mxu0 0
    %7070 = vmatpush2.bf16.msra.mxu0 %v5785
    %7071 = vmatprep.mubr.bf16.mxu0 %v4161
    %7072 = vmatmul.mubr.bf16.gmra.mxu0 %v4160
    %v7073 = vpop.f32.mrf.mxu0
    %v7074 = vadd.f32 %v7034, %v7073
    %v7075 = vpop.f32.mrf.mxu0
    %v7076 = vpop.f32.mrf.mxu0
    %v7077 = vpop.f32.mrf.mxu0
    %7078 = vdwg.mxu0
    %7079 = vmatprep.subr.bf16.mxu0 0
    %7080 = vmatpush1.bf16.msra.mxu0 %v5890
    %7081 = vmatprep.subr.bf16.mxu0 0
    %7082 = vmatpush1.bf16.msra.mxu0 %v5883
    %7083 = vmatprep.subr.bf16.mxu0 0
    %7084 = vmatpush1.bf16.msra.mxu0 %v5876
    %7085 = vmatprep.subr.bf16.mxu0 0
    %7086 = vmatpush1.bf16.msra.mxu0 %v5869
    %7087 = vmatprep.subr.bf16.mxu0 0
    %7088 = vmatpush1.bf16.msra.mxu0 %v5862
    %7089 = vmatprep.subr.bf16.mxu0 0
    %7090 = vmatpush1.bf16.msra.mxu0 %v5855
    %7091 = vmatprep.subr.bf16.mxu0 0
    %7092 = vmatpush1.bf16.msra.mxu0 %v5848
    %7093 = vmatprep.subr.bf16.mxu0 0
    %7094 = vmatpush1.bf16.msra.mxu0 %v5841
    %7095 = vmatprep.subr.bf16.mxu0 0
    %7096 = vmatpush2.bf16.msra.mxu0 %v5946
    %7097 = vmatprep.subr.bf16.mxu0 0
    %7098 = vmatpush2.bf16.msra.mxu0 %v5939
    %7099 = vmatprep.subr.bf16.mxu0 0
    %7100 = vmatpush2.bf16.msra.mxu0 %v5932
    %7101 = vmatprep.subr.bf16.mxu0 0
    %7102 = vmatpush2.bf16.msra.mxu0 %v5925
    %7103 = vmatprep.subr.bf16.mxu0 0
    %7104 = vmatpush2.bf16.msra.mxu0 %v5918
    %7105 = vmatprep.subr.bf16.mxu0 0
    %7106 = vmatpush2.bf16.msra.mxu0 %v5911
    %7107 = vmatprep.subr.bf16.mxu0 0
    %7108 = vmatpush2.bf16.msra.mxu0 %v5904
    %7109 = vmatprep.subr.bf16.mxu0 0
    %7110 = vmatpush2.bf16.msra.mxu0 %v5897
    %7111 = vmatprep.mubr.bf16.mxu0 %v4163
    %7112 = vmatmul.mubr.bf16.gmra.mxu0 %v4162
    %v7113 = vpop.f32.mrf.mxu0
    %v7114 = vadd.f32 %v7074, %v7113
    %v7115 = vpop.f32.mrf.mxu0
    %v7116 = vpop.f32.mrf.mxu0
    %v7117 = vpop.f32.mrf.mxu0
    %7118 = vdwg.mxu0
    %7119 = vmatprep.subr.bf16.mxu0 0
    %7120 = vmatpush1.bf16.msra.mxu0 %v6002
    %7121 = vmatprep.subr.bf16.mxu0 0
    %7122 = vmatpush1.bf16.msra.mxu0 %v5995
    %7123 = vmatprep.subr.bf16.mxu0 0
    %7124 = vmatpush1.bf16.msra.mxu0 %v5988
    %7125 = vmatprep.subr.bf16.mxu0 0
    %7126 = vmatpush1.bf16.msra.mxu0 %v5981
    %7127 = vmatprep.subr.bf16.mxu0 0
    %7128 = vmatpush1.bf16.msra.mxu0 %v5974
    %7129 = vmatprep.subr.bf16.mxu0 0
    %7130 = vmatpush1.bf16.msra.mxu0 %v5967
    %7131 = vmatprep.subr.bf16.mxu0 0
    %7132 = vmatpush1.bf16.msra.mxu0 %v5960
    %7133 = vmatprep.subr.bf16.mxu0 0
    %7134 = vmatpush1.bf16.msra.mxu0 %v5953
    %7135 = vmatprep.subr.bf16.mxu0 0
    %7136 = vmatpush2.bf16.msra.mxu0 %v6058
    %7137 = vmatprep.subr.bf16.mxu0 0
    %7138 = vmatpush2.bf16.msra.mxu0 %v6051
    %7139 = vmatprep.subr.bf16.mxu0 0
    %7140 = vmatpush2.bf16.msra.mxu0 %v6044
    %7141 = vmatprep.subr.bf16.mxu0 0
    %7142 = vmatpush2.bf16.msra.mxu0 %v6037
    %7143 = vmatprep.subr.bf16.mxu0 0
    %7144 = vmatpush2.bf16.msra.mxu0 %v6030
    %7145 = vmatprep.subr.bf16.mxu0 0
    %7146 = vmatpush2.bf16.msra.mxu0 %v6023
    %7147 = vmatprep.subr.bf16.mxu0 0
    %7148 = vmatpush2.bf16.msra.mxu0 %v6016
    %7149 = vmatprep.subr.bf16.mxu0 0
    %7150 = vmatpush2.bf16.msra.mxu0 %v6009
    %7151 = vmatprep.mubr.bf16.mxu0 %v4165
    %7152 = vmatmul.mubr.bf16.gmra.mxu0 %v4164
    %v7153 = vpop.f32.mrf.mxu0
    %v7154 = vadd.f32 %v7114, %v7153
    %v7155 = vpop.f32.mrf.mxu0
    %v7156 = vpop.f32.mrf.mxu0
    %v7157 = vpop.f32.mrf.mxu0
    %7158 = vdwg.mxu0
    %v7159 = vtanh.pop %v6665
    %v7160 = vtanh.pop %v6667
    %v7161 = vtanh.pop %v6829
    %v7162 = vtanh.pop %v6831
    %v7163 = vtanh.pop %v6993
    %v7164 = vtanh.pop %v6995
    %v7165 = vtanh.pop %v7154
    %7166 = vst [vmem:[%s17] sm:$0xff] %v7159
    %7167 = vst [vmem:[%s17 + $0x8] sm:$0xff] %v7160
    %7168 = vst [vmem:[%s17 + $0x10] sm:$0xff] %v7161
    %7169 = vst [vmem:[%s17 + $0x18] sm:$0xff] %v7162
    %7170 = vst [vmem:[%s17 + $0x20] sm:$0xff] %v7163
    %7171 = vst [vmem:[%s17 + $0x28] sm:$0xff] %v7164
    %7172 = vst [vmem:[%s17 + $0x30] sm:$0xff] %v7165
    // Predicated region
    $region138: #{generator_forward.1} parent=1 // pred_check
      _
    $region139: #{generator_forward.1} parent=1 // pred_check_branch
      %7174 = sbr.rel (0) target = $region141
    $region140: #{generator_forward.1} parent=1 // pred_region
      _
    $region141: #{generator_forward.1} parent=1 // pred_fallthru
      _
    // Predicated region
    $region142: #{generator_forward.1} parent=1 // pred_check
      _
    $region143: #{generator_forward.1} parent=1 // pred_check_branch
      %7176 = sbr.rel (0) target = $region145
    $region144: #{generator_forward.1} parent=1 // pred_region
      _
    $region145: #{generator_forward.1} parent=1 // pred_fallthru
      _
    %7177 = vsyncpa [#allocation6], 1
    %7178 = vsyncpa [#allocation8], 1
    %7179 = vsyncpa [#allocation11], 1
    %7180 = vsyncpa [#allocation14], 1
    %7181 = vsyncpa [#allocation17], 1
    %7182 = vsyncpa [#allocation20], 1
    %7183 = vsyncpa [#allocation23], 1
    %7184 = vsyncpa [#allocation26], 1
  %7185 = vsyncmov [#allocation4]
  %s7186 = vpop.sfrf %7185
  %p7187 = scmp.eq.s32.totalorder %s7186, 0
  %p7188 = pneg %p7187
  %7190 = shalt.err (%p7188)
  %s7191 = scalar_lea.sflag [#allocation4], 1
  %7192 = vsyncmov %s7191
  %s7193 = vpop.sfrf %7192
  %p7194 = scmp.eq.s32.totalorder %s7193, 0
  %p7195 = pneg %p7194
  %7197 = shalt.err (%p7195)

</llo_original>
